<compile_context>
chip_gen: v5e
topology: v5e:2x2
jax: 0.10.0
libtpu: 0.0.40
codegen_flags: <defaults>
</compile_context>

<pallas_src>
import functools

import jax
import jax.numpy as jnp
from jax.experimental import pallas as pl
from jax.experimental.pallas import tpu as pltpu

INPUT_DIM = 32
HIDDEN = 138                # LSTM hidden size from the module
GATE_PAD = 256              # per-gate lane slot (138 padded to a 128-lane multiple)
NGATES = 4
PACKED = NGATES * GATE_PAD  # 1024, gate order i | f | o | g
FC1, FC2, FC3 = 128, 64, 1


def _iras_kernel(
    T, BP,                # static (bound via functools.partial); BP = padded batch
    x_ref,                # [T*BP, D]   time-major, flattened, batch-padded input
    wih_ref,              # [D, PACKED]        packed input->gate weights (i|f|o|g)
    whh_ref,              # [GATE_PAD, PACKED] packed hidden->gate weights (pad rows 0)
    b_ref,                # [1, PACKED]        packed combined bias (pad lanes 0)
    w1_ref, b1_ref,       # [GATE_PAD, 128] (pad rows 0), [1, 128]
    w2_ref, b2_ref,       # [128, 64], [1, 64]
    w3_ref, b3_ref,       # [1, 64],  [1, 1]
    out_ref,              # [BP, 1]
    xp_sc,                # VMEM scratch [T*BP, PACKED] — hoisted input projection
):
    G = GATE_PAD

    # ---- hoisted input projection: one matmul with M = T*BP instead of 4 per step.
    xp_sc[...] = (
        jnp.dot(x_ref[...], wih_ref[...], preferred_element_type=jnp.float32)
        + b_ref[...]
    )

    whh = whh_ref[...]  # load once; reused by every unrolled step

    # ---- recurrence: one packed h @ W_hh per step; gates are 256-lane-aligned static
    #      slices of the [BP, PACKED] pre-activation.  Fully unrolled (T is static),
    #      so all slice starts are compile-time constants (tile-aligned, BP = 8k).
    h = None
    c = None
    for t in range(T):
        pre = xp_sc[pl.ds(t * BP, BP)]
        if t > 0:
            pre = pre + jnp.dot(h, whh, preferred_element_type=jnp.float32)
        ifo = jax.nn.sigmoid(pre[:, : 3 * G])   # i | f | o in one EUP pass
        g = jnp.tanh(pre[:, 3 * G:])
        i = ifo[:, 0 * G:1 * G]
        f = ifo[:, 1 * G:2 * G]
        o = ifo[:, 2 * G:3 * G]
        c = i * g if t == 0 else f * c + i * g   # t=0: c0 = 0 -> skip f*c
        h = o * jnp.tanh(c)

    # ---- MLP head on the last hidden state (pad lanes of h and pad rows of w1 are
    #      zero, so the gate padding contributes nothing).
    z1 = jnp.maximum(
        jnp.dot(h, w1_ref[...], preferred_element_type=jnp.float32) + b1_ref[...],
        0.0,
    )
    z2 = jnp.maximum(
        jnp.dot(z1, w2_ref[...], preferred_element_type=jnp.float32) + b2_ref[...],
        0.0,
    )
    # fc3 has a single output unit: VPU multiply + lane reduce beats an N=1 MXU pass.
    out_ref[...] = jnp.sum(z2 * w3_ref[...], axis=-1, keepdims=True) + b3_ref[...]


def iras_forward(x, packed_params):
    """x: [B, T, D] float32 (batch_first, like the PyTorch module)."""
    B, T, D = x.shape
    BP = max(8, ((B + 7) // 8) * 8)  # pad batch to a sublane multiple

    # Time-major, pad batch with zero rows, flatten so rows for step t are the
    # contiguous, tile-aligned block [t*BP, (t+1)*BP).
    x_tm = jnp.transpose(x, (1, 0, 2))                       # [T, B, D]
    x_tm = jnp.pad(x_tm, ((0, 0), (0, BP - B), (0, 0)))      # [T, BP, D]
    x_flat = x_tm.reshape(T * BP, D)

    inputs = (x_flat,) + tuple(packed_params)
    vmem = pl.BlockSpec(memory_space=pltpu.MemorySpace.VMEM)

    out = pl.pallas_call(
        functools.partial(_iras_kernel, T, BP),
        out_shape=jax.ShapeDtypeStruct((BP, FC3), jnp.float32),
        in_specs=[vmem] * len(inputs),
        out_specs=vmem,
        scratch_shapes=[pltpu.VMEM((T * BP, PACKED), jnp.float32)],
    )(*inputs)
    return out[:B]


def init_params(key, input_dim=INPUT_DIM):
    """PyTorch-style uniform(+-1/sqrt(fan)) init, raw (unpacked) layout."""
    keys = jax.random.split(key, 10)
    k_lstm = 1.0 / jnp.sqrt(HIDDEN)

    def u(k, shape, bound):
        return jax.random.uniform(k, shape, jnp.float32, -bound, bound)

    # PyTorch LSTM layout: weight_ih [4H, D], weight_hh [4H, H], biases [4H]; gates i,f,g,o.
    w_ih = u(keys[0], (4 * HIDDEN, input_dim), k_lstm)
    w_hh = u(keys[1], (4 * HIDDEN, HIDDEN), k_lstm)
    b_ih = u(keys[2], (4 * HIDDEN,), k_lstm)
    b_hh = u(keys[3], (4 * HIDDEN,), k_lstm)

    def split4(w):
        return [w[g * HIDDEN:(g + 1) * HIDDEN] for g in range(4)]  # i, f, g, o

    wih_i, wih_f, wih_g, wih_o = (m.T for m in split4(w_ih))    # [D, H]
    whh_i, whh_f, whh_g, whh_o = (m.T for m in split4(w_hh))    # [H, H]
    b_i, b_f, b_g, b_o = (b.reshape(1, HIDDEN) for b in split4(b_ih + b_hh))

    k1 = 1.0 / jnp.sqrt(HIDDEN)
    k2 = 1.0 / jnp.sqrt(FC1)
    k3 = 1.0 / jnp.sqrt(FC2)
    fc1_w = u(keys[4], (FC1, HIDDEN), k1).T   # [H, 128]
    fc1_b = u(keys[5], (FC1,), k1).reshape(1, FC1)
    fc2_w = u(keys[6], (FC2, FC1), k2).T      # [128, 64]
    fc2_b = u(keys[7], (FC2,), k2).reshape(1, FC2)
    fc3_w = u(keys[8], (FC3, FC2), k3).T      # [64, 1]
    fc3_b = u(keys[9], (FC3,), k3).reshape(1, FC3)

    return (wih_i, wih_f, wih_g, wih_o,
            whh_i, whh_f, whh_g, whh_o,
            b_i, b_f, b_g, b_o,
            fc1_w, fc1_b, fc2_w, fc2_b, fc3_w, fc3_b)


def pack_params(raw):
    """Pack gate weights/biases along the lane axis at 256-lane slots, order i|f|o|g."""
    (wih_i, wih_f, wih_g, wih_o,
     whh_i, whh_f, whh_g, whh_o,
     b_i, b_f, b_g, b_o,
     fc1_w, fc1_b, fc2_w, fc2_b, fc3_w, fc3_b) = raw
    D = wih_i.shape[0]
    H, G = HIDDEN, GATE_PAD

    def pack_lane(mats, rows):
        out = jnp.zeros((rows, PACKED), jnp.float32)
        for gi, m in enumerate(mats):
            out = out.at[: m.shape[0], gi * G: gi * G + H].set(m)
        return out

    # slot order i | f | o | g -> one sigmoid covers the first three slots in-kernel
    wih_p = pack_lane([wih_i, wih_f, wih_o, wih_g], D)   # [D, 1024]
    whh_p = pack_lane([whh_i, whh_f, whh_o, whh_g], G)   # [256, 1024], pad rows zero
    b_p = pack_lane([b_i, b_f, b_o, b_g], 1)             # [1, 1024], pad lanes zero
    w1_p = jnp.zeros((G, FC1), jnp.float32).at[:H].set(fc1_w)  # pad rows zero
    w3_row = fc3_w.reshape(1, FC2)                       # [1, 64] for the lane reduce
    b3 = fc3_b.reshape(1, 1)
    return (wih_p, whh_p, b_p, w1_p, fc1_b, fc2_w, fc2_b, w3_row, b3)


def iras_reference(x, raw):
    """Pure-JAX reference of the same forward pass, for correctness check."""
    (wii, wif, wig, wio, whi, whf, whg, who,
     bi, bf, bg, bo, w1, b1, w2, b2, w3, b3) = raw
    B, T, D = x.shape
    h = jnp.zeros((B, HIDDEN), jnp.float32)
    c = jnp.zeros((B, HIDDEN), jnp.float32)
    for t in range(T):
        x_t = x[:, t, :]
        i = jax.nn.sigmoid(x_t @ wii + h @ whi + bi)
        f = jax.nn.sigmoid(x_t @ wif + h @ whf + bf)
        g = jnp.tanh(x_t @ wig + h @ whg + bg)
        o = jax.nn.sigmoid(x_t @ wio + h @ who + bo)
        c = f * c + i * g
        h = o * jnp.tanh(c)
    z1 = jnp.maximum(h @ w1 + b1, 0.0)
    z2 = jnp.maximum(z1 @ w2 + b2, 0.0)
    return z2 @ w3 + b3


if __name__ == "__main__":
    key = jax.random.PRNGKey(0)
    k_x, k_p = jax.random.split(key)

    B, T, D = 2, 8, INPUT_DIM
    x = jax.random.normal(k_x, (B, T, D), jnp.float32)
    raw = init_params(k_p, D)
    packed = pack_params(raw)

    out = jax.block_until_ready(iras_forward(x, packed))
    ref = jax.block_until_ready(iras_reference(x, raw))

    assert out.shape == (B, FC3), out.shape
    assert jnp.allclose(out, ref, atol=1e-4, rtol=1e-4), (out, ref)
    print("KERNEL_OK")
</pallas_src>

<mosaic_0001>
module attributes {stable_mosaic.version = 11 : i64} {
  func.func @_iras_kernel(%arg0: memref<64x32xf32, #tpu.memory_space<vmem>>, %arg1: memref<32x1024xf32, #tpu.memory_space<vmem>>, %arg2: memref<256x1024xf32, #tpu.memory_space<vmem>>, %arg3: memref<1x1024xf32, #tpu.memory_space<vmem>>, %arg4: memref<256x128xf32, #tpu.memory_space<vmem>>, %arg5: memref<1x128xf32, #tpu.memory_space<vmem>>, %arg6: memref<128x64xf32, #tpu.memory_space<vmem>>, %arg7: memref<1x64xf32, #tpu.memory_space<vmem>>, %arg8: memref<1x64xf32, #tpu.memory_space<vmem>>, %arg9: memref<1x1xf32, #tpu.memory_space<vmem>>, %arg10: memref<8x1xf32, #tpu.memory_space<vmem>>, %arg11: memref<64x1024xf32, #tpu.memory_space<vmem>>) attributes {dimension_semantics = [], scalar_prefetch = 0 : i64, scratch_operands = 1 : i64, tpu.core_type = #tpu.core_type<tc>} {
    %c0 = arith.constant 0 : index
    %c0_0 = arith.constant 0 : index
    %0 = vector.load %arg0[%c0, %c0_0] : memref<64x32xf32, #tpu.memory_space<vmem>>, vector<64x32xf32>
    %c0_1 = arith.constant 0 : index
    %c0_2 = arith.constant 0 : index
    %1 = vector.load %arg1[%c0_1, %c0_2] : memref<32x1024xf32, #tpu.memory_space<vmem>>, vector<32x1024xf32>
    %cst = arith.constant dense<0.000000e+00> : vector<64x1024xf32>
    %2 = tpu.matmul %0, %1, %cst {dimension_numbers = #tpu.dot_dimension_numbers<[1], [0], [0], [1], [0, 0, 1, 1], [], []>} : vector<64x32xf32>, vector<32x1024xf32>, vector<64x1024xf32> -> vector<64x1024xf32>
    %c0_3 = arith.constant 0 : index
    %c0_4 = arith.constant 0 : index
    %3 = vector.load %arg3[%c0_3, %c0_4] : memref<1x1024xf32, #tpu.memory_space<vmem>>, vector<1x1024xf32>
    %4 = vector.broadcast %3 : vector<1x1024xf32> to vector<64x1024xf32>
    %5 = arith.addf %2, %4 : vector<64x1024xf32>
    %c0_5 = arith.constant 0 : index
    %c0_6 = arith.constant 0 : index
    %6 = vector.load %arg11[%c0_5, %c0_6] : memref<64x1024xf32, #tpu.memory_space<vmem>>, vector<64x1024xf32>
    tpu.vector_store %arg11[%c0_5, %c0_6], %5 {strides = array<i32>} : memref<64x1024xf32, #tpu.memory_space<vmem>>, vector<64x1024xf32>,
    %c0_7 = arith.constant 0 : index
    %c0_8 = arith.constant 0 : index
    %7 = vector.load %arg2[%c0_7, %c0_8] : memref<256x1024xf32, #tpu.memory_space<vmem>>, vector<256x1024xf32>
    %c0_9 = arith.constant 0 : index
    %c0_10 = arith.constant 0 : index
    %8 = vector.load %arg11[%c0_9, %c0_10] : memref<64x1024xf32, #tpu.memory_space<vmem>>, vector<8x1024xf32>
    %9 = vector.extract_strided_slice %8 {offsets = [0, 0], sizes = [8, 768], strides = [1, 1]} : vector<8x1024xf32> to vector<8x768xf32>
    %10 = arith.negf %9 : vector<8x768xf32>
    %11 = math.exp %10 : vector<8x768xf32>
    %cst_11 = arith.constant 1.000000e+00 : f32
    %12 = vector.broadcast %cst_11 : f32 to vector<8x768xf32>
    %13 = arith.addf %12, %11 : vector<8x768xf32>
    %14 = arith.divf %12, %13 : vector<8x768xf32>
    %15 = vector.extract_strided_slice %8 {offsets = [0, 768], sizes = [8, 256], strides = [1, 1]} : vector<8x1024xf32> to vector<8x256xf32>
    %16 = math.tanh %15 : vector<8x256xf32>
    %17 = vector.extract_strided_slice %14 {offsets = [0, 0], sizes = [8, 256], strides = [1, 1]} : vector<8x768xf32> to vector<8x256xf32>
    %18 = vector.extract_strided_slice %14 {offsets = [0, 512], sizes = [8, 256], strides = [1, 1]} : vector<8x768xf32> to vector<8x256xf32>
    %19 = arith.mulf %17, %16 : vector<8x256xf32>
    %20 = math.tanh %19 : vector<8x256xf32>
    %21 = arith.mulf %18, %20 : vector<8x256xf32>
    %c8 = arith.constant 8 : index
    %c0_12 = arith.constant 0 : index
    %22 = vector.load %arg11[%c8, %c0_12] : memref<64x1024xf32, #tpu.memory_space<vmem>>, vector<8x1024xf32>
    %cst_13 = arith.constant dense<0.000000e+00> : vector<8x1024xf32>
    %23 = tpu.matmul %21, %7, %cst_13 {dimension_numbers = #tpu.dot_dimension_numbers<[1], [0], [0], [1], [0, 0, 1, 1], [], []>} : vector<8x256xf32>, vector<256x1024xf32>, vector<8x1024xf32> -> vector<8x1024xf32>
    %24 = arith.addf %22, %23 : vector<8x1024xf32>
    %25 = vector.extract_strided_slice %24 {offsets = [0, 0], sizes = [8, 768], strides = [1, 1]} : vector<8x1024xf32> to vector<8x768xf32>
    %26 = arith.negf %25 : vector<8x768xf32>
    %27 = math.exp %26 : vector<8x768xf32>
    %cst_14 = arith.constant 1.000000e+00 : f32
    %28 = vector.broadcast %cst_14 : f32 to vector<8x768xf32>
    %29 = arith.addf %28, %27 : vector<8x768xf32>
    %30 = arith.divf %28, %29 : vector<8x768xf32>
    %31 = vector.extract_strided_slice %24 {offsets = [0, 768], sizes = [8, 256], strides = [1, 1]} : vector<8x1024xf32> to vector<8x256xf32>
    %32 = math.tanh %31 : vector<8x256xf32>
    %33 = vector.extract_strided_slice %30 {offsets = [0, 0], sizes = [8, 256], strides = [1, 1]} : vector<8x768xf32> to vector<8x256xf32>
    %34 = vector.extract_strided_slice %30 {offsets = [0, 256], sizes = [8, 256], strides = [1, 1]} : vector<8x768xf32> to vector<8x256xf32>
    %35 = vector.extract_strided_slice %30 {offsets = [0, 512], sizes = [8, 256], strides = [1, 1]} : vector<8x768xf32> to vector<8x256xf32>
    %36 = arith.mulf %34, %19 : vector<8x256xf32>
    %37 = arith.mulf %33, %32 : vector<8x256xf32>
    %38 = arith.addf %36, %37 : vector<8x256xf32>
    %39 = math.tanh %38 : vector<8x256xf32>
    %40 = arith.mulf %35, %39 : vector<8x256xf32>
    %c16 = arith.constant 16 : index
    %c0_15 = arith.constant 0 : index
    %41 = vector.load %arg11[%c16, %c0_15] : memref<64x1024xf32, #tpu.memory_space<vmem>>, vector<8x1024xf32>
    %cst_16 = arith.constant dense<0.000000e+00> : vector<8x1024xf32>
    %42 = tpu.matmul %40, %7, %cst_16 {dimension_numbers = #tpu.dot_dimension_numbers<[1], [0], [0], [1], [0, 0, 1, 1], [], []>} : vector<8x256xf32>, vector<256x1024xf32>, vector<8x1024xf32> -> vector<8x1024xf32>
    %43 = arith.addf %41, %42 : vector<8x1024xf32>
    %44 = vector.extract_strided_slice %43 {offsets = [0, 0], sizes = [8, 768], strides = [1, 1]} : vector<8x1024xf32> to vector<8x768xf32>
    %45 = arith.negf %44 : vector<8x768xf32>
    %46 = math.exp %45 : vector<8x768xf32>
    %cst_17 = arith.constant 1.000000e+00 : f32
    %47 = vector.broadcast %cst_17 : f32 to vector<8x768xf32>
    %48 = arith.addf %47, %46 : vector<8x768xf32>
    %49 = arith.divf %47, %48 : vector<8x768xf32>
    %50 = vector.extract_strided_slice %43 {offsets = [0, 768], sizes = [8, 256], strides = [1, 1]} : vector<8x1024xf32> to vector<8x256xf32>
    %51 = math.tanh %50 : vector<8x256xf32>
    %52 = vector.extract_strided_slice %49 {offsets = [0, 0], sizes = [8, 256], strides = [1, 1]} : vector<8x768xf32> to vector<8x256xf32>
    %53 = vector.extract_strided_slice %49 {offsets = [0, 256], sizes = [8, 256], strides = [1, 1]} : vector<8x768xf32> to vector<8x256xf32>
    %54 = vector.extract_strided_slice %49 {offsets = [0, 512], sizes = [8, 256], strides = [1, 1]} : vector<8x768xf32> to vector<8x256xf32>
    %55 = arith.mulf %53, %38 : vector<8x256xf32>
    %56 = arith.mulf %52, %51 : vector<8x256xf32>
    %57 = arith.addf %55, %56 : vector<8x256xf32>
    %58 = math.tanh %57 : vector<8x256xf32>
    %59 = arith.mulf %54, %58 : vector<8x256xf32>
    %c24 = arith.constant 24 : index
    %c0_18 = arith.constant 0 : index
    %60 = vector.load %arg11[%c24, %c0_18] : memref<64x1024xf32, #tpu.memory_space<vmem>>, vector<8x1024xf32>
    %cst_19 = arith.constant dense<0.000000e+00> : vector<8x1024xf32>
    %61 = tpu.matmul %59, %7, %cst_19 {dimension_numbers = #tpu.dot_dimension_numbers<[1], [0], [0], [1], [0, 0, 1, 1], [], []>} : vector<8x256xf32>, vector<256x1024xf32>, vector<8x1024xf32> -> vector<8x1024xf32>
    %62 = arith.addf %60, %61 : vector<8x1024xf32>
    %63 = vector.extract_strided_slice %62 {offsets = [0, 0], sizes = [8, 768], strides = [1, 1]} : vector<8x1024xf32> to vector<8x768xf32>
    %64 = arith.negf %63 : vector<8x768xf32>
    %65 = math.exp %64 : vector<8x768xf32>
    %cst_20 = arith.constant 1.000000e+00 : f32
    %66 = vector.broadcast %cst_20 : f32 to vector<8x768xf32>
    %67 = arith.addf %66, %65 : vector<8x768xf32>
    %68 = arith.divf %66, %67 : vector<8x768xf32>
    %69 = vector.extract_strided_slice %62 {offsets = [0, 768], sizes = [8, 256], strides = [1, 1]} : vector<8x1024xf32> to vector<8x256xf32>
    %70 = math.tanh %69 : vector<8x256xf32>
    %71 = vector.extract_strided_slice %68 {offsets = [0, 0], sizes = [8, 256], strides = [1, 1]} : vector<8x768xf32> to vector<8x256xf32>
    %72 = vector.extract_strided_slice %68 {offsets = [0, 256], sizes = [8, 256], strides = [1, 1]} : vector<8x768xf32> to vector<8x256xf32>
    %73 = vector.extract_strided_slice %68 {offsets = [0, 512], sizes = [8, 256], strides = [1, 1]} : vector<8x768xf32> to vector<8x256xf32>
    %74 = arith.mulf %72, %57 : vector<8x256xf32>
    %75 = arith.mulf %71, %70 : vector<8x256xf32>
    %76 = arith.addf %74, %75 : vector<8x256xf32>
    %77 = math.tanh %76 : vector<8x256xf32>
    %78 = arith.mulf %73, %77 : vector<8x256xf32>
    %c32 = arith.constant 32 : index
    %c0_21 = arith.constant 0 : index
    %79 = vector.load %arg11[%c32, %c0_21] : memref<64x1024xf32, #tpu.memory_space<vmem>>, vector<8x1024xf32>
    %cst_22 = arith.constant dense<0.000000e+00> : vector<8x1024xf32>
    %80 = tpu.matmul %78, %7, %cst_22 {dimension_numbers = #tpu.dot_dimension_numbers<[1], [0], [0], [1], [0, 0, 1, 1], [], []>} : vector<8x256xf32>, vector<256x1024xf32>, vector<8x1024xf32> -> vector<8x1024xf32>
    %81 = arith.addf %79, %80 : vector<8x1024xf32>
    %82 = vector.extract_strided_slice %81 {offsets = [0, 0], sizes = [8, 768], strides = [1, 1]} : vector<8x1024xf32> to vector<8x768xf32>
    %83 = arith.negf %82 : vector<8x768xf32>
    %84 = math.exp %83 : vector<8x768xf32>
    %cst_23 = arith.constant 1.000000e+00 : f32
    %85 = vector.broadcast %cst_23 : f32 to vector<8x768xf32>
    %86 = arith.addf %85, %84 : vector<8x768xf32>
    %87 = arith.divf %85, %86 : vector<8x768xf32>
    %88 = vector.extract_strided_slice %81 {offsets = [0, 768], sizes = [8, 256], strides = [1, 1]} : vector<8x1024xf32> to vector<8x256xf32>
    %89 = math.tanh %88 : vector<8x256xf32>
    %90 = vector.extract_strided_slice %87 {offsets = [0, 0], sizes = [8, 256], strides = [1, 1]} : vector<8x768xf32> to vector<8x256xf32>
    %91 = vector.extract_strided_slice %87 {offsets = [0, 256], sizes = [8, 256], strides = [1, 1]} : vector<8x768xf32> to vector<8x256xf32>
    %92 = vector.extract_strided_slice %87 {offsets = [0, 512], sizes = [8, 256], strides = [1, 1]} : vector<8x768xf32> to vector<8x256xf32>
    %93 = arith.mulf %91, %76 : vector<8x256xf32>
    %94 = arith.mulf %90, %89 : vector<8x256xf32>
    %95 = arith.addf %93, %94 : vector<8x256xf32>
    %96 = math.tanh %95 : vector<8x256xf32>
    %97 = arith.mulf %92, %96 : vector<8x256xf32>
    %c40 = arith.constant 40 : index
    %c0_24 = arith.constant 0 : index
    %98 = vector.load %arg11[%c40, %c0_24] : memref<64x1024xf32, #tpu.memory_space<vmem>>, vector<8x1024xf32>
    %cst_25 = arith.constant dense<0.000000e+00> : vector<8x1024xf32>
    %99 = tpu.matmul %97, %7, %cst_25 {dimension_numbers = #tpu.dot_dimension_numbers<[1], [0], [0], [1], [0, 0, 1, 1], [], []>} : vector<8x256xf32>, vector<256x1024xf32>, vector<8x1024xf32> -> vector<8x1024xf32>
    %100 = arith.addf %98, %99 : vector<8x1024xf32>
    %101 = vector.extract_strided_slice %100 {offsets = [0, 0], sizes = [8, 768], strides = [1, 1]} : vector<8x1024xf32> to vector<8x768xf32>
    %102 = arith.negf %101 : vector<8x768xf32>
    %103 = math.exp %102 : vector<8x768xf32>
    %cst_26 = arith.constant 1.000000e+00 : f32
    %104 = vector.broadcast %cst_26 : f32 to vector<8x768xf32>
    %105 = arith.addf %104, %103 : vector<8x768xf32>
    %106 = arith.divf %104, %105 : vector<8x768xf32>
    %107 = vector.extract_strided_slice %100 {offsets = [0, 768], sizes = [8, 256], strides = [1, 1]} : vector<8x1024xf32> to vector<8x256xf32>
    %108 = math.tanh %107 : vector<8x256xf32>
    %109 = vector.extract_strided_slice %106 {offsets = [0, 0], sizes = [8, 256], strides = [1, 1]} : vector<8x768xf32> to vector<8x256xf32>
    %110 = vector.extract_strided_slice %106 {offsets = [0, 256], sizes = [8, 256], strides = [1, 1]} : vector<8x768xf32> to vector<8x256xf32>
    %111 = vector.extract_strided_slice %106 {offsets = [0, 512], sizes = [8, 256], strides = [1, 1]} : vector<8x768xf32> to vector<8x256xf32>
    %112 = arith.mulf %110, %95 : vector<8x256xf32>
    %113 = arith.mulf %109, %108 : vector<8x256xf32>
    %114 = arith.addf %112, %113 : vector<8x256xf32>
    %115 = math.tanh %114 : vector<8x256xf32>
    %116 = arith.mulf %111, %115 : vector<8x256xf32>
    %c48 = arith.constant 48 : index
    %c0_27 = arith.constant 0 : index
    %117 = vector.load %arg11[%c48, %c0_27] : memref<64x1024xf32, #tpu.memory_space<vmem>>, vector<8x1024xf32>
    %cst_28 = arith.constant dense<0.000000e+00> : vector<8x1024xf32>
    %118 = tpu.matmul %116, %7, %cst_28 {dimension_numbers = #tpu.dot_dimension_numbers<[1], [0], [0], [1], [0, 0, 1, 1], [], []>} : vector<8x256xf32>, vector<256x1024xf32>, vector<8x1024xf32> -> vector<8x1024xf32>
    %119 = arith.addf %117, %118 : vector<8x1024xf32>
    %120 = vector.extract_strided_slice %119 {offsets = [0, 0], sizes = [8, 768], strides = [1, 1]} : vector<8x1024xf32> to vector<8x768xf32>
    %121 = arith.negf %120 : vector<8x768xf32>
    %122 = math.exp %121 : vector<8x768xf32>
    %cst_29 = arith.constant 1.000000e+00 : f32
    %123 = vector.broadcast %cst_29 : f32 to vector<8x768xf32>
    %124 = arith.addf %123, %122 : vector<8x768xf32>
    %125 = arith.divf %123, %124 : vector<8x768xf32>
    %126 = vector.extract_strided_slice %119 {offsets = [0, 768], sizes = [8, 256], strides = [1, 1]} : vector<8x1024xf32> to vector<8x256xf32>
    %127 = math.tanh %126 : vector<8x256xf32>
    %128 = vector.extract_strided_slice %125 {offsets = [0, 0], sizes = [8, 256], strides = [1, 1]} : vector<8x768xf32> to vector<8x256xf32>
    %129 = vector.extract_strided_slice %125 {offsets = [0, 256], sizes = [8, 256], strides = [1, 1]} : vector<8x768xf32> to vector<8x256xf32>
    %130 = vector.extract_strided_slice %125 {offsets = [0, 512], sizes = [8, 256], strides = [1, 1]} : vector<8x768xf32> to vector<8x256xf32>
    %131 = arith.mulf %129, %114 : vector<8x256xf32>
    %132 = arith.mulf %128, %127 : vector<8x256xf32>
    %133 = arith.addf %131, %132 : vector<8x256xf32>
    %134 = math.tanh %133 : vector<8x256xf32>
    %135 = arith.mulf %130, %134 : vector<8x256xf32>
    %c56 = arith.constant 56 : index
    %c0_30 = arith.constant 0 : index
    %136 = vector.load %arg11[%c56, %c0_30] : memref<64x1024xf32, #tpu.memory_space<vmem>>, vector<8x1024xf32>
    %cst_31 = arith.constant dense<0.000000e+00> : vector<8x1024xf32>
    %137 = tpu.matmul %135, %7, %cst_31 {dimension_numbers = #tpu.dot_dimension_numbers<[1], [0], [0], [1], [0, 0, 1, 1], [], []>} : vector<8x256xf32>, vector<256x1024xf32>, vector<8x1024xf32> -> vector<8x1024xf32>
    %138 = arith.addf %136, %137 : vector<8x1024xf32>
    %139 = vector.extract_strided_slice %138 {offsets = [0, 0], sizes = [8, 768], strides = [1, 1]} : vector<8x1024xf32> to vector<8x768xf32>
    %140 = arith.negf %139 : vector<8x768xf32>
    %141 = math.exp %140 : vector<8x768xf32>
    %cst_32 = arith.constant 1.000000e+00 : f32
    %142 = vector.broadcast %cst_32 : f32 to vector<8x768xf32>
    %143 = arith.addf %142, %141 : vector<8x768xf32>
    %144 = arith.divf %142, %143 : vector<8x768xf32>
    %145 = vector.extract_strided_slice %138 {offsets = [0, 768], sizes = [8, 256], strides = [1, 1]} : vector<8x1024xf32> to vector<8x256xf32>
    %146 = math.tanh %145 : vector<8x256xf32>
    %147 = vector.extract_strided_slice %144 {offsets = [0, 0], sizes = [8, 256], strides = [1, 1]} : vector<8x768xf32> to vector<8x256xf32>
    %148 = vector.extract_strided_slice %144 {offsets = [0, 256], sizes = [8, 256], strides = [1, 1]} : vector<8x768xf32> to vector<8x256xf32>
    %149 = vector.extract_strided_slice %144 {offsets = [0, 512], sizes = [8, 256], strides = [1, 1]} : vector<8x768xf32> to vector<8x256xf32>
    %150 = arith.mulf %148, %133 : vector<8x256xf32>
    %151 = arith.mulf %147, %146 : vector<8x256xf32>
    %152 = arith.addf %150, %151 : vector<8x256xf32>
    %153 = math.tanh %152 : vector<8x256xf32>
    %154 = arith.mulf %149, %153 : vector<8x256xf32>
    %c0_33 = arith.constant 0 : index
    %c0_34 = arith.constant 0 : index
    %155 = vector.load %arg4[%c0_33, %c0_34] : memref<256x128xf32, #tpu.memory_space<vmem>>, vector<256x128xf32>
    %cst_35 = arith.constant dense<0.000000e+00> : vector<8x128xf32>
    %156 = tpu.matmul %154, %155, %cst_35 {dimension_numbers = #tpu.dot_dimension_numbers<[1], [0], [0], [1], [0, 0, 1, 1], [], []>} : vector<8x256xf32>, vector<256x128xf32>, vector<8x128xf32> -> vector<8x128xf32>
    %c0_36 = arith.constant 0 : index
    %c0_37 = arith.constant 0 : index
    %157 = vector.load %arg5[%c0_36, %c0_37] : memref<1x128xf32, #tpu.memory_space<vmem>>, vector<1x128xf32>
    %158 = vector.broadcast %157 : vector<1x128xf32> to vector<8x128xf32>
    %159 = arith.addf %156, %158 : vector<8x128xf32>
    %cst_38 = arith.constant 0.000000e+00 : f32
    %160 = vector.broadcast %cst_38 : f32 to vector<8x128xf32>
    %161 = arith.maximumf %159, %160 : vector<8x128xf32>
    %c0_39 = arith.constant 0 : index
    %c0_40 = arith.constant 0 : index
    %162 = vector.load %arg6[%c0_39, %c0_40] : memref<128x64xf32, #tpu.memory_space<vmem>>, vector<128x64xf32>
    %cst_41 = arith.constant dense<0.000000e+00> : vector<8x64xf32>
    %163 = tpu.matmul %161, %162, %cst_41 {dimension_numbers = #tpu.dot_dimension_numbers<[1], [0], [0], [1], [0, 0, 1, 1], [], []>} : vector<8x128xf32>, vector<128x64xf32>, vector<8x64xf32> -> vector<8x64xf32>
    %c0_42 = arith.constant 0 : index
    %c0_43 = arith.constant 0 : index
    %164 = vector.load %arg7[%c0_42, %c0_43] : memref<1x64xf32, #tpu.memory_space<vmem>>, vector<1x64xf32>
    %165 = vector.broadcast %164 : vector<1x64xf32> to vector<8x64xf32>
    %166 = arith.addf %163, %165 : vector<8x64xf32>
    %cst_44 = arith.constant 0.000000e+00 : f32
    %167 = vector.broadcast %cst_44 : f32 to vector<8x64xf32>
    %168 = arith.maximumf %166, %167 : vector<8x64xf32>
    %c0_45 = arith.constant 0 : index
    %c0_46 = arith.constant 0 : index
    %169 = vector.load %arg8[%c0_45, %c0_46] : memref<1x64xf32, #tpu.memory_space<vmem>>, vector<1x64xf32>
    %170 = vector.broadcast %169 : vector<1x64xf32> to vector<8x64xf32>
    %171 = arith.mulf %168, %170 : vector<8x64xf32>
    %cst_47 = arith.constant dense<0.000000e+00> : vector<8xf32>
    %172 = vector.multi_reduction <add>, %171, %cst_47 [1] : vector<8x64xf32> to vector<8xf32>
    %173 = vector.shape_cast %172 : vector<8xf32> to vector<8x1xf32>
    %c0_48 = arith.constant 0 : index
    %c0_49 = arith.constant 0 : index
    %174 = vector.load %arg9[%c0_48, %c0_49] : memref<1x1xf32, #tpu.memory_space<vmem>>, vector<1x1xf32>
    %175 = vector.broadcast %174 : vector<1x1xf32> to vector<8x1xf32>
    %176 = arith.addf %173, %175 : vector<8x1xf32>
    %c0_50 = arith.constant 0 : index
    %c0_51 = arith.constant 0 : index
    %177 = vector.load %arg10[%c0_50, %c0_51] : memref<8x1xf32, #tpu.memory_space<vmem>>, vector<8x1xf32>
    tpu.vector_store %arg10[%c0_50, %c0_51], %176 {strides = array<i32>} : memref<8x1xf32, #tpu.memory_space<vmem>>, vector<8x1xf32>,
    return
  }
}

</mosaic_0001>

<llo_original>
// kernel: tpu_custom_call.1
$region0: #{tpu_custom_call.1}
  #allocation0 [shape = 'u32[]', space=smem, size = 0x4, offset = 0x4, fixed_abs, tag = 'smem constant byte address 0x4 - core index']
  #allocation1 [shape = 'u32[72,128]{1,0:T(1,128)}', space=vmem, size = 0x9000, scoped, tag = 'internal scratch']
  #allocation2 [shape = 'f32[64,1024]{1,0:T(8,128)}', space=vmem, size = 0x40000, scoped, tag = 'scratch operand']
  #allocation3 [shape = 'f32[1,1]{1,0:T(1,128)S(1)}', space=vmem, size = 0x200, scoped, tag = 'scoped memory for tpu_custom_call.1']
  %s0 = inlined_call_operand.vmem [shape: f32[64,32], index: 0, kind: input, shape index: {}]
  %s1 = inlined_call_operand.hbm [shape: f32[32,1024], index: 1, kind: input, shape index: {}]
  %s2 = inlined_call_operand.hbm [shape: f32[256,1024], index: 2, kind: input, shape index: {}]
  %s3 = inlined_call_operand.vmem [shape: f32[1,1024], index: 3, kind: input, shape index: {}]
  %s4 = inlined_call_operand.hbm [shape: f32[256,128], index: 4, kind: input, shape index: {}]
  %s5 = inlined_call_operand.vmem [shape: f32[1,128], index: 5, kind: input, shape index: {}]
  %s6 = inlined_call_operand.vmem [shape: f32[128,64], index: 6, kind: input, shape index: {}]
  %s7 = inlined_call_operand.vmem [shape: f32[1,64], index: 7, kind: input, shape index: {}]
  %s8 = inlined_call_operand.vmem [shape: f32[1,64], index: 8, kind: input, shape index: {}]
  %s9 = inlined_call_operand.<no memory space> [shape: f32[1,1], index: 9, kind: input, shape index: {}]
  %s10 = inlined_call_operand.vmem [shape: f32[8,1], index: 10, kind: output, shape index: {}]
  %s11 = sld [smem:[#allocation0]]
  $region62: #{tpu_custom_call.1} parent=0
    _
  %s13 = ssub.s32 1, %s11
  %s14 = scalar_select 0, %s13, %s11
  %v15 = vstv %s9
  %16 = vst [vmem:[#allocation3] sm:$0x1] %v15
  $region1: #{tpu_custom_call.1} parent=0
    #allocation4 [shape = 'u8[131072]{0}', space=vmem, size = 0x20000, scoped, tag = 'input window, operand 1, single buffered']
    #allocation5 [shape = 's32[1]{0}', space=sflag, size = 0x4, scoped, tag = 'scoped memory for tpu_custom_call.1']
    #allocation6 [shape = 'u8[1048576]{0}', space=vmem, size = 0x100000, scoped, tag = 'input window, operand 2, single buffered']
    #allocation7 [shape = 's32[1]{0}', space=sflag, size = 0x4, scoped, tag = 'scoped memory for tpu_custom_call.1']
    #allocation8 [shape = 'u8[131072]{0}', space=vmem, size = 0x20000, scoped, tag = 'input window, operand 4, single buffered']
    %17 = vsyncpa [#allocation5], 0
    %18 = vsyncpa [#allocation7], 0
    // Predicated region
    $region2: #{tpu_custom_call.1} parent=1 // pred_check
      _
    $region3: #{tpu_custom_call.1} parent=1 // pred_check_branch
      %20 = sbr.rel (0) target = $region5
    $region4: #{tpu_custom_call.1} parent=1 // pred_region
      _
    $region5: #{tpu_custom_call.1} parent=1 // pred_fallthru
      _
    // Predicated region
    $region6: #{tpu_custom_call.1} parent=1 // pred_check
      _
    $region7: #{tpu_custom_call.1} parent=1 // pred_check_branch
      %22 = sbr.rel (0) target = $region9
    $region8: #{tpu_custom_call.1} parent=1 // pred_region
      %24 = vsyncadd [#allocation5], 0
      %s25 = sshll.u32 %s1, 4
      %s26 = int_to_ptr.hbm [resolvable:$true] %s25
      %s27 = sshll.u32 [#allocation4], 4
      %s28 = int_to_ptr.vmem [resolvable:$true] %s27
      %33 = dma.hbm_to_vmem [thread:$0]  %s26, 4096, %s28, [#allocation5], 1024, 1024, 64
    $region9: #{tpu_custom_call.1} parent=1 // pred_fallthru
      _
    // Predicated region
    $region10: #{tpu_custom_call.1} parent=1 // pred_check
      _
    $region11: #{tpu_custom_call.1} parent=1 // pred_check_branch
      %35 = sbr.rel (0) target = $region13
    $region12: #{tpu_custom_call.1} parent=1 // pred_region
      %37 = vsyncadd [#allocation7], 0
      %s38 = sshll.u32 %s2, 4
      %s39 = int_to_ptr.hbm [resolvable:$true] %s38
      %s40 = sshll.u32 [#allocation6], 4
      %s41 = int_to_ptr.vmem [resolvable:$true] %s40
      %46 = dma.hbm_to_vmem [thread:$0]  %s39, 32768, %s41, [#allocation7], 1024, 1024, 64
    $region13: #{tpu_custom_call.1} parent=1 // pred_fallthru
      _
    // Predicated region
    $region14: #{tpu_custom_call.1} parent=1 // pred_check
      _
    $region15: #{tpu_custom_call.1} parent=1 // pred_check_branch
      %48 = sbr.rel (0) target = $region17
    $region16: #{tpu_custom_call.1} parent=1 // pred_region
      _
    $region17: #{tpu_custom_call.1} parent=1 // pred_fallthru
      _
    // Predicated region
    $region18: #{tpu_custom_call.1} parent=1 // pred_check
      _
    $region19: #{tpu_custom_call.1} parent=1 // pred_check_branch
      %50 = sbr.rel (0) target = $region21
    $region20: #{tpu_custom_call.1} parent=1 // pred_region
      %52 = vsyncadd [#allocation7], 0
      %s53 = sshll.u32 %s4, 4
      %s54 = int_to_ptr.hbm [resolvable:$true] %s53
      %s55 = sshll.u32 [#allocation8], 4
      %s56 = int_to_ptr.vmem [resolvable:$true] %s55
      %61 = dma.hbm_to_vmem [thread:$0]  %s54, 4096, %s56, [#allocation7], 128, 128, 8
    $region21: #{tpu_custom_call.1} parent=1 // pred_fallthru
      _
    // Predicated region
    $region22: #{tpu_custom_call.1} parent=1 // pred_check
      _
    $region23: #{tpu_custom_call.1} parent=1 // pred_check_branch
      %63 = sbr.rel (0) target = $region25
    $region24: #{tpu_custom_call.1} parent=1 // pred_region
      _
    $region25: #{tpu_custom_call.1} parent=1 // pred_fallthru
      _
    // Predicated region
    $region26: #{tpu_custom_call.1} parent=1 // pred_check
      _
    $region27: #{tpu_custom_call.1} parent=1 // pred_check_branch
      %65 = sbr.rel (0) target = $region29
    $region28: #{tpu_custom_call.1} parent=1 // pred_region
      _
    $region29: #{tpu_custom_call.1} parent=1 // pred_fallthru
      _
    // Predicated region
    $region30: #{tpu_custom_call.1} parent=1 // pred_check
      _
    $region31: #{tpu_custom_call.1} parent=1 // pred_check_branch
      %67 = sbr.rel (0) target = $region33
    $region32: #{tpu_custom_call.1} parent=1 // pred_region
      _
    $region33: #{tpu_custom_call.1} parent=1 // pred_fallthru
      _
    // Predicated region
    $region34: #{tpu_custom_call.1} parent=1 // pred_check
      _
    $region35: #{tpu_custom_call.1} parent=1 // pred_check_branch
      %69 = sbr.rel (0) target = $region37
    $region36: #{tpu_custom_call.1} parent=1 // pred_region
      _
    $region37: #{tpu_custom_call.1} parent=1 // pred_fallthru
      _
    // Predicated region
    $region38: #{tpu_custom_call.1} parent=1 // pred_check
      _
    $region39: #{tpu_custom_call.1} parent=1 // pred_check_branch
      %71 = sbr.rel (0) target = $region41
    $region40: #{tpu_custom_call.1} parent=1 // pred_region
      _
    $region41: #{tpu_custom_call.1} parent=1 // pred_fallthru
      _
    // Predicated region
    $region42: #{tpu_custom_call.1} parent=1 // pred_check
      _
    $region43: #{tpu_custom_call.1} parent=1 // pred_check_branch
      %73 = sbr.rel (0) target = $region45
    $region44: #{tpu_custom_call.1} parent=1 // pred_region
      %75 = dma.done [#allocation5], 4096
    $region45: #{tpu_custom_call.1} parent=1 // pred_fallthru
      _
    // Predicated region
    $region46: #{tpu_custom_call.1} parent=1 // pred_check
      _
    $region47: #{tpu_custom_call.1} parent=1 // pred_check_branch
      %77 = sbr.rel (0) target = $region49
    $region48: #{tpu_custom_call.1} parent=1 // pred_region
      %79 = dma.done [#allocation7], 32768
    $region49: #{tpu_custom_call.1} parent=1 // pred_fallthru
      _
    // Predicated region
    $region50: #{tpu_custom_call.1} parent=1 // pred_check
      _
    $region51: #{tpu_custom_call.1} parent=1 // pred_check_branch
      %81 = sbr.rel (0) target = $region53
    $region52: #{tpu_custom_call.1} parent=1 // pred_region
      %83 = dma.done [#allocation7], 4096
    $region53: #{tpu_custom_call.1} parent=1 // pred_fallthru
      _
    %v84 = vld [vmem:[%s0] sm:$0xff]
    %v85 = vld [vmem:[%s0 + $0x8] sm:$0xff]
    %v86 = vld [vmem:[%s0 + $0x10] sm:$0xff]
    %v87 = vld [vmem:[%s0 + $0x18] sm:$0xff]
    %v88 = vld [vmem:[%s0 + $0x20] sm:$0xff]
    %v89 = vld [vmem:[%s0 + $0x28] sm:$0xff]
    %v90 = vld [vmem:[%s0 + $0x30] sm:$0xff]
    %v91 = vld [vmem:[%s0 + $0x38] sm:$0xff]
    %v92 = vld [vmem:[#allocation4] sm:$0xff]
    %v93 = vld [vmem:[#allocation4 + $0x8] sm:$0xff]
    %v94 = vld [vmem:[#allocation4 + $0x10] sm:$0xff]
    %v95 = vld [vmem:[#allocation4 + $0x18] sm:$0xff]
    %v96 = vld [vmem:[#allocation4 + $0x20] sm:$0xff]
    %v97 = vld [vmem:[#allocation4 + $0x28] sm:$0xff]
    %v98 = vld [vmem:[#allocation4 + $0x30] sm:$0xff]
    %v99 = vld [vmem:[#allocation4 + $0x38] sm:$0xff]
    %v100 = vld [vmem:[#allocation4 + $0x40] sm:$0xff]
    %v101 = vld [vmem:[#allocation4 + $0x48] sm:$0xff]
    %v102 = vld [vmem:[#allocation4 + $0x50] sm:$0xff]
    %v103 = vld [vmem:[#allocation4 + $0x58] sm:$0xff]
    %v104 = vld [vmem:[#allocation4 + $0x60] sm:$0xff]
    %v105 = vld [vmem:[#allocation4 + $0x68] sm:$0xff]
    %v106 = vld [vmem:[#allocation4 + $0x70] sm:$0xff]
    %v107 = vld [vmem:[#allocation4 + $0x78] sm:$0xff]
    %v108 = vld [vmem:[#allocation4 + $0x80] sm:$0xff]
    %v109 = vld [vmem:[#allocation4 + $0x88] sm:$0xff]
    %v110 = vld [vmem:[#allocation4 + $0x90] sm:$0xff]
    %v111 = vld [vmem:[#allocation4 + $0x98] sm:$0xff]
    %v112 = vld [vmem:[#allocation4 + $0xa0] sm:$0xff]
    %v113 = vld [vmem:[#allocation4 + $0xa8] sm:$0xff]
    %v114 = vld [vmem:[#allocation4 + $0xb0] sm:$0xff]
    %v115 = vld [vmem:[#allocation4 + $0xb8] sm:$0xff]
    %v116 = vld [vmem:[#allocation4 + $0xc0] sm:$0xff]
    %v117 = vld [vmem:[#allocation4 + $0xc8] sm:$0xff]
    %v118 = vld [vmem:[#allocation4 + $0xd0] sm:$0xff]
    %v119 = vld [vmem:[#allocation4 + $0xd8] sm:$0xff]
    %v120 = vld [vmem:[#allocation4 + $0xe0] sm:$0xff]
    %v121 = vld [vmem:[#allocation4 + $0xe8] sm:$0xff]
    %v122 = vld [vmem:[#allocation4 + $0xf0] sm:$0xff]
    %v123 = vld [vmem:[#allocation4 + $0xf8] sm:$0xff]
    %v124 = vld [vmem:[%s3] sm:$0xff]
    %v126 = vperm.slane %v124, 0
    %v127 = vperm.slane %v124, 1
    %v128 = vperm.slane %v124, 2
    %v129 = vperm.slane %v124, 3
    %v130 = vperm.slane %v124, 4
    %v131 = vperm.slane %v124, 5
    %v132 = vperm.slane %v124, 6
    %v133 = vperm.slane %v124, 7
    %vm142 = vcmask 261120
    %v144 = vsel %vm142, %v84, 0
    %v147 = vsel %vm142, %v85, 0
    %v150 = vsel %vm142, %v86, 0
    %v153 = vsel %vm142, %v87, 0
    %v156 = vsel %vm142, %v88, 0
    %v159 = vsel %vm142, %v89, 0
    %v162 = vsel %vm142, %v90, 0
    %v165 = vsel %vm142, %v91, 0
    %167 = vmatpush.msra.mxu0 0.0
    %168 = vmatpush.msra.mxu0 0.0
    %169 = vmatpush.msra.mxu0 0.0
    %170 = vmatpush.msra.mxu0 0.0
    %171 = vmatpush.msra.mxu0 0.0
    %172 = vmatpush.msra.mxu0 0.0
    %173 = vmatpush.msra.mxu0 0.0
    %174 = vmatpush.msra.mxu0 0.0
    %175 = vmatpush.msra.mxu0 0.0
    %176 = vmatpush.msra.mxu0 0.0
    %177 = vmatpush.msra.mxu0 0.0
    %178 = vmatpush.msra.mxu0 0.0
    %179 = vmatpush.msra.mxu0 %v116
    %180 = vmatpush.msra.mxu0 %v108
    %181 = vmatpush.msra.mxu0 %v100
    %182 = vmatpush.msra.mxu0 %v92
    %183 = vmatmul.f32.gmra.mxu0 %v144
    %v184 = vpop.f32.mrf.mxu0
    %v185 = vadd.f32 %v126, %v184
    %186 = vmatmul.f32.gmra.mxu0 %v147
    %v187 = vpop.f32.mrf.mxu0
    %v188 = vadd.f32 %v126, %v187
    %189 = vmatmul.f32.gmra.mxu0 %v150
    %v190 = vpop.f32.mrf.mxu0
    %v191 = vadd.f32 %v126, %v190
    %192 = vmatmul.f32.gmra.mxu0 %v153
    %v193 = vpop.f32.mrf.mxu0
    %v194 = vadd.f32 %v126, %v193
    %195 = vmatmul.f32.gmra.mxu0 %v156
    %v196 = vpop.f32.mrf.mxu0
    %v197 = vadd.f32 %v126, %v196
    %198 = vmatmul.f32.gmra.mxu0 %v159
    %v199 = vpop.f32.mrf.mxu0
    %v200 = vadd.f32 %v126, %v199
    %201 = vmatmul.f32.gmra.mxu0 %v162
    %v202 = vpop.f32.mrf.mxu0
    %v203 = vadd.f32 %v126, %v202
    %204 = vmatmul.f32.gmra.mxu0 %v165
    %v205 = vpop.f32.mrf.mxu0
    %v206 = vadd.f32 %v126, %v205
    %207 = vdwg.mxu0
    %208 = vmatpush.msra.mxu0 0.0
    %209 = vmatpush.msra.mxu0 0.0
    %210 = vmatpush.msra.mxu0 0.0
    %211 = vmatpush.msra.mxu0 0.0
    %212 = vmatpush.msra.mxu0 0.0
    %213 = vmatpush.msra.mxu0 0.0
    %214 = vmatpush.msra.mxu0 0.0
    %215 = vmatpush.msra.mxu0 0.0
    %216 = vmatpush.msra.mxu0 0.0
    %217 = vmatpush.msra.mxu0 0.0
    %218 = vmatpush.msra.mxu0 0.0
    %219 = vmatpush.msra.mxu0 0.0
    %220 = vmatpush.msra.mxu0 %v117
    %221 = vmatpush.msra.mxu0 %v109
    %222 = vmatpush.msra.mxu0 %v101
    %223 = vmatpush.msra.mxu0 %v93
    %224 = vmatmul.f32.gmra.mxu0 %v144
    %v225 = vpop.f32.mrf.mxu0
    %v226 = vadd.f32 %v127, %v225
    %227 = vmatmul.f32.gmra.mxu0 %v147
    %v228 = vpop.f32.mrf.mxu0
    %v229 = vadd.f32 %v127, %v228
    %230 = vmatmul.f32.gmra.mxu0 %v150
    %v231 = vpop.f32.mrf.mxu0
    %v232 = vadd.f32 %v127, %v231
    %233 = vmatmul.f32.gmra.mxu0 %v153
    %v234 = vpop.f32.mrf.mxu0
    %v235 = vadd.f32 %v127, %v234
    %236 = vmatmul.f32.gmra.mxu0 %v156
    %v237 = vpop.f32.mrf.mxu0
    %v238 = vadd.f32 %v127, %v237
    %239 = vmatmul.f32.gmra.mxu0 %v159
    %v240 = vpop.f32.mrf.mxu0
    %v241 = vadd.f32 %v127, %v240
    %242 = vmatmul.f32.gmra.mxu0 %v162
    %v243 = vpop.f32.mrf.mxu0
    %v244 = vadd.f32 %v127, %v243
    %245 = vmatmul.f32.gmra.mxu0 %v165
    %v246 = vpop.f32.mrf.mxu0
    %v247 = vadd.f32 %v127, %v246
    %248 = vdwg.mxu0
    %249 = vmatpush.msra.mxu0 0.0
    %250 = vmatpush.msra.mxu0 0.0
    %251 = vmatpush.msra.mxu0 0.0
    %252 = vmatpush.msra.mxu0 0.0
    %253 = vmatpush.msra.mxu0 0.0
    %254 = vmatpush.msra.mxu0 0.0
    %255 = vmatpush.msra.mxu0 0.0
    %256 = vmatpush.msra.mxu0 0.0
    %257 = vmatpush.msra.mxu0 0.0
    %258 = vmatpush.msra.mxu0 0.0
    %259 = vmatpush.msra.mxu0 0.0
    %260 = vmatpush.msra.mxu0 0.0
    %261 = vmatpush.msra.mxu0 %v118
    %262 = vmatpush.msra.mxu0 %v110
    %263 = vmatpush.msra.mxu0 %v102
    %264 = vmatpush.msra.mxu0 %v94
    %265 = vmatmul.f32.gmra.mxu0 %v144
    %v266 = vpop.f32.mrf.mxu0
    %v267 = vadd.f32 %v128, %v266
    %268 = vmatmul.f32.gmra.mxu0 %v147
    %v269 = vpop.f32.mrf.mxu0
    %v270 = vadd.f32 %v128, %v269
    %271 = vmatmul.f32.gmra.mxu0 %v150
    %v272 = vpop.f32.mrf.mxu0
    %v273 = vadd.f32 %v128, %v272
    %274 = vmatmul.f32.gmra.mxu0 %v153
    %v275 = vpop.f32.mrf.mxu0
    %v276 = vadd.f32 %v128, %v275
    %277 = vmatmul.f32.gmra.mxu0 %v156
    %v278 = vpop.f32.mrf.mxu0
    %v279 = vadd.f32 %v128, %v278
    %280 = vmatmul.f32.gmra.mxu0 %v159
    %v281 = vpop.f32.mrf.mxu0
    %v282 = vadd.f32 %v128, %v281
    %283 = vmatmul.f32.gmra.mxu0 %v162
    %v284 = vpop.f32.mrf.mxu0
    %v285 = vadd.f32 %v128, %v284
    %286 = vmatmul.f32.gmra.mxu0 %v165
    %v287 = vpop.f32.mrf.mxu0
    %v288 = vadd.f32 %v128, %v287
    %289 = vdwg.mxu0
    %290 = vmatpush.msra.mxu0 0.0
    %291 = vmatpush.msra.mxu0 0.0
    %292 = vmatpush.msra.mxu0 0.0
    %293 = vmatpush.msra.mxu0 0.0
    %294 = vmatpush.msra.mxu0 0.0
    %295 = vmatpush.msra.mxu0 0.0
    %296 = vmatpush.msra.mxu0 0.0
    %297 = vmatpush.msra.mxu0 0.0
    %298 = vmatpush.msra.mxu0 0.0
    %299 = vmatpush.msra.mxu0 0.0
    %300 = vmatpush.msra.mxu0 0.0
    %301 = vmatpush.msra.mxu0 0.0
    %302 = vmatpush.msra.mxu0 %v119
    %303 = vmatpush.msra.mxu0 %v111
    %304 = vmatpush.msra.mxu0 %v103
    %305 = vmatpush.msra.mxu0 %v95
    %306 = vmatmul.f32.gmra.mxu0 %v144
    %v307 = vpop.f32.mrf.mxu0
    %v308 = vadd.f32 %v129, %v307
    %309 = vmatmul.f32.gmra.mxu0 %v147
    %v310 = vpop.f32.mrf.mxu0
    %v311 = vadd.f32 %v129, %v310
    %312 = vmatmul.f32.gmra.mxu0 %v150
    %v313 = vpop.f32.mrf.mxu0
    %v314 = vadd.f32 %v129, %v313
    %315 = vmatmul.f32.gmra.mxu0 %v153
    %v316 = vpop.f32.mrf.mxu0
    %v317 = vadd.f32 %v129, %v316
    %318 = vmatmul.f32.gmra.mxu0 %v156
    %v319 = vpop.f32.mrf.mxu0
    %v320 = vadd.f32 %v129, %v319
    %321 = vmatmul.f32.gmra.mxu0 %v159
    %v322 = vpop.f32.mrf.mxu0
    %v323 = vadd.f32 %v129, %v322
    %324 = vmatmul.f32.gmra.mxu0 %v162
    %v325 = vpop.f32.mrf.mxu0
    %v326 = vadd.f32 %v129, %v325
    %327 = vmatmul.f32.gmra.mxu0 %v165
    %v328 = vpop.f32.mrf.mxu0
    %v329 = vadd.f32 %v129, %v328
    %330 = vdwg.mxu0
    %331 = vmatpush.msra.mxu0 0.0
    %332 = vmatpush.msra.mxu0 0.0
    %333 = vmatpush.msra.mxu0 0.0
    %334 = vmatpush.msra.mxu0 0.0
    %335 = vmatpush.msra.mxu0 0.0
    %336 = vmatpush.msra.mxu0 0.0
    %337 = vmatpush.msra.mxu0 0.0
    %338 = vmatpush.msra.mxu0 0.0
    %339 = vmatpush.msra.mxu0 0.0
    %340 = vmatpush.msra.mxu0 0.0
    %341 = vmatpush.msra.mxu0 0.0
    %342 = vmatpush.msra.mxu0 0.0
    %343 = vmatpush.msra.mxu0 %v120
    %344 = vmatpush.msra.mxu0 %v112
    %345 = vmatpush.msra.mxu0 %v104
    %346 = vmatpush.msra.mxu0 %v96
    %347 = vmatmul.f32.gmra.mxu0 %v144
    %v348 = vpop.f32.mrf.mxu0
    %v349 = vadd.f32 %v130, %v348
    %350 = vmatmul.f32.gmra.mxu0 %v147
    %v351 = vpop.f32.mrf.mxu0
    %v352 = vadd.f32 %v130, %v351
    %353 = vmatmul.f32.gmra.mxu0 %v150
    %v354 = vpop.f32.mrf.mxu0
    %v355 = vadd.f32 %v130, %v354
    %356 = vmatmul.f32.gmra.mxu0 %v153
    %v357 = vpop.f32.mrf.mxu0
    %v358 = vadd.f32 %v130, %v357
    %359 = vmatmul.f32.gmra.mxu0 %v156
    %v360 = vpop.f32.mrf.mxu0
    %v361 = vadd.f32 %v130, %v360
    %362 = vmatmul.f32.gmra.mxu0 %v159
    %v363 = vpop.f32.mrf.mxu0
    %v364 = vadd.f32 %v130, %v363
    %365 = vmatmul.f32.gmra.mxu0 %v162
    %v366 = vpop.f32.mrf.mxu0
    %v367 = vadd.f32 %v130, %v366
    %368 = vmatmul.f32.gmra.mxu0 %v165
    %v369 = vpop.f32.mrf.mxu0
    %v370 = vadd.f32 %v130, %v369
    %371 = vdwg.mxu0
    %372 = vmatpush.msra.mxu0 0.0
    %373 = vmatpush.msra.mxu0 0.0
    %374 = vmatpush.msra.mxu0 0.0
    %375 = vmatpush.msra.mxu0 0.0
    %376 = vmatpush.msra.mxu0 0.0
    %377 = vmatpush.msra.mxu0 0.0
    %378 = vmatpush.msra.mxu0 0.0
    %379 = vmatpush.msra.mxu0 0.0
    %380 = vmatpush.msra.mxu0 0.0
    %381 = vmatpush.msra.mxu0 0.0
    %382 = vmatpush.msra.mxu0 0.0
    %383 = vmatpush.msra.mxu0 0.0
    %384 = vmatpush.msra.mxu0 %v121
    %385 = vmatpush.msra.mxu0 %v113
    %386 = vmatpush.msra.mxu0 %v105
    %387 = vmatpush.msra.mxu0 %v97
    %388 = vmatmul.f32.gmra.mxu0 %v144
    %v389 = vpop.f32.mrf.mxu0
    %v390 = vadd.f32 %v131, %v389
    %391 = vmatmul.f32.gmra.mxu0 %v147
    %v392 = vpop.f32.mrf.mxu0
    %v393 = vadd.f32 %v131, %v392
    %394 = vmatmul.f32.gmra.mxu0 %v150
    %v395 = vpop.f32.mrf.mxu0
    %v396 = vadd.f32 %v131, %v395
    %397 = vmatmul.f32.gmra.mxu0 %v153
    %v398 = vpop.f32.mrf.mxu0
    %v399 = vadd.f32 %v131, %v398
    %400 = vmatmul.f32.gmra.mxu0 %v156
    %v401 = vpop.f32.mrf.mxu0
    %v402 = vadd.f32 %v131, %v401
    %403 = vmatmul.f32.gmra.mxu0 %v159
    %v404 = vpop.f32.mrf.mxu0
    %v405 = vadd.f32 %v131, %v404
    %406 = vmatmul.f32.gmra.mxu0 %v162
    %v407 = vpop.f32.mrf.mxu0
    %v408 = vadd.f32 %v131, %v407
    %409 = vmatmul.f32.gmra.mxu0 %v165
    %v410 = vpop.f32.mrf.mxu0
    %v411 = vadd.f32 %v131, %v410
    %412 = vdwg.mxu0
    %413 = vmatpush.msra.mxu0 0.0
    %414 = vmatpush.msra.mxu0 0.0
    %415 = vmatpush.msra.mxu0 0.0
    %416 = vmatpush.msra.mxu0 0.0
    %417 = vmatpush.msra.mxu0 0.0
    %418 = vmatpush.msra.mxu0 0.0
    %419 = vmatpush.msra.mxu0 0.0
    %420 = vmatpush.msra.mxu0 0.0
    %421 = vmatpush.msra.mxu0 0.0
    %422 = vmatpush.msra.mxu0 0.0
    %423 = vmatpush.msra.mxu0 0.0
    %424 = vmatpush.msra.mxu0 0.0
    %425 = vmatpush.msra.mxu0 %v122
    %426 = vmatpush.msra.mxu0 %v114
    %427 = vmatpush.msra.mxu0 %v106
    %428 = vmatpush.msra.mxu0 %v98
    %429 = vmatmul.f32.gmra.mxu0 %v144
    %v430 = vpop.f32.mrf.mxu0
    %v431 = vadd.f32 %v132, %v430
    %432 = vmatmul.f32.gmra.mxu0 %v147
    %v433 = vpop.f32.mrf.mxu0
    %v434 = vadd.f32 %v132, %v433
    %435 = vmatmul.f32.gmra.mxu0 %v150
    %v436 = vpop.f32.mrf.mxu0
    %v437 = vadd.f32 %v132, %v436
    %438 = vmatmul.f32.gmra.mxu0 %v153
    %v439 = vpop.f32.mrf.mxu0
    %v440 = vadd.f32 %v132, %v439
    %441 = vmatmul.f32.gmra.mxu0 %v156
    %v442 = vpop.f32.mrf.mxu0
    %v443 = vadd.f32 %v132, %v442
    %444 = vmatmul.f32.gmra.mxu0 %v159
    %v445 = vpop.f32.mrf.mxu0
    %v446 = vadd.f32 %v132, %v445
    %447 = vmatmul.f32.gmra.mxu0 %v162
    %v448 = vpop.f32.mrf.mxu0
    %v449 = vadd.f32 %v132, %v448
    %450 = vmatmul.f32.gmra.mxu0 %v165
    %v451 = vpop.f32.mrf.mxu0
    %v452 = vadd.f32 %v132, %v451
    %453 = vdwg.mxu0
    %454 = vmatpush.msra.mxu0 0.0
    %455 = vmatpush.msra.mxu0 0.0
    %456 = vmatpush.msra.mxu0 0.0
    %457 = vmatpush.msra.mxu0 0.0
    %458 = vmatpush.msra.mxu0 0.0
    %459 = vmatpush.msra.mxu0 0.0
    %460 = vmatpush.msra.mxu0 0.0
    %461 = vmatpush.msra.mxu0 0.0
    %462 = vmatpush.msra.mxu0 0.0
    %463 = vmatpush.msra.mxu0 0.0
    %464 = vmatpush.msra.mxu0 0.0
    %465 = vmatpush.msra.mxu0 0.0
    %466 = vmatpush.msra.mxu0 %v123
    %467 = vmatpush.msra.mxu0 %v115
    %468 = vmatpush.msra.mxu0 %v107
    %469 = vmatpush.msra.mxu0 %v99
    %470 = vmatmul.f32.gmra.mxu0 %v144
    %v471 = vpop.f32.mrf.mxu0
    %v472 = vadd.f32 %v133, %v471
    %473 = vmatmul.f32.gmra.mxu0 %v147
    %v474 = vpop.f32.mrf.mxu0
    %v475 = vadd.f32 %v133, %v474
    %476 = vmatmul.f32.gmra.mxu0 %v150
    %v477 = vpop.f32.mrf.mxu0
    %v478 = vadd.f32 %v133, %v477
    %479 = vmatmul.f32.gmra.mxu0 %v153
    %v480 = vpop.f32.mrf.mxu0
    %v481 = vadd.f32 %v133, %v480
    %482 = vmatmul.f32.gmra.mxu0 %v156
    %v483 = vpop.f32.mrf.mxu0
    %v484 = vadd.f32 %v133, %v483
    %485 = vmatmul.f32.gmra.mxu0 %v159
    %v486 = vpop.f32.mrf.mxu0
    %v487 = vadd.f32 %v133, %v486
    %488 = vmatmul.f32.gmra.mxu0 %v162
    %v489 = vpop.f32.mrf.mxu0
    %v490 = vadd.f32 %v133, %v489
    %491 = vmatmul.f32.gmra.mxu0 %v165
    %v492 = vpop.f32.mrf.mxu0
    %v493 = vadd.f32 %v133, %v492
    %494 = vdwg.mxu0
    %495 = vst [vmem:[#allocation2] sm:$0xff] %v185
    %496 = vst [vmem:[#allocation2 + $0x8] sm:$0xff] %v226
    %497 = vst [vmem:[#allocation2 + $0x10] sm:$0xff] %v267
    %498 = vst [vmem:[#allocation2 + $0x18] sm:$0xff] %v308
    %499 = vst [vmem:[#allocation2 + $0x20] sm:$0xff] %v349
    %500 = vst [vmem:[#allocation2 + $0x28] sm:$0xff] %v390
    %501 = vst [vmem:[#allocation2 + $0x30] sm:$0xff] %v431
    %502 = vst [vmem:[#allocation2 + $0x38] sm:$0xff] %v472
    %503 = vst [vmem:[#allocation2 + $0x40] sm:$0xff] %v188
    %504 = vst [vmem:[#allocation2 + $0x48] sm:$0xff] %v229
    %505 = vst [vmem:[#allocation2 + $0x50] sm:$0xff] %v270
    %506 = vst [vmem:[#allocation2 + $0x58] sm:$0xff] %v311
    %507 = vst [vmem:[#allocation2 + $0x60] sm:$0xff] %v352
    %508 = vst [vmem:[#allocation2 + $0x68] sm:$0xff] %v393
    %509 = vst [vmem:[#allocation2 + $0x70] sm:$0xff] %v434
    %510 = vst [vmem:[#allocation2 + $0x78] sm:$0xff] %v475
    %511 = vst [vmem:[#allocation2 + $0x80] sm:$0xff] %v191
    %512 = vst [vmem:[#allocation2 + $0x88] sm:$0xff] %v232
    %513 = vst [vmem:[#allocation2 + $0x90] sm:$0xff] %v273
    %514 = vst [vmem:[#allocation2 + $0x98] sm:$0xff] %v314
    %515 = vst [vmem:[#allocation2 + $0xa0] sm:$0xff] %v355
    %516 = vst [vmem:[#allocation2 + $0xa8] sm:$0xff] %v396
    %517 = vst [vmem:[#allocation2 + $0xb0] sm:$0xff] %v437
    %518 = vst [vmem:[#allocation2 + $0xb8] sm:$0xff] %v478
    %519 = vst [vmem:[#allocation2 + $0xc0] sm:$0xff] %v194
    %520 = vst [vmem:[#allocation2 + $0xc8] sm:$0xff] %v235
    %521 = vst [vmem:[#allocation2 + $0xd0] sm:$0xff] %v276
    %522 = vst [vmem:[#allocation2 + $0xd8] sm:$0xff] %v317
    %523 = vst [vmem:[#allocation2 + $0xe0] sm:$0xff] %v358
    %524 = vst [vmem:[#allocation2 + $0xe8] sm:$0xff] %v399
    %525 = vst [vmem:[#allocation2 + $0xf0] sm:$0xff] %v440
    %526 = vst [vmem:[#allocation2 + $0xf8] sm:$0xff] %v481
    %527 = vst [vmem:[#allocation2 + $0x100] sm:$0xff] %v197
    %528 = vst [vmem:[#allocation2 + $0x108] sm:$0xff] %v238
    %529 = vst [vmem:[#allocation2 + $0x110] sm:$0xff] %v279
    %530 = vst [vmem:[#allocation2 + $0x118] sm:$0xff] %v320
    %531 = vst [vmem:[#allocation2 + $0x120] sm:$0xff] %v361
    %532 = vst [vmem:[#allocation2 + $0x128] sm:$0xff] %v402
    %533 = vst [vmem:[#allocation2 + $0x130] sm:$0xff] %v443
    %534 = vst [vmem:[#allocation2 + $0x138] sm:$0xff] %v484
    %535 = vst [vmem:[#allocation2 + $0x140] sm:$0xff] %v200
    %536 = vst [vmem:[#allocation2 + $0x148] sm:$0xff] %v241
    %537 = vst [vmem:[#allocation2 + $0x150] sm:$0xff] %v282
    %538 = vst [vmem:[#allocation2 + $0x158] sm:$0xff] %v323
    %539 = vst [vmem:[#allocation2 + $0x160] sm:$0xff] %v364
    %540 = vst [vmem:[#allocation2 + $0x168] sm:$0xff] %v405
    %541 = vst [vmem:[#allocation2 + $0x170] sm:$0xff] %v446
    %542 = vst [vmem:[#allocation2 + $0x178] sm:$0xff] %v487
    %543 = vst [vmem:[#allocation2 + $0x180] sm:$0xff] %v203
    %544 = vst [vmem:[#allocation2 + $0x188] sm:$0xff] %v244
    %545 = vst [vmem:[#allocation2 + $0x190] sm:$0xff] %v285
    %546 = vst [vmem:[#allocation2 + $0x198] sm:$0xff] %v326
    %547 = vst [vmem:[#allocation2 + $0x1a0] sm:$0xff] %v367
    %548 = vst [vmem:[#allocation2 + $0x1a8] sm:$0xff] %v408
    %549 = vst [vmem:[#allocation2 + $0x1b0] sm:$0xff] %v449
    %550 = vst [vmem:[#allocation2 + $0x1b8] sm:$0xff] %v490
    %551 = vst [vmem:[#allocation2 + $0x1c0] sm:$0xff] %v206
    %552 = vst [vmem:[#allocation2 + $0x1c8] sm:$0xff] %v247
    %553 = vst [vmem:[#allocation2 + $0x1d0] sm:$0xff] %v288
    %554 = vst [vmem:[#allocation2 + $0x1d8] sm:$0xff] %v329
    %555 = vst [vmem:[#allocation2 + $0x1e0] sm:$0xff] %v370
    %556 = vst [vmem:[#allocation2 + $0x1e8] sm:$0xff] %v411
    %557 = vst [vmem:[#allocation2 + $0x1f0] sm:$0xff] %v452
    %558 = vst [vmem:[#allocation2 + $0x1f8] sm:$0xff] %v493
    %v559 = vld [vmem:[#allocation6] sm:$0xff]
    %v560 = vld [vmem:[#allocation6 + $0x8] sm:$0xff]
    %v561 = vld [vmem:[#allocation6 + $0x10] sm:$0xff]
    %v562 = vld [vmem:[#allocation6 + $0x18] sm:$0xff]
    %v563 = vld [vmem:[#allocation6 + $0x20] sm:$0xff]
    %v564 = vld [vmem:[#allocation6 + $0x28] sm:$0xff]
    %v565 = vld [vmem:[#allocation6 + $0x30] sm:$0xff]
    %v566 = vld [vmem:[#allocation6 + $0x38] sm:$0xff]
    %v567 = vld [vmem:[#allocation6 + $0x40] sm:$0xff]
    %v568 = vld [vmem:[#allocation6 + $0x48] sm:$0xff]
    %v569 = vld [vmem:[#allocation6 + $0x50] sm:$0xff]
    %v570 = vld [vmem:[#allocation6 + $0x58] sm:$0xff]
    %v571 = vld [vmem:[#allocation6 + $0x60] sm:$0xff]
    %v572 = vld [vmem:[#allocation6 + $0x68] sm:$0xff]
    %v573 = vld [vmem:[#allocation6 + $0x70] sm:$0xff]
    %v574 = vld [vmem:[#allocation6 + $0x78] sm:$0xff]
    %v575 = vld [vmem:[#allocation6 + $0x80] sm:$0xff]
    %v576 = vld [vmem:[#allocation6 + $0x88] sm:$0xff]
    %v577 = vld [vmem:[#allocation6 + $0x90] sm:$0xff]
    %v578 = vld [vmem:[#allocation6 + $0x98] sm:$0xff]
    %v579 = vld [vmem:[#allocation6 + $0xa0] sm:$0xff]
    %v580 = vld [vmem:[#allocation6 + $0xa8] sm:$0xff]
    %v581 = vld [vmem:[#allocation6 + $0xb0] sm:$0xff]
    %v582 = vld [vmem:[#allocation6 + $0xb8] sm:$0xff]
    %v583 = vld [vmem:[#allocation6 + $0xc0] sm:$0xff]
    %v584 = vld [vmem:[#allocation6 + $0xc8] sm:$0xff]
    %v585 = vld [vmem:[#allocation6 + $0xd0] sm:$0xff]
    %v586 = vld [vmem:[#allocation6 + $0xd8] sm:$0xff]
    %v587 = vld [vmem:[#allocation6 + $0xe0] sm:$0xff]
    %v588 = vld [vmem:[#allocation6 + $0xe8] sm:$0xff]
    %v589 = vld [vmem:[#allocation6 + $0xf0] sm:$0xff]
    %v590 = vld [vmem:[#allocation6 + $0xf8] sm:$0xff]
    %v591 = vld [vmem:[#allocation6 + $0x100] sm:$0xff]
    %v592 = vld [vmem:[#allocation6 + $0x108] sm:$0xff]
    %v593 = vld [vmem:[#allocation6 + $0x110] sm:$0xff]
    %v594 = vld [vmem:[#allocation6 + $0x118] sm:$0xff]
    %v595 = vld [vmem:[#allocation6 + $0x120] sm:$0xff]
    %v596 = vld [vmem:[#allocation6 + $0x128] sm:$0xff]
    %v597 = vld [vmem:[#allocation6 + $0x130] sm:$0xff]
    %v598 = vld [vmem:[#allocation6 + $0x138] sm:$0xff]
    %v599 = vld [vmem:[#allocation6 + $0x140] sm:$0xff]
    %v600 = vld [vmem:[#allocation6 + $0x148] sm:$0xff]
    %v601 = vld [vmem:[#allocation6 + $0x150] sm:$0xff]
    %v602 = vld [vmem:[#allocation6 + $0x158] sm:$0xff]
    %v603 = vld [vmem:[#allocation6 + $0x160] sm:$0xff]
    %v604 = vld [vmem:[#allocation6 + $0x168] sm:$0xff]
    %v605 = vld [vmem:[#allocation6 + $0x170] sm:$0xff]
    %v606 = vld [vmem:[#allocation6 + $0x178] sm:$0xff]
    %v607 = vld [vmem:[#allocation6 + $0x180] sm:$0xff]
    %v608 = vld [vmem:[#allocation6 + $0x188] sm:$0xff]
    %v609 = vld [vmem:[#allocation6 + $0x190] sm:$0xff]
    %v610 = vld [vmem:[#allocation6 + $0x198] sm:$0xff]
    %v611 = vld [vmem:[#allocation6 + $0x1a0] sm:$0xff]
    %v612 = vld [vmem:[#allocation6 + $0x1a8] sm:$0xff]
    %v613 = vld [vmem:[#allocation6 + $0x1b0] sm:$0xff]
    %v614 = vld [vmem:[#allocation6 + $0x1b8] sm:$0xff]
    %v615 = vld [vmem:[#allocation6 + $0x1c0] sm:$0xff]
    %v616 = vld [vmem:[#allocation6 + $0x1c8] sm:$0xff]
    %v617 = vld [vmem:[#allocation6 + $0x1d0] sm:$0xff]
    %v618 = vld [vmem:[#allocation6 + $0x1d8] sm:$0xff]
    %v619 = vld [vmem:[#allocation6 + $0x1e0] sm:$0xff]
    %v620 = vld [vmem:[#allocation6 + $0x1e8] sm:$0xff]
    %v621 = vld [vmem:[#allocation6 + $0x1f0] sm:$0xff]
    %v622 = vld [vmem:[#allocation6 + $0x1f8] sm:$0xff]
    %v623 = vld [vmem:[#allocation6 + $0x200] sm:$0xff]
    %v624 = vld [vmem:[#allocation6 + $0x208] sm:$0xff]
    %v625 = vld [vmem:[#allocation6 + $0x210] sm:$0xff]
    %v626 = vld [vmem:[#allocation6 + $0x218] sm:$0xff]
    %v627 = vld [vmem:[#allocation6 + $0x220] sm:$0xff]
    %v628 = vld [vmem:[#allocation6 + $0x228] sm:$0xff]
    %v629 = vld [vmem:[#allocation6 + $0x230] sm:$0xff]
    %v630 = vld [vmem:[#allocation6 + $0x238] sm:$0xff]
    %v631 = vld [vmem:[#allocation6 + $0x240] sm:$0xff]
    %v632 = vld [vmem:[#allocation6 + $0x248] sm:$0xff]
    %v633 = vld [vmem:[#allocation6 + $0x250] sm:$0xff]
    %v634 = vld [vmem:[#allocation6 + $0x258] sm:$0xff]
    %v635 = vld [vmem:[#allocation6 + $0x260] sm:$0xff]
    %v636 = vld [vmem:[#allocation6 + $0x268] sm:$0xff]
    %v637 = vld [vmem:[#allocation6 + $0x270] sm:$0xff]
    %v638 = vld [vmem:[#allocation6 + $0x278] sm:$0xff]
    %v639 = vld [vmem:[#allocation6 + $0x280] sm:$0xff]
    %v640 = vld [vmem:[#allocation6 + $0x288] sm:$0xff]
    %v641 = vld [vmem:[#allocation6 + $0x290] sm:$0xff]
    %v642 = vld [vmem:[#allocation6 + $0x298] sm:$0xff]
    %v643 = vld [vmem:[#allocation6 + $0x2a0] sm:$0xff]
    %v644 = vld [vmem:[#allocation6 + $0x2a8] sm:$0xff]
    %v645 = vld [vmem:[#allocation6 + $0x2b0] sm:$0xff]
    %v646 = vld [vmem:[#allocation6 + $0x2b8] sm:$0xff]
    %v647 = vld [vmem:[#allocation6 + $0x2c0] sm:$0xff]
    %v648 = vld [vmem:[#allocation6 + $0x2c8] sm:$0xff]
    %v649 = vld [vmem:[#allocation6 + $0x2d0] sm:$0xff]
    %v650 = vld [vmem:[#allocation6 + $0x2d8] sm:$0xff]
    %v651 = vld [vmem:[#allocation6 + $0x2e0] sm:$0xff]
    %v652 = vld [vmem:[#allocation6 + $0x2e8] sm:$0xff]
    %v653 = vld [vmem:[#allocation6 + $0x2f0] sm:$0xff]
    %v654 = vld [vmem:[#allocation6 + $0x2f8] sm:$0xff]
    %v655 = vld [vmem:[#allocation6 + $0x300] sm:$0xff]
    %v656 = vld [vmem:[#allocation6 + $0x308] sm:$0xff]
    %v657 = vld [vmem:[#allocation6 + $0x310] sm:$0xff]
    %v658 = vld [vmem:[#allocation6 + $0x318] sm:$0xff]
    %v659 = vld [vmem:[#allocation6 + $0x320] sm:$0xff]
    %v660 = vld [vmem:[#allocation6 + $0x328] sm:$0xff]
    %v661 = vld [vmem:[#allocation6 + $0x330] sm:$0xff]
    %v662 = vld [vmem:[#allocation6 + $0x338] sm:$0xff]
    %v663 = vld [vmem:[#allocation6 + $0x340] sm:$0xff]
    %v664 = vld [vmem:[#allocation6 + $0x348] sm:$0xff]
    %v665 = vld [vmem:[#allocation6 + $0x350] sm:$0xff]
    %v666 = vld [vmem:[#allocation6 + $0x358] sm:$0xff]
    %v667 = vld [vmem:[#allocation6 + $0x360] sm:$0xff]
    %v668 = vld [vmem:[#allocation6 + $0x368] sm:$0xff]
    %v669 = vld [vmem:[#allocation6 + $0x370] sm:$0xff]
    %v670 = vld [vmem:[#allocation6 + $0x378] sm:$0xff]
    %v671 = vld [vmem:[#allocation6 + $0x380] sm:$0xff]
    %v672 = vld [vmem:[#allocation6 + $0x388] sm:$0xff]
    %v673 = vld [vmem:[#allocation6 + $0x390] sm:$0xff]
    %v674 = vld [vmem:[#allocation6 + $0x398] sm:$0xff]
    %v675 = vld [vmem:[#allocation6 + $0x3a0] sm:$0xff]
    %v676 = vld [vmem:[#allocation6 + $0x3a8] sm:$0xff]
    %v677 = vld [vmem:[#allocation6 + $0x3b0] sm:$0xff]
    %v678 = vld [vmem:[#allocation6 + $0x3b8] sm:$0xff]
    %v679 = vld [vmem:[#allocation6 + $0x3c0] sm:$0xff]
    %v680 = vld [vmem:[#allocation6 + $0x3c8] sm:$0xff]
    %v681 = vld [vmem:[#allocation6 + $0x3d0] sm:$0xff]
    %v682 = vld [vmem:[#allocation6 + $0x3d8] sm:$0xff]
    %v683 = vld [vmem:[#allocation6 + $0x3e0] sm:$0xff]
    %v684 = vld [vmem:[#allocation6 + $0x3e8] sm:$0xff]
    %v685 = vld [vmem:[#allocation6 + $0x3f0] sm:$0xff]
    %v686 = vld [vmem:[#allocation6 + $0x3f8] sm:$0xff]
    %v687 = vld [vmem:[#allocation6 + $0x400] sm:$0xff]
    %v688 = vld [vmem:[#allocation6 + $0x408] sm:$0xff]
    %v689 = vld [vmem:[#allocation6 + $0x410] sm:$0xff]
    %v690 = vld [vmem:[#allocation6 + $0x418] sm:$0xff]
    %v691 = vld [vmem:[#allocation6 + $0x420] sm:$0xff]
    %v692 = vld [vmem:[#allocation6 + $0x428] sm:$0xff]
    %v693 = vld [vmem:[#allocation6 + $0x430] sm:$0xff]
    %v694 = vld [vmem:[#allocation6 + $0x438] sm:$0xff]
    %v695 = vld [vmem:[#allocation6 + $0x440] sm:$0xff]
    %v696 = vld [vmem:[#allocation6 + $0x448] sm:$0xff]
    %v697 = vld [vmem:[#allocation6 + $0x450] sm:$0xff]
    %v698 = vld [vmem:[#allocation6 + $0x458] sm:$0xff]
    %v699 = vld [vmem:[#allocation6 + $0x460] sm:$0xff]
    %v700 = vld [vmem:[#allocation6 + $0x468] sm:$0xff]
    %v701 = vld [vmem:[#allocation6 + $0x470] sm:$0xff]
    %v702 = vld [vmem:[#allocation6 + $0x478] sm:$0xff]
    %v703 = vld [vmem:[#allocation6 + $0x480] sm:$0xff]
    %v704 = vld [vmem:[#allocation6 + $0x488] sm:$0xff]
    %v705 = vld [vmem:[#allocation6 + $0x490] sm:$0xff]
    %v706 = vld [vmem:[#allocation6 + $0x498] sm:$0xff]
    %v707 = vld [vmem:[#allocation6 + $0x4a0] sm:$0xff]
    %v708 = vld [vmem:[#allocation6 + $0x4a8] sm:$0xff]
    %v709 = vld [vmem:[#allocation6 + $0x4b0] sm:$0xff]
    %v710 = vld [vmem:[#allocation6 + $0x4b8] sm:$0xff]
    %v711 = vld [vmem:[#allocation6 + $0x4c0] sm:$0xff]
    %v712 = vld [vmem:[#allocation6 + $0x4c8] sm:$0xff]
    %v713 = vld [vmem:[#allocation6 + $0x4d0] sm:$0xff]
    %v714 = vld [vmem:[#allocation6 + $0x4d8] sm:$0xff]
    %v715 = vld [vmem:[#allocation6 + $0x4e0] sm:$0xff]
    %v716 = vld [vmem:[#allocation6 + $0x4e8] sm:$0xff]
    %v717 = vld [vmem:[#allocation6 + $0x4f0] sm:$0xff]
    %v718 = vld [vmem:[#allocation6 + $0x4f8] sm:$0xff]
    %v719 = vld [vmem:[#allocation6 + $0x500] sm:$0xff]
    %v720 = vld [vmem:[#allocation6 + $0x508] sm:$0xff]
    %v721 = vld [vmem:[#allocation6 + $0x510] sm:$0xff]
    %v722 = vld [vmem:[#allocation6 + $0x518] sm:$0xff]
    %v723 = vld [vmem:[#allocation6 + $0x520] sm:$0xff]
    %v724 = vld [vmem:[#allocation6 + $0x528] sm:$0xff]
    %v725 = vld [vmem:[#allocation6 + $0x530] sm:$0xff]
    %v726 = vld [vmem:[#allocation6 + $0x538] sm:$0xff]
    %v727 = vld [vmem:[#allocation6 + $0x540] sm:$0xff]
    %v728 = vld [vmem:[#allocation6 + $0x548] sm:$0xff]
    %v729 = vld [vmem:[#allocation6 + $0x550] sm:$0xff]
    %v730 = vld [vmem:[#allocation6 + $0x558] sm:$0xff]
    %v731 = vld [vmem:[#allocation6 + $0x560] sm:$0xff]
    %v732 = vld [vmem:[#allocation6 + $0x568] sm:$0xff]
    %v733 = vld [vmem:[#allocation6 + $0x570] sm:$0xff]
    %v734 = vld [vmem:[#allocation6 + $0x578] sm:$0xff]
    %v735 = vld [vmem:[#allocation6 + $0x580] sm:$0xff]
    %v736 = vld [vmem:[#allocation6 + $0x588] sm:$0xff]
    %v737 = vld [vmem:[#allocation6 + $0x590] sm:$0xff]
    %v738 = vld [vmem:[#allocation6 + $0x598] sm:$0xff]
    %v739 = vld [vmem:[#allocation6 + $0x5a0] sm:$0xff]
    %v740 = vld [vmem:[#allocation6 + $0x5a8] sm:$0xff]
    %v741 = vld [vmem:[#allocation6 + $0x5b0] sm:$0xff]
    %v742 = vld [vmem:[#allocation6 + $0x5b8] sm:$0xff]
    %v743 = vld [vmem:[#allocation6 + $0x5c0] sm:$0xff]
    %v744 = vld [vmem:[#allocation6 + $0x5c8] sm:$0xff]
    %v745 = vld [vmem:[#allocation6 + $0x5d0] sm:$0xff]
    %v746 = vld [vmem:[#allocation6 + $0x5d8] sm:$0xff]
    %v747 = vld [vmem:[#allocation6 + $0x5e0] sm:$0xff]
    %v748 = vld [vmem:[#allocation6 + $0x5e8] sm:$0xff]
    %v749 = vld [vmem:[#allocation6 + $0x5f0] sm:$0xff]
    %v750 = vld [vmem:[#allocation6 + $0x5f8] sm:$0xff]
    %v751 = vld [vmem:[#allocation6 + $0x600] sm:$0xff]
    %v752 = vld [vmem:[#allocation6 + $0x608] sm:$0xff]
    %v753 = vld [vmem:[#allocation6 + $0x610] sm:$0xff]
    %v754 = vld [vmem:[#allocation6 + $0x618] sm:$0xff]
    %v755 = vld [vmem:[#allocation6 + $0x620] sm:$0xff]
    %v756 = vld [vmem:[#allocation6 + $0x628] sm:$0xff]
    %v757 = vld [vmem:[#allocation6 + $0x630] sm:$0xff]
    %v758 = vld [vmem:[#allocation6 + $0x638] sm:$0xff]
    %v759 = vld [vmem:[#allocation6 + $0x640] sm:$0xff]
    %v760 = vld [vmem:[#allocation6 + $0x648] sm:$0xff]
    %v761 = vld [vmem:[#allocation6 + $0x650] sm:$0xff]
    %v762 = vld [vmem:[#allocation6 + $0x658] sm:$0xff]
    %v763 = vld [vmem:[#allocation6 + $0x660] sm:$0xff]
    %v764 = vld [vmem:[#allocation6 + $0x668] sm:$0xff]
    %v765 = vld [vmem:[#allocation6 + $0x670] sm:$0xff]
    %v766 = vld [vmem:[#allocation6 + $0x678] sm:$0xff]
    %v767 = vld [vmem:[#allocation6 + $0x680] sm:$0xff]
    %v768 = vld [vmem:[#allocation6 + $0x688] sm:$0xff]
    %v769 = vld [vmem:[#allocation6 + $0x690] sm:$0xff]
    %v770 = vld [vmem:[#allocation6 + $0x698] sm:$0xff]
    %v771 = vld [vmem:[#allocation6 + $0x6a0] sm:$0xff]
    %v772 = vld [vmem:[#allocation6 + $0x6a8] sm:$0xff]
    %v773 = vld [vmem:[#allocation6 + $0x6b0] sm:$0xff]
    %v774 = vld [vmem:[#allocation6 + $0x6b8] sm:$0xff]
    %v775 = vld [vmem:[#allocation6 + $0x6c0] sm:$0xff]
    %v776 = vld [vmem:[#allocation6 + $0x6c8] sm:$0xff]
    %v777 = vld [vmem:[#allocation6 + $0x6d0] sm:$0xff]
    %v778 = vld [vmem:[#allocation6 + $0x6d8] sm:$0xff]
    %v779 = vld [vmem:[#allocation6 + $0x6e0] sm:$0xff]
    %v780 = vld [vmem:[#allocation6 + $0x6e8] sm:$0xff]
    %v781 = vld [vmem:[#allocation6 + $0x6f0] sm:$0xff]
    %v782 = vld [vmem:[#allocation6 + $0x6f8] sm:$0xff]
    %v783 = vld [vmem:[#allocation6 + $0x700] sm:$0xff]
    %v784 = vld [vmem:[#allocation6 + $0x708] sm:$0xff]
    %v785 = vld [vmem:[#allocation6 + $0x710] sm:$0xff]
    %v786 = vld [vmem:[#allocation6 + $0x718] sm:$0xff]
    %v787 = vld [vmem:[#allocation6 + $0x720] sm:$0xff]
    %v788 = vld [vmem:[#allocation6 + $0x728] sm:$0xff]
    %v789 = vld [vmem:[#allocation6 + $0x730] sm:$0xff]
    %v790 = vld [vmem:[#allocation6 + $0x738] sm:$0xff]
    %v791 = vld [vmem:[#allocation6 + $0x740] sm:$0xff]
    %v792 = vld [vmem:[#allocation6 + $0x748] sm:$0xff]
    %v793 = vld [vmem:[#allocation6 + $0x750] sm:$0xff]
    %v794 = vld [vmem:[#allocation6 + $0x758] sm:$0xff]
    %v795 = vld [vmem:[#allocation6 + $0x760] sm:$0xff]
    %v796 = vld [vmem:[#allocation6 + $0x768] sm:$0xff]
    %v797 = vld [vmem:[#allocation6 + $0x770] sm:$0xff]
    %v798 = vld [vmem:[#allocation6 + $0x778] sm:$0xff]
    %v799 = vld [vmem:[#allocation6 + $0x780] sm:$0xff]
    %v800 = vld [vmem:[#allocation6 + $0x788] sm:$0xff]
    %v801 = vld [vmem:[#allocation6 + $0x790] sm:$0xff]
    %v802 = vld [vmem:[#allocation6 + $0x798] sm:$0xff]
    %v803 = vld [vmem:[#allocation6 + $0x7a0] sm:$0xff]
    %v804 = vld [vmem:[#allocation6 + $0x7a8] sm:$0xff]
    %v805 = vld [vmem:[#allocation6 + $0x7b0] sm:$0xff]
    %v806 = vld [vmem:[#allocation6 + $0x7b8] sm:$0xff]
    %v807 = vld [vmem:[#allocation6 + $0x7c0] sm:$0xff]
    %v808 = vld [vmem:[#allocation6 + $0x7c8] sm:$0xff]
    %v809 = vld [vmem:[#allocation6 + $0x7d0] sm:$0xff]
    %v810 = vld [vmem:[#allocation6 + $0x7d8] sm:$0xff]
    %v811 = vld [vmem:[#allocation6 + $0x7e0] sm:$0xff]
    %v812 = vld [vmem:[#allocation6 + $0x7e8] sm:$0xff]
    %v813 = vld [vmem:[#allocation6 + $0x7f0] sm:$0xff]
    %v814 = vld [vmem:[#allocation6 + $0x7f8] sm:$0xff]
    %v815 = vld [vmem:[#allocation2] sm:$0xff]
    %v816 = vld [vmem:[#allocation2 + $0x8] sm:$0xff]
    %v817 = vld [vmem:[#allocation2 + $0x20] sm:$0xff]
    %v818 = vld [vmem:[#allocation2 + $0x28] sm:$0xff]
    %v819 = vld [vmem:[#allocation2 + $0x30] sm:$0xff]
    %v820 = vld [vmem:[#allocation2 + $0x38] sm:$0xff]
    %v821 = vxor.u32 %v815, 2147483648
    %v822 = vxor.u32 %v816, 2147483648
    %v823 = vxor.u32 %v817, 2147483648
    %v824 = vxor.u32 %v818, 2147483648
    %v825 = vmul.f32 %v821, 1.442695
    %v826 = vpow.pop %v825
    %v827 = vmul.f32 %v822, 1.442695
    %v828 = vpow.pop %v827
    %v829 = vmul.f32 %v823, 1.442695
    %v830 = vpow.pop %v829
    %v831 = vmul.f32 %v824, 1.442695
    %v832 = vpow.pop %v831
    %v833 = vadd.f32 %v826, 1.0
    %v834 = vadd.f32 %v828, 1.0
    %v835 = vadd.f32 %v830, 1.0
    %v836 = vadd.f32 %v832, 1.0
    %v837 = vrcp.pop %v833
    %v838 = vmul.f32 %v833, %v837
    %v839 = vsub.f32 1.0, %v838
    %v840 = vmul.f32 %v837, %v839
    %v841 = vadd.f32 %v837, %v840
    %vm842 = vweird.f32 %v833
    %vm843 = vweird.f32 %v837
    %vm844 = vmor %vm842, %vm843
    %v845 = vsel %vm844, %v837, %v841
    %v846 = vand.u32 2147483647, %v833
    %vm847 = vcmp.eq.f32.partialorder %v846, 8.507059e+37
    %v848 = vand.u32 %v833, 2147483648
    %v849 = vor.u32 1.1754944e-38, %v848
    %v850 = vsel %vm847, %v849, %v845
    %v851 = vmul.f32 1.0, %v850
    %v852 = vrcp.pop %v834
    %v853 = vmul.f32 %v834, %v852
    %v854 = vsub.f32 1.0, %v853
    %v855 = vmul.f32 %v852, %v854
    %v856 = vadd.f32 %v852, %v855
    %vm857 = vweird.f32 %v834
    %vm858 = vweird.f32 %v852
    %vm859 = vmor %vm857, %vm858
    %v860 = vsel %vm859, %v852, %v856
    %v861 = vand.u32 2147483647, %v834
    %vm862 = vcmp.eq.f32.partialorder %v861, 8.507059e+37
    %v863 = vand.u32 %v834, 2147483648
    %v864 = vor.u32 1.1754944e-38, %v863
    %v865 = vsel %vm862, %v864, %v860
    %v866 = vmul.f32 1.0, %v865
    %v867 = vrcp.pop %v835
    %v868 = vmul.f32 %v835, %v867
    %v869 = vsub.f32 1.0, %v868
    %v870 = vmul.f32 %v867, %v869
    %v871 = vadd.f32 %v867, %v870
    %vm872 = vweird.f32 %v835
    %vm873 = vweird.f32 %v867
    %vm874 = vmor %vm872, %vm873
    %v875 = vsel %vm874, %v867, %v871
    %v876 = vand.u32 2147483647, %v835
    %vm877 = vcmp.eq.f32.partialorder %v876, 8.507059e+37
    %v878 = vand.u32 %v835, 2147483648
    %v879 = vor.u32 1.1754944e-38, %v878
    %v880 = vsel %vm877, %v879, %v875
    %v881 = vmul.f32 1.0, %v880
    %v882 = vrcp.pop %v836
    %v883 = vmul.f32 %v836, %v882
    %v884 = vsub.f32 1.0, %v883
    %v885 = vmul.f32 %v882, %v884
    %v886 = vadd.f32 %v882, %v885
    %vm887 = vweird.f32 %v836
    %vm888 = vweird.f32 %v882
    %vm889 = vmor %vm887, %vm888
    %v890 = vsel %vm889, %v882, %v886
    %v891 = vand.u32 2147483647, %v836
    %vm892 = vcmp.eq.f32.partialorder %v891, 8.507059e+37
    %v893 = vand.u32 %v836, 2147483648
    %v894 = vor.u32 1.1754944e-38, %v893
    %v895 = vsel %vm892, %v894, %v890
    %v896 = vmul.f32 1.0, %v895
    %v897 = vtanh.pop %v819
    %v898 = vtanh.pop %v820
    %v899 = vmul.f32 %v851, %v897
    %v900 = vmul.f32 %v866, %v898
    %v901 = vtanh.pop %v899
    %v902 = vtanh.pop %v900
    %v903 = vmul.f32 %v881, %v901
    %v904 = vmul.f32 %v896, %v902
    %v905 = vld [vmem:[#allocation2 + $0x40] sm:$0xff]
    %v906 = vld [vmem:[#allocation2 + $0x48] sm:$0xff]
    %v907 = vld [vmem:[#allocation2 + $0x50] sm:$0xff]
    %v908 = vld [vmem:[#allocation2 + $0x58] sm:$0xff]
    %v909 = vld [vmem:[#allocation2 + $0x60] sm:$0xff]
    %v910 = vld [vmem:[#allocation2 + $0x68] sm:$0xff]
    %v911 = vld [vmem:[#allocation2 + $0x70] sm:$0xff]
    %v912 = vld [vmem:[#allocation2 + $0x78] sm:$0xff]
    %913 = vmatpush.msra.mxu0 %v679
    %914 = vmatpush.msra.mxu0 %v671
    %915 = vmatpush.msra.mxu0 %v663
    %916 = vmatpush.msra.mxu0 %v655
    %917 = vmatpush.msra.mxu0 %v647
    %918 = vmatpush.msra.mxu0 %v639
    %919 = vmatpush.msra.mxu0 %v631
    %920 = vmatpush.msra.mxu0 %v623
    %921 = vmatpush.msra.mxu0 %v615
    %922 = vmatpush.msra.mxu0 %v607
    %923 = vmatpush.msra.mxu0 %v599
    %924 = vmatpush.msra.mxu0 %v591
    %925 = vmatpush.msra.mxu0 %v583
    %926 = vmatpush.msra.mxu0 %v575
    %927 = vmatpush.msra.mxu0 %v567
    %928 = vmatpush.msra.mxu0 %v559
    %929 = vmatmul.f32.gmra.mxu0 %v903
    %v930 = vpop.f32.mrf.mxu0
    %v931 = vadd.f32 0.0, %v930
    %932 = vdwg.mxu0
    %933 = vmatpush.msra.mxu0 %v807
    %934 = vmatpush.msra.mxu0 %v799
    %935 = vmatpush.msra.mxu0 %v791
    %936 = vmatpush.msra.mxu0 %v783
    %937 = vmatpush.msra.mxu0 %v775
    %938 = vmatpush.msra.mxu0 %v767
    %939 = vmatpush.msra.mxu0 %v759
    %940 = vmatpush.msra.mxu0 %v751
    %941 = vmatpush.msra.mxu0 %v743
    %942 = vmatpush.msra.mxu0 %v735
    %943 = vmatpush.msra.mxu0 %v727
    %944 = vmatpush.msra.mxu0 %v719
    %945 = vmatpush.msra.mxu0 %v711
    %946 = vmatpush.msra.mxu0 %v703
    %947 = vmatpush.msra.mxu0 %v695
    %948 = vmatpush.msra.mxu0 %v687
    %949 = vmatmul.f32.gmra.mxu0 %v904
    %v950 = vpop.f32.mrf.mxu0
    %v951 = vadd.f32 %v931, %v950
    %952 = vdwg.mxu0
    %953 = vmatpush.msra.mxu0 %v680
    %954 = vmatpush.msra.mxu0 %v672
    %955 = vmatpush.msra.mxu0 %v664
    %956 = vmatpush.msra.mxu0 %v656
    %957 = vmatpush.msra.mxu0 %v648
    %958 = vmatpush.msra.mxu0 %v640
    %959 = vmatpush.msra.mxu0 %v632
    %960 = vmatpush.msra.mxu0 %v624
    %961 = vmatpush.msra.mxu0 %v616
    %962 = vmatpush.msra.mxu0 %v608
    %963 = vmatpush.msra.mxu0 %v600
    %964 = vmatpush.msra.mxu0 %v592
    %965 = vmatpush.msra.mxu0 %v584
    %966 = vmatpush.msra.mxu0 %v576
    %967 = vmatpush.msra.mxu0 %v568
    %968 = vmatpush.msra.mxu0 %v560
    %969 = vmatmul.f32.gmra.mxu0 %v903
    %v970 = vpop.f32.mrf.mxu0
    %v971 = vadd.f32 0.0, %v970
    %972 = vdwg.mxu0
    %973 = vmatpush.msra.mxu0 %v808
    %974 = vmatpush.msra.mxu0 %v800
    %975 = vmatpush.msra.mxu0 %v792
    %976 = vmatpush.msra.mxu0 %v784
    %977 = vmatpush.msra.mxu0 %v776
    %978 = vmatpush.msra.mxu0 %v768
    %979 = vmatpush.msra.mxu0 %v760
    %980 = vmatpush.msra.mxu0 %v752
    %981 = vmatpush.msra.mxu0 %v744
    %982 = vmatpush.msra.mxu0 %v736
    %983 = vmatpush.msra.mxu0 %v728
    %984 = vmatpush.msra.mxu0 %v720
    %985 = vmatpush.msra.mxu0 %v712
    %986 = vmatpush.msra.mxu0 %v704
    %987 = vmatpush.msra.mxu0 %v696
    %988 = vmatpush.msra.mxu0 %v688
    %989 = vmatmul.f32.gmra.mxu0 %v904
    %v990 = vpop.f32.mrf.mxu0
    %v991 = vadd.f32 %v971, %v990
    %992 = vdwg.mxu0
    %993 = vmatpush.msra.mxu0 %v681
    %994 = vmatpush.msra.mxu0 %v673
    %995 = vmatpush.msra.mxu0 %v665
    %996 = vmatpush.msra.mxu0 %v657
    %997 = vmatpush.msra.mxu0 %v649
    %998 = vmatpush.msra.mxu0 %v641
    %999 = vmatpush.msra.mxu0 %v633
    %1000 = vmatpush.msra.mxu0 %v625
    %1001 = vmatpush.msra.mxu0 %v617
    %1002 = vmatpush.msra.mxu0 %v609
    %1003 = vmatpush.msra.mxu0 %v601
    %1004 = vmatpush.msra.mxu0 %v593
    %1005 = vmatpush.msra.mxu0 %v585
    %1006 = vmatpush.msra.mxu0 %v577
    %1007 = vmatpush.msra.mxu0 %v569
    %1008 = vmatpush.msra.mxu0 %v561
    %1009 = vmatmul.f32.gmra.mxu0 %v903
    %v1010 = vpop.f32.mrf.mxu0
    %v1011 = vadd.f32 0.0, %v1010
    %1012 = vdwg.mxu0
    %1013 = vmatpush.msra.mxu0 %v809
    %1014 = vmatpush.msra.mxu0 %v801
    %1015 = vmatpush.msra.mxu0 %v793
    %1016 = vmatpush.msra.mxu0 %v785
    %1017 = vmatpush.msra.mxu0 %v777
    %1018 = vmatpush.msra.mxu0 %v769
    %1019 = vmatpush.msra.mxu0 %v761
    %1020 = vmatpush.msra.mxu0 %v753
    %1021 = vmatpush.msra.mxu0 %v745
    %1022 = vmatpush.msra.mxu0 %v737
    %1023 = vmatpush.msra.mxu0 %v729
    %1024 = vmatpush.msra.mxu0 %v721
    %1025 = vmatpush.msra.mxu0 %v713
    %1026 = vmatpush.msra.mxu0 %v705
    %1027 = vmatpush.msra.mxu0 %v697
    %1028 = vmatpush.msra.mxu0 %v689
    %1029 = vmatmul.f32.gmra.mxu0 %v904
    %v1030 = vpop.f32.mrf.mxu0
    %v1031 = vadd.f32 %v1011, %v1030
    %1032 = vdwg.mxu0
    %1033 = vmatpush.msra.mxu0 %v682
    %1034 = vmatpush.msra.mxu0 %v674
    %1035 = vmatpush.msra.mxu0 %v666
    %1036 = vmatpush.msra.mxu0 %v658
    %1037 = vmatpush.msra.mxu0 %v650
    %1038 = vmatpush.msra.mxu0 %v642
    %1039 = vmatpush.msra.mxu0 %v634
    %1040 = vmatpush.msra.mxu0 %v626
    %1041 = vmatpush.msra.mxu0 %v618
    %1042 = vmatpush.msra.mxu0 %v610
    %1043 = vmatpush.msra.mxu0 %v602
    %1044 = vmatpush.msra.mxu0 %v594
    %1045 = vmatpush.msra.mxu0 %v586
    %1046 = vmatpush.msra.mxu0 %v578
    %1047 = vmatpush.msra.mxu0 %v570
    %1048 = vmatpush.msra.mxu0 %v562
    %1049 = vmatmul.f32.gmra.mxu0 %v903
    %v1050 = vpop.f32.mrf.mxu0
    %v1051 = vadd.f32 0.0, %v1050
    %1052 = vdwg.mxu0
    %1053 = vmatpush.msra.mxu0 %v810
    %1054 = vmatpush.msra.mxu0 %v802
    %1055 = vmatpush.msra.mxu0 %v794
    %1056 = vmatpush.msra.mxu0 %v786
    %1057 = vmatpush.msra.mxu0 %v778
    %1058 = vmatpush.msra.mxu0 %v770
    %1059 = vmatpush.msra.mxu0 %v762
    %1060 = vmatpush.msra.mxu0 %v754
    %1061 = vmatpush.msra.mxu0 %v746
    %1062 = vmatpush.msra.mxu0 %v738
    %1063 = vmatpush.msra.mxu0 %v730
    %1064 = vmatpush.msra.mxu0 %v722
    %1065 = vmatpush.msra.mxu0 %v714
    %1066 = vmatpush.msra.mxu0 %v706
    %1067 = vmatpush.msra.mxu0 %v698
    %1068 = vmatpush.msra.mxu0 %v690
    %1069 = vmatmul.f32.gmra.mxu0 %v904
    %v1070 = vpop.f32.mrf.mxu0
    %v1071 = vadd.f32 %v1051, %v1070
    %1072 = vdwg.mxu0
    %1073 = vmatpush.msra.mxu0 %v683
    %1074 = vmatpush.msra.mxu0 %v675
    %1075 = vmatpush.msra.mxu0 %v667
    %1076 = vmatpush.msra.mxu0 %v659
    %1077 = vmatpush.msra.mxu0 %v651
    %1078 = vmatpush.msra.mxu0 %v643
    %1079 = vmatpush.msra.mxu0 %v635
    %1080 = vmatpush.msra.mxu0 %v627
    %1081 = vmatpush.msra.mxu0 %v619
    %1082 = vmatpush.msra.mxu0 %v611
    %1083 = vmatpush.msra.mxu0 %v603
    %1084 = vmatpush.msra.mxu0 %v595
    %1085 = vmatpush.msra.mxu0 %v587
    %1086 = vmatpush.msra.mxu0 %v579
    %1087 = vmatpush.msra.mxu0 %v571
    %1088 = vmatpush.msra.mxu0 %v563
    %1089 = vmatmul.f32.gmra.mxu0 %v903
    %v1090 = vpop.f32.mrf.mxu0
    %v1091 = vadd.f32 0.0, %v1090
    %1092 = vdwg.mxu0
    %1093 = vmatpush.msra.mxu0 %v811
    %1094 = vmatpush.msra.mxu0 %v803
    %1095 = vmatpush.msra.mxu0 %v795
    %1096 = vmatpush.msra.mxu0 %v787
    %1097 = vmatpush.msra.mxu0 %v779
    %1098 = vmatpush.msra.mxu0 %v771
    %1099 = vmatpush.msra.mxu0 %v763
    %1100 = vmatpush.msra.mxu0 %v755
    %1101 = vmatpush.msra.mxu0 %v747
    %1102 = vmatpush.msra.mxu0 %v739
    %1103 = vmatpush.msra.mxu0 %v731
    %1104 = vmatpush.msra.mxu0 %v723
    %1105 = vmatpush.msra.mxu0 %v715
    %1106 = vmatpush.msra.mxu0 %v707
    %1107 = vmatpush.msra.mxu0 %v699
    %1108 = vmatpush.msra.mxu0 %v691
    %1109 = vmatmul.f32.gmra.mxu0 %v904
    %v1110 = vpop.f32.mrf.mxu0
    %v1111 = vadd.f32 %v1091, %v1110
    %1112 = vdwg.mxu0
    %1113 = vmatpush.msra.mxu0 %v684
    %1114 = vmatpush.msra.mxu0 %v676
    %1115 = vmatpush.msra.mxu0 %v668
    %1116 = vmatpush.msra.mxu0 %v660
    %1117 = vmatpush.msra.mxu0 %v652
    %1118 = vmatpush.msra.mxu0 %v644
    %1119 = vmatpush.msra.mxu0 %v636
    %1120 = vmatpush.msra.mxu0 %v628
    %1121 = vmatpush.msra.mxu0 %v620
    %1122 = vmatpush.msra.mxu0 %v612
    %1123 = vmatpush.msra.mxu0 %v604
    %1124 = vmatpush.msra.mxu0 %v596
    %1125 = vmatpush.msra.mxu0 %v588
    %1126 = vmatpush.msra.mxu0 %v580
    %1127 = vmatpush.msra.mxu0 %v572
    %1128 = vmatpush.msra.mxu0 %v564
    %1129 = vmatmul.f32.gmra.mxu0 %v903
    %v1130 = vpop.f32.mrf.mxu0
    %v1131 = vadd.f32 0.0, %v1130
    %1132 = vdwg.mxu0
    %1133 = vmatpush.msra.mxu0 %v812
    %1134 = vmatpush.msra.mxu0 %v804
    %1135 = vmatpush.msra.mxu0 %v796
    %1136 = vmatpush.msra.mxu0 %v788
    %1137 = vmatpush.msra.mxu0 %v780
    %1138 = vmatpush.msra.mxu0 %v772
    %1139 = vmatpush.msra.mxu0 %v764
    %1140 = vmatpush.msra.mxu0 %v756
    %1141 = vmatpush.msra.mxu0 %v748
    %1142 = vmatpush.msra.mxu0 %v740
    %1143 = vmatpush.msra.mxu0 %v732
    %1144 = vmatpush.msra.mxu0 %v724
    %1145 = vmatpush.msra.mxu0 %v716
    %1146 = vmatpush.msra.mxu0 %v708
    %1147 = vmatpush.msra.mxu0 %v700
    %1148 = vmatpush.msra.mxu0 %v692
    %1149 = vmatmul.f32.gmra.mxu0 %v904
    %v1150 = vpop.f32.mrf.mxu0
    %v1151 = vadd.f32 %v1131, %v1150
    %1152 = vdwg.mxu0
    %1153 = vmatpush.msra.mxu0 %v685
    %1154 = vmatpush.msra.mxu0 %v677
    %1155 = vmatpush.msra.mxu0 %v669
    %1156 = vmatpush.msra.mxu0 %v661
    %1157 = vmatpush.msra.mxu0 %v653
    %1158 = vmatpush.msra.mxu0 %v645
    %1159 = vmatpush.msra.mxu0 %v637
    %1160 = vmatpush.msra.mxu0 %v629
    %1161 = vmatpush.msra.mxu0 %v621
    %1162 = vmatpush.msra.mxu0 %v613
    %1163 = vmatpush.msra.mxu0 %v605
    %1164 = vmatpush.msra.mxu0 %v597
    %1165 = vmatpush.msra.mxu0 %v589
    %1166 = vmatpush.msra.mxu0 %v581
    %1167 = vmatpush.msra.mxu0 %v573
    %1168 = vmatpush.msra.mxu0 %v565
    %1169 = vmatmul.f32.gmra.mxu0 %v903
    %v1170 = vpop.f32.mrf.mxu0
    %v1171 = vadd.f32 0.0, %v1170
    %1172 = vdwg.mxu0
    %1173 = vmatpush.msra.mxu0 %v813
    %1174 = vmatpush.msra.mxu0 %v805
    %1175 = vmatpush.msra.mxu0 %v797
    %1176 = vmatpush.msra.mxu0 %v789
    %1177 = vmatpush.msra.mxu0 %v781
    %1178 = vmatpush.msra.mxu0 %v773
    %1179 = vmatpush.msra.mxu0 %v765
    %1180 = vmatpush.msra.mxu0 %v757
    %1181 = vmatpush.msra.mxu0 %v749
    %1182 = vmatpush.msra.mxu0 %v741
    %1183 = vmatpush.msra.mxu0 %v733
    %1184 = vmatpush.msra.mxu0 %v725
    %1185 = vmatpush.msra.mxu0 %v717
    %1186 = vmatpush.msra.mxu0 %v709
    %1187 = vmatpush.msra.mxu0 %v701
    %1188 = vmatpush.msra.mxu0 %v693
    %1189 = vmatmul.f32.gmra.mxu0 %v904
    %v1190 = vpop.f32.mrf.mxu0
    %v1191 = vadd.f32 %v1171, %v1190
    %1192 = vdwg.mxu0
    %1193 = vmatpush.msra.mxu0 %v686
    %1194 = vmatpush.msra.mxu0 %v678
    %1195 = vmatpush.msra.mxu0 %v670
    %1196 = vmatpush.msra.mxu0 %v662
    %1197 = vmatpush.msra.mxu0 %v654
    %1198 = vmatpush.msra.mxu0 %v646
    %1199 = vmatpush.msra.mxu0 %v638
    %1200 = vmatpush.msra.mxu0 %v630
    %1201 = vmatpush.msra.mxu0 %v622
    %1202 = vmatpush.msra.mxu0 %v614
    %1203 = vmatpush.msra.mxu0 %v606
    %1204 = vmatpush.msra.mxu0 %v598
    %1205 = vmatpush.msra.mxu0 %v590
    %1206 = vmatpush.msra.mxu0 %v582
    %1207 = vmatpush.msra.mxu0 %v574
    %1208 = vmatpush.msra.mxu0 %v566
    %1209 = vmatmul.f32.gmra.mxu0 %v903
    %v1210 = vpop.f32.mrf.mxu0
    %v1211 = vadd.f32 0.0, %v1210
    %1212 = vdwg.mxu0
    %1213 = vmatpush.msra.mxu0 %v814
    %1214 = vmatpush.msra.mxu0 %v806
    %1215 = vmatpush.msra.mxu0 %v798
    %1216 = vmatpush.msra.mxu0 %v790
    %1217 = vmatpush.msra.mxu0 %v782
    %1218 = vmatpush.msra.mxu0 %v774
    %1219 = vmatpush.msra.mxu0 %v766
    %1220 = vmatpush.msra.mxu0 %v758
    %1221 = vmatpush.msra.mxu0 %v750
    %1222 = vmatpush.msra.mxu0 %v742
    %1223 = vmatpush.msra.mxu0 %v734
    %1224 = vmatpush.msra.mxu0 %v726
    %1225 = vmatpush.msra.mxu0 %v718
    %1226 = vmatpush.msra.mxu0 %v710
    %1227 = vmatpush.msra.mxu0 %v702
    %1228 = vmatpush.msra.mxu0 %v694
    %1229 = vmatmul.f32.gmra.mxu0 %v904
    %v1230 = vpop.f32.mrf.mxu0
    %v1231 = vadd.f32 %v1211, %v1230
    %1232 = vdwg.mxu0
    %v1233 = vadd.f32 %v905, %v951
    %v1234 = vadd.f32 %v906, %v991
    %v1235 = vadd.f32 %v907, %v1031
    %v1236 = vadd.f32 %v908, %v1071
    %v1237 = vadd.f32 %v909, %v1111
    %v1238 = vadd.f32 %v910, %v1151
    %v1239 = vadd.f32 %v911, %v1191
    %v1240 = vadd.f32 %v912, %v1231
    %v1241 = vxor.u32 %v1233, 2147483648
    %v1242 = vxor.u32 %v1234, 2147483648
    %v1243 = vxor.u32 %v1235, 2147483648
    %v1244 = vxor.u32 %v1236, 2147483648
    %v1245 = vxor.u32 %v1237, 2147483648
    %v1246 = vxor.u32 %v1238, 2147483648
    %v1247 = vmul.f32 %v1241, 1.442695
    %v1248 = vpow.pop %v1247
    %v1249 = vmul.f32 %v1242, 1.442695
    %v1250 = vpow.pop %v1249
    %v1251 = vmul.f32 %v1243, 1.442695
    %v1252 = vpow.pop %v1251
    %v1253 = vmul.f32 %v1244, 1.442695
    %v1254 = vpow.pop %v1253
    %v1255 = vmul.f32 %v1245, 1.442695
    %v1256 = vpow.pop %v1255
    %v1257 = vmul.f32 %v1246, 1.442695
    %v1258 = vpow.pop %v1257
    %v1259 = vadd.f32 %v1248, 1.0
    %v1260 = vadd.f32 %v1250, 1.0
    %v1261 = vadd.f32 %v1252, 1.0
    %v1262 = vadd.f32 %v1254, 1.0
    %v1263 = vadd.f32 %v1256, 1.0
    %v1264 = vadd.f32 %v1258, 1.0
    %v1265 = vrcp.pop %v1259
    %v1266 = vmul.f32 %v1259, %v1265
    %v1267 = vsub.f32 1.0, %v1266
    %v1268 = vmul.f32 %v1265, %v1267
    %v1269 = vadd.f32 %v1265, %v1268
    %vm1270 = vweird.f32 %v1259
    %vm1271 = vweird.f32 %v1265
    %vm1272 = vmor %vm1270, %vm1271
    %v1273 = vsel %vm1272, %v1265, %v1269
    %v1274 = vand.u32 2147483647, %v1259
    %vm1275 = vcmp.eq.f32.partialorder %v1274, 8.507059e+37
    %v1276 = vand.u32 %v1259, 2147483648
    %v1277 = vor.u32 1.1754944e-38, %v1276
    %v1278 = vsel %vm1275, %v1277, %v1273
    %v1279 = vmul.f32 1.0, %v1278
    %v1280 = vrcp.pop %v1260
    %v1281 = vmul.f32 %v1260, %v1280
    %v1282 = vsub.f32 1.0, %v1281
    %v1283 = vmul.f32 %v1280, %v1282
    %v1284 = vadd.f32 %v1280, %v1283
    %vm1285 = vweird.f32 %v1260
    %vm1286 = vweird.f32 %v1280
    %vm1287 = vmor %vm1285, %vm1286
    %v1288 = vsel %vm1287, %v1280, %v1284
    %v1289 = vand.u32 2147483647, %v1260
    %vm1290 = vcmp.eq.f32.partialorder %v1289, 8.507059e+37
    %v1291 = vand.u32 %v1260, 2147483648
    %v1292 = vor.u32 1.1754944e-38, %v1291
    %v1293 = vsel %vm1290, %v1292, %v1288
    %v1294 = vmul.f32 1.0, %v1293
    %v1295 = vrcp.pop %v1261
    %v1296 = vmul.f32 %v1261, %v1295
    %v1297 = vsub.f32 1.0, %v1296
    %v1298 = vmul.f32 %v1295, %v1297
    %v1299 = vadd.f32 %v1295, %v1298
    %vm1300 = vweird.f32 %v1261
    %vm1301 = vweird.f32 %v1295
    %vm1302 = vmor %vm1300, %vm1301
    %v1303 = vsel %vm1302, %v1295, %v1299
    %v1304 = vand.u32 2147483647, %v1261
    %vm1305 = vcmp.eq.f32.partialorder %v1304, 8.507059e+37
    %v1306 = vand.u32 %v1261, 2147483648
    %v1307 = vor.u32 1.1754944e-38, %v1306
    %v1308 = vsel %vm1305, %v1307, %v1303
    %v1309 = vmul.f32 1.0, %v1308
    %v1310 = vrcp.pop %v1262
    %v1311 = vmul.f32 %v1262, %v1310
    %v1312 = vsub.f32 1.0, %v1311
    %v1313 = vmul.f32 %v1310, %v1312
    %v1314 = vadd.f32 %v1310, %v1313
    %vm1315 = vweird.f32 %v1262
    %vm1316 = vweird.f32 %v1310
    %vm1317 = vmor %vm1315, %vm1316
    %v1318 = vsel %vm1317, %v1310, %v1314
    %v1319 = vand.u32 2147483647, %v1262
    %vm1320 = vcmp.eq.f32.partialorder %v1319, 8.507059e+37
    %v1321 = vand.u32 %v1262, 2147483648
    %v1322 = vor.u32 1.1754944e-38, %v1321
    %v1323 = vsel %vm1320, %v1322, %v1318
    %v1324 = vmul.f32 1.0, %v1323
    %v1325 = vrcp.pop %v1263
    %v1326 = vmul.f32 %v1263, %v1325
    %v1327 = vsub.f32 1.0, %v1326
    %v1328 = vmul.f32 %v1325, %v1327
    %v1329 = vadd.f32 %v1325, %v1328
    %vm1330 = vweird.f32 %v1263
    %vm1331 = vweird.f32 %v1325
    %vm1332 = vmor %vm1330, %vm1331
    %v1333 = vsel %vm1332, %v1325, %v1329
    %v1334 = vand.u32 2147483647, %v1263
    %vm1335 = vcmp.eq.f32.partialorder %v1334, 8.507059e+37
    %v1336 = vand.u32 %v1263, 2147483648
    %v1337 = vor.u32 1.1754944e-38, %v1336
    %v1338 = vsel %vm1335, %v1337, %v1333
    %v1339 = vmul.f32 1.0, %v1338
    %v1340 = vrcp.pop %v1264
    %v1341 = vmul.f32 %v1264, %v1340
    %v1342 = vsub.f32 1.0, %v1341
    %v1343 = vmul.f32 %v1340, %v1342
    %v1344 = vadd.f32 %v1340, %v1343
    %vm1345 = vweird.f32 %v1264
    %vm1346 = vweird.f32 %v1340
    %vm1347 = vmor %vm1345, %vm1346
    %v1348 = vsel %vm1347, %v1340, %v1344
    %v1349 = vand.u32 2147483647, %v1264
    %vm1350 = vcmp.eq.f32.partialorder %v1349, 8.507059e+37
    %v1351 = vand.u32 %v1264, 2147483648
    %v1352 = vor.u32 1.1754944e-38, %v1351
    %v1353 = vsel %vm1350, %v1352, %v1348
    %v1354 = vmul.f32 1.0, %v1353
    %v1355 = vtanh.pop %v1239
    %v1356 = vtanh.pop %v1240
    %v1357 = vmul.f32 %v1309, %v899
    %v1358 = vmul.f32 %v1324, %v900
    %v1359 = vmul.f32 %v1279, %v1355
    %v1360 = vmul.f32 %v1294, %v1356
    %v1361 = vadd.f32 %v1357, %v1359
    %v1362 = vadd.f32 %v1358, %v1360
    %v1363 = vtanh.pop %v1361
    %v1364 = vtanh.pop %v1362
    %v1365 = vmul.f32 %v1339, %v1363
    %v1366 = vmul.f32 %v1354, %v1364
    %v1367 = vld [vmem:[#allocation2 + $0x80] sm:$0xff]
    %v1368 = vld [vmem:[#allocation2 + $0x88] sm:$0xff]
    %v1369 = vld [vmem:[#allocation2 + $0x90] sm:$0xff]
    %v1370 = vld [vmem:[#allocation2 + $0x98] sm:$0xff]
    %v1371 = vld [vmem:[#allocation2 + $0xa0] sm:$0xff]
    %v1372 = vld [vmem:[#allocation2 + $0xa8] sm:$0xff]
    %v1373 = vld [vmem:[#allocation2 + $0xb0] sm:$0xff]
    %v1374 = vld [vmem:[#allocation2 + $0xb8] sm:$0xff]
    %1375 = vmatpush.msra.mxu0 %v679
    %1376 = vmatpush.msra.mxu0 %v671
    %1377 = vmatpush.msra.mxu0 %v663
    %1378 = vmatpush.msra.mxu0 %v655
    %1379 = vmatpush.msra.mxu0 %v647
    %1380 = vmatpush.msra.mxu0 %v639
    %1381 = vmatpush.msra.mxu0 %v631
    %1382 = vmatpush.msra.mxu0 %v623
    %1383 = vmatpush.msra.mxu0 %v615
    %1384 = vmatpush.msra.mxu0 %v607
    %1385 = vmatpush.msra.mxu0 %v599
    %1386 = vmatpush.msra.mxu0 %v591
    %1387 = vmatpush.msra.mxu0 %v583
    %1388 = vmatpush.msra.mxu0 %v575
    %1389 = vmatpush.msra.mxu0 %v567
    %1390 = vmatpush.msra.mxu0 %v559
    %1391 = vmatmul.f32.gmra.mxu0 %v1365
    %v1392 = vpop.f32.mrf.mxu0
    %v1393 = vadd.f32 0.0, %v1392
    %1394 = vdwg.mxu0
    %1395 = vmatpush.msra.mxu0 %v807
    %1396 = vmatpush.msra.mxu0 %v799
    %1397 = vmatpush.msra.mxu0 %v791
    %1398 = vmatpush.msra.mxu0 %v783
    %1399 = vmatpush.msra.mxu0 %v775
    %1400 = vmatpush.msra.mxu0 %v767
    %1401 = vmatpush.msra.mxu0 %v759
    %1402 = vmatpush.msra.mxu0 %v751
    %1403 = vmatpush.msra.mxu0 %v743
    %1404 = vmatpush.msra.mxu0 %v735
    %1405 = vmatpush.msra.mxu0 %v727
    %1406 = vmatpush.msra.mxu0 %v719
    %1407 = vmatpush.msra.mxu0 %v711
    %1408 = vmatpush.msra.mxu0 %v703
    %1409 = vmatpush.msra.mxu0 %v695
    %1410 = vmatpush.msra.mxu0 %v687
    %1411 = vmatmul.f32.gmra.mxu0 %v1366
    %v1412 = vpop.f32.mrf.mxu0
    %v1413 = vadd.f32 %v1393, %v1412
    %1414 = vdwg.mxu0
    %1415 = vmatpush.msra.mxu0 %v680
    %1416 = vmatpush.msra.mxu0 %v672
    %1417 = vmatpush.msra.mxu0 %v664
    %1418 = vmatpush.msra.mxu0 %v656
    %1419 = vmatpush.msra.mxu0 %v648
    %1420 = vmatpush.msra.mxu0 %v640
    %1421 = vmatpush.msra.mxu0 %v632
    %1422 = vmatpush.msra.mxu0 %v624
    %1423 = vmatpush.msra.mxu0 %v616
    %1424 = vmatpush.msra.mxu0 %v608
    %1425 = vmatpush.msra.mxu0 %v600
    %1426 = vmatpush.msra.mxu0 %v592
    %1427 = vmatpush.msra.mxu0 %v584
    %1428 = vmatpush.msra.mxu0 %v576
    %1429 = vmatpush.msra.mxu0 %v568
    %1430 = vmatpush.msra.mxu0 %v560
    %1431 = vmatmul.f32.gmra.mxu0 %v1365
    %v1432 = vpop.f32.mrf.mxu0
    %v1433 = vadd.f32 0.0, %v1432
    %1434 = vdwg.mxu0
    %1435 = vmatpush.msra.mxu0 %v808
    %1436 = vmatpush.msra.mxu0 %v800
    %1437 = vmatpush.msra.mxu0 %v792
    %1438 = vmatpush.msra.mxu0 %v784
    %1439 = vmatpush.msra.mxu0 %v776
    %1440 = vmatpush.msra.mxu0 %v768
    %1441 = vmatpush.msra.mxu0 %v760
    %1442 = vmatpush.msra.mxu0 %v752
    %1443 = vmatpush.msra.mxu0 %v744
    %1444 = vmatpush.msra.mxu0 %v736
    %1445 = vmatpush.msra.mxu0 %v728
    %1446 = vmatpush.msra.mxu0 %v720
    %1447 = vmatpush.msra.mxu0 %v712
    %1448 = vmatpush.msra.mxu0 %v704
    %1449 = vmatpush.msra.mxu0 %v696
    %1450 = vmatpush.msra.mxu0 %v688
    %1451 = vmatmul.f32.gmra.mxu0 %v1366
    %v1452 = vpop.f32.mrf.mxu0
    %v1453 = vadd.f32 %v1433, %v1452
    %1454 = vdwg.mxu0
    %1455 = vmatpush.msra.mxu0 %v681
    %1456 = vmatpush.msra.mxu0 %v673
    %1457 = vmatpush.msra.mxu0 %v665
    %1458 = vmatpush.msra.mxu0 %v657
    %1459 = vmatpush.msra.mxu0 %v649
    %1460 = vmatpush.msra.mxu0 %v641
    %1461 = vmatpush.msra.mxu0 %v633
    %1462 = vmatpush.msra.mxu0 %v625
    %1463 = vmatpush.msra.mxu0 %v617
    %1464 = vmatpush.msra.mxu0 %v609
    %1465 = vmatpush.msra.mxu0 %v601
    %1466 = vmatpush.msra.mxu0 %v593
    %1467 = vmatpush.msra.mxu0 %v585
    %1468 = vmatpush.msra.mxu0 %v577
    %1469 = vmatpush.msra.mxu0 %v569
    %1470 = vmatpush.msra.mxu0 %v561
    %1471 = vmatmul.f32.gmra.mxu0 %v1365
    %v1472 = vpop.f32.mrf.mxu0
    %v1473 = vadd.f32 0.0, %v1472
    %1474 = vdwg.mxu0
    %1475 = vmatpush.msra.mxu0 %v809
    %1476 = vmatpush.msra.mxu0 %v801
    %1477 = vmatpush.msra.mxu0 %v793
    %1478 = vmatpush.msra.mxu0 %v785
    %1479 = vmatpush.msra.mxu0 %v777
    %1480 = vmatpush.msra.mxu0 %v769
    %1481 = vmatpush.msra.mxu0 %v761
    %1482 = vmatpush.msra.mxu0 %v753
    %1483 = vmatpush.msra.mxu0 %v745
    %1484 = vmatpush.msra.mxu0 %v737
    %1485 = vmatpush.msra.mxu0 %v729
    %1486 = vmatpush.msra.mxu0 %v721
    %1487 = vmatpush.msra.mxu0 %v713
    %1488 = vmatpush.msra.mxu0 %v705
    %1489 = vmatpush.msra.mxu0 %v697
    %1490 = vmatpush.msra.mxu0 %v689
    %1491 = vmatmul.f32.gmra.mxu0 %v1366
    %v1492 = vpop.f32.mrf.mxu0
    %v1493 = vadd.f32 %v1473, %v1492
    %1494 = vdwg.mxu0
    %1495 = vmatpush.msra.mxu0 %v682
    %1496 = vmatpush.msra.mxu0 %v674
    %1497 = vmatpush.msra.mxu0 %v666
    %1498 = vmatpush.msra.mxu0 %v658
    %1499 = vmatpush.msra.mxu0 %v650
    %1500 = vmatpush.msra.mxu0 %v642
    %1501 = vmatpush.msra.mxu0 %v634
    %1502 = vmatpush.msra.mxu0 %v626
    %1503 = vmatpush.msra.mxu0 %v618
    %1504 = vmatpush.msra.mxu0 %v610
    %1505 = vmatpush.msra.mxu0 %v602
    %1506 = vmatpush.msra.mxu0 %v594
    %1507 = vmatpush.msra.mxu0 %v586
    %1508 = vmatpush.msra.mxu0 %v578
    %1509 = vmatpush.msra.mxu0 %v570
    %1510 = vmatpush.msra.mxu0 %v562
    %1511 = vmatmul.f32.gmra.mxu0 %v1365
    %v1512 = vpop.f32.mrf.mxu0
    %v1513 = vadd.f32 0.0, %v1512
    %1514 = vdwg.mxu0
    %1515 = vmatpush.msra.mxu0 %v810
    %1516 = vmatpush.msra.mxu0 %v802
    %1517 = vmatpush.msra.mxu0 %v794
    %1518 = vmatpush.msra.mxu0 %v786
    %1519 = vmatpush.msra.mxu0 %v778
    %1520 = vmatpush.msra.mxu0 %v770
    %1521 = vmatpush.msra.mxu0 %v762
    %1522 = vmatpush.msra.mxu0 %v754
    %1523 = vmatpush.msra.mxu0 %v746
    %1524 = vmatpush.msra.mxu0 %v738
    %1525 = vmatpush.msra.mxu0 %v730
    %1526 = vmatpush.msra.mxu0 %v722
    %1527 = vmatpush.msra.mxu0 %v714
    %1528 = vmatpush.msra.mxu0 %v706
    %1529 = vmatpush.msra.mxu0 %v698
    %1530 = vmatpush.msra.mxu0 %v690
    %1531 = vmatmul.f32.gmra.mxu0 %v1366
    %v1532 = vpop.f32.mrf.mxu0
    %v1533 = vadd.f32 %v1513, %v1532
    %1534 = vdwg.mxu0
    %1535 = vmatpush.msra.mxu0 %v683
    %1536 = vmatpush.msra.mxu0 %v675
    %1537 = vmatpush.msra.mxu0 %v667
    %1538 = vmatpush.msra.mxu0 %v659
    %1539 = vmatpush.msra.mxu0 %v651
    %1540 = vmatpush.msra.mxu0 %v643
    %1541 = vmatpush.msra.mxu0 %v635
    %1542 = vmatpush.msra.mxu0 %v627
    %1543 = vmatpush.msra.mxu0 %v619
    %1544 = vmatpush.msra.mxu0 %v611
    %1545 = vmatpush.msra.mxu0 %v603
    %1546 = vmatpush.msra.mxu0 %v595
    %1547 = vmatpush.msra.mxu0 %v587
    %1548 = vmatpush.msra.mxu0 %v579
    %1549 = vmatpush.msra.mxu0 %v571
    %1550 = vmatpush.msra.mxu0 %v563
    %1551 = vmatmul.f32.gmra.mxu0 %v1365
    %v1552 = vpop.f32.mrf.mxu0
    %v1553 = vadd.f32 0.0, %v1552
    %1554 = vdwg.mxu0
    %1555 = vmatpush.msra.mxu0 %v811
    %1556 = vmatpush.msra.mxu0 %v803
    %1557 = vmatpush.msra.mxu0 %v795
    %1558 = vmatpush.msra.mxu0 %v787
    %1559 = vmatpush.msra.mxu0 %v779
    %1560 = vmatpush.msra.mxu0 %v771
    %1561 = vmatpush.msra.mxu0 %v763
    %1562 = vmatpush.msra.mxu0 %v755
    %1563 = vmatpush.msra.mxu0 %v747
    %1564 = vmatpush.msra.mxu0 %v739
    %1565 = vmatpush.msra.mxu0 %v731
    %1566 = vmatpush.msra.mxu0 %v723
    %1567 = vmatpush.msra.mxu0 %v715
    %1568 = vmatpush.msra.mxu0 %v707
    %1569 = vmatpush.msra.mxu0 %v699
    %1570 = vmatpush.msra.mxu0 %v691
    %1571 = vmatmul.f32.gmra.mxu0 %v1366
    %v1572 = vpop.f32.mrf.mxu0
    %v1573 = vadd.f32 %v1553, %v1572
    %1574 = vdwg.mxu0
    %1575 = vmatpush.msra.mxu0 %v684
    %1576 = vmatpush.msra.mxu0 %v676
    %1577 = vmatpush.msra.mxu0 %v668
    %1578 = vmatpush.msra.mxu0 %v660
    %1579 = vmatpush.msra.mxu0 %v652
    %1580 = vmatpush.msra.mxu0 %v644
    %1581 = vmatpush.msra.mxu0 %v636
    %1582 = vmatpush.msra.mxu0 %v628
    %1583 = vmatpush.msra.mxu0 %v620
    %1584 = vmatpush.msra.mxu0 %v612
    %1585 = vmatpush.msra.mxu0 %v604
    %1586 = vmatpush.msra.mxu0 %v596
    %1587 = vmatpush.msra.mxu0 %v588
    %1588 = vmatpush.msra.mxu0 %v580
    %1589 = vmatpush.msra.mxu0 %v572
    %1590 = vmatpush.msra.mxu0 %v564
    %1591 = vmatmul.f32.gmra.mxu0 %v1365
    %v1592 = vpop.f32.mrf.mxu0
    %v1593 = vadd.f32 0.0, %v1592
    %1594 = vdwg.mxu0
    %1595 = vmatpush.msra.mxu0 %v812
    %1596 = vmatpush.msra.mxu0 %v804
    %1597 = vmatpush.msra.mxu0 %v796
    %1598 = vmatpush.msra.mxu0 %v788
    %1599 = vmatpush.msra.mxu0 %v780
    %1600 = vmatpush.msra.mxu0 %v772
    %1601 = vmatpush.msra.mxu0 %v764
    %1602 = vmatpush.msra.mxu0 %v756
    %1603 = vmatpush.msra.mxu0 %v748
    %1604 = vmatpush.msra.mxu0 %v740
    %1605 = vmatpush.msra.mxu0 %v732
    %1606 = vmatpush.msra.mxu0 %v724
    %1607 = vmatpush.msra.mxu0 %v716
    %1608 = vmatpush.msra.mxu0 %v708
    %1609 = vmatpush.msra.mxu0 %v700
    %1610 = vmatpush.msra.mxu0 %v692
    %1611 = vmatmul.f32.gmra.mxu0 %v1366
    %v1612 = vpop.f32.mrf.mxu0
    %v1613 = vadd.f32 %v1593, %v1612
    %1614 = vdwg.mxu0
    %1615 = vmatpush.msra.mxu0 %v685
    %1616 = vmatpush.msra.mxu0 %v677
    %1617 = vmatpush.msra.mxu0 %v669
    %1618 = vmatpush.msra.mxu0 %v661
    %1619 = vmatpush.msra.mxu0 %v653
    %1620 = vmatpush.msra.mxu0 %v645
    %1621 = vmatpush.msra.mxu0 %v637
    %1622 = vmatpush.msra.mxu0 %v629
    %1623 = vmatpush.msra.mxu0 %v621
    %1624 = vmatpush.msra.mxu0 %v613
    %1625 = vmatpush.msra.mxu0 %v605
    %1626 = vmatpush.msra.mxu0 %v597
    %1627 = vmatpush.msra.mxu0 %v589
    %1628 = vmatpush.msra.mxu0 %v581
    %1629 = vmatpush.msra.mxu0 %v573
    %1630 = vmatpush.msra.mxu0 %v565
    %1631 = vmatmul.f32.gmra.mxu0 %v1365
    %v1632 = vpop.f32.mrf.mxu0
    %v1633 = vadd.f32 0.0, %v1632
    %1634 = vdwg.mxu0
    %1635 = vmatpush.msra.mxu0 %v813
    %1636 = vmatpush.msra.mxu0 %v805
    %1637 = vmatpush.msra.mxu0 %v797
    %1638 = vmatpush.msra.mxu0 %v789
    %1639 = vmatpush.msra.mxu0 %v781
    %1640 = vmatpush.msra.mxu0 %v773
    %1641 = vmatpush.msra.mxu0 %v765
    %1642 = vmatpush.msra.mxu0 %v757
    %1643 = vmatpush.msra.mxu0 %v749
    %1644 = vmatpush.msra.mxu0 %v741
    %1645 = vmatpush.msra.mxu0 %v733
    %1646 = vmatpush.msra.mxu0 %v725
    %1647 = vmatpush.msra.mxu0 %v717
    %1648 = vmatpush.msra.mxu0 %v709
    %1649 = vmatpush.msra.mxu0 %v701
    %1650 = vmatpush.msra.mxu0 %v693
    %1651 = vmatmul.f32.gmra.mxu0 %v1366
    %v1652 = vpop.f32.mrf.mxu0
    %v1653 = vadd.f32 %v1633, %v1652
    %1654 = vdwg.mxu0
    %1655 = vmatpush.msra.mxu0 %v686
    %1656 = vmatpush.msra.mxu0 %v678
    %1657 = vmatpush.msra.mxu0 %v670
    %1658 = vmatpush.msra.mxu0 %v662
    %1659 = vmatpush.msra.mxu0 %v654
    %1660 = vmatpush.msra.mxu0 %v646
    %1661 = vmatpush.msra.mxu0 %v638
    %1662 = vmatpush.msra.mxu0 %v630
    %1663 = vmatpush.msra.mxu0 %v622
    %1664 = vmatpush.msra.mxu0 %v614
    %1665 = vmatpush.msra.mxu0 %v606
    %1666 = vmatpush.msra.mxu0 %v598
    %1667 = vmatpush.msra.mxu0 %v590
    %1668 = vmatpush.msra.mxu0 %v582
    %1669 = vmatpush.msra.mxu0 %v574
    %1670 = vmatpush.msra.mxu0 %v566
    %1671 = vmatmul.f32.gmra.mxu0 %v1365
    %v1672 = vpop.f32.mrf.mxu0
    %v1673 = vadd.f32 0.0, %v1672
    %1674 = vdwg.mxu0
    %1675 = vmatpush.msra.mxu0 %v814
    %1676 = vmatpush.msra.mxu0 %v806
    %1677 = vmatpush.msra.mxu0 %v798
    %1678 = vmatpush.msra.mxu0 %v790
    %1679 = vmatpush.msra.mxu0 %v782
    %1680 = vmatpush.msra.mxu0 %v774
    %1681 = vmatpush.msra.mxu0 %v766
    %1682 = vmatpush.msra.mxu0 %v758
    %1683 = vmatpush.msra.mxu0 %v750
    %1684 = vmatpush.msra.mxu0 %v742
    %1685 = vmatpush.msra.mxu0 %v734
    %1686 = vmatpush.msra.mxu0 %v726
    %1687 = vmatpush.msra.mxu0 %v718
    %1688 = vmatpush.msra.mxu0 %v710
    %1689 = vmatpush.msra.mxu0 %v702
    %1690 = vmatpush.msra.mxu0 %v694
    %1691 = vmatmul.f32.gmra.mxu0 %v1366
    %v1692 = vpop.f32.mrf.mxu0
    %v1693 = vadd.f32 %v1673, %v1692
    %1694 = vdwg.mxu0
    %v1695 = vadd.f32 %v1367, %v1413
    %v1696 = vadd.f32 %v1368, %v1453
    %v1697 = vadd.f32 %v1369, %v1493
    %v1698 = vadd.f32 %v1370, %v1533
    %v1699 = vadd.f32 %v1371, %v1573
    %v1700 = vadd.f32 %v1372, %v1613
    %v1701 = vadd.f32 %v1373, %v1653
    %v1702 = vadd.f32 %v1374, %v1693
    %v1703 = vxor.u32 %v1695, 2147483648
    %v1704 = vxor.u32 %v1696, 2147483648
    %v1705 = vxor.u32 %v1697, 2147483648
    %v1706 = vxor.u32 %v1698, 2147483648
    %v1707 = vxor.u32 %v1699, 2147483648
    %v1708 = vxor.u32 %v1700, 2147483648
    %v1709 = vmul.f32 %v1703, 1.442695
    %v1710 = vpow.pop %v1709
    %v1711 = vmul.f32 %v1704, 1.442695
    %v1712 = vpow.pop %v1711
    %v1713 = vmul.f32 %v1705, 1.442695
    %v1714 = vpow.pop %v1713
    %v1715 = vmul.f32 %v1706, 1.442695
    %v1716 = vpow.pop %v1715
    %v1717 = vmul.f32 %v1707, 1.442695
    %v1718 = vpow.pop %v1717
    %v1719 = vmul.f32 %v1708, 1.442695
    %v1720 = vpow.pop %v1719
    %v1721 = vadd.f32 %v1710, 1.0
    %v1722 = vadd.f32 %v1712, 1.0
    %v1723 = vadd.f32 %v1714, 1.0
    %v1724 = vadd.f32 %v1716, 1.0
    %v1725 = vadd.f32 %v1718, 1.0
    %v1726 = vadd.f32 %v1720, 1.0
    %v1727 = vrcp.pop %v1721
    %v1728 = vmul.f32 %v1721, %v1727
    %v1729 = vsub.f32 1.0, %v1728
    %v1730 = vmul.f32 %v1727, %v1729
    %v1731 = vadd.f32 %v1727, %v1730
    %vm1732 = vweird.f32 %v1721
    %vm1733 = vweird.f32 %v1727
    %vm1734 = vmor %vm1732, %vm1733
    %v1735 = vsel %vm1734, %v1727, %v1731
    %v1736 = vand.u32 2147483647, %v1721
    %vm1737 = vcmp.eq.f32.partialorder %v1736, 8.507059e+37
    %v1738 = vand.u32 %v1721, 2147483648
    %v1739 = vor.u32 1.1754944e-38, %v1738
    %v1740 = vsel %vm1737, %v1739, %v1735
    %v1741 = vmul.f32 1.0, %v1740
    %v1742 = vrcp.pop %v1722
    %v1743 = vmul.f32 %v1722, %v1742
    %v1744 = vsub.f32 1.0, %v1743
    %v1745 = vmul.f32 %v1742, %v1744
    %v1746 = vadd.f32 %v1742, %v1745
    %vm1747 = vweird.f32 %v1722
    %vm1748 = vweird.f32 %v1742
    %vm1749 = vmor %vm1747, %vm1748
    %v1750 = vsel %vm1749, %v1742, %v1746
    %v1751 = vand.u32 2147483647, %v1722
    %vm1752 = vcmp.eq.f32.partialorder %v1751, 8.507059e+37
    %v1753 = vand.u32 %v1722, 2147483648
    %v1754 = vor.u32 1.1754944e-38, %v1753
    %v1755 = vsel %vm1752, %v1754, %v1750
    %v1756 = vmul.f32 1.0, %v1755
    %v1757 = vrcp.pop %v1723
    %v1758 = vmul.f32 %v1723, %v1757
    %v1759 = vsub.f32 1.0, %v1758
    %v1760 = vmul.f32 %v1757, %v1759
    %v1761 = vadd.f32 %v1757, %v1760
    %vm1762 = vweird.f32 %v1723
    %vm1763 = vweird.f32 %v1757
    %vm1764 = vmor %vm1762, %vm1763
    %v1765 = vsel %vm1764, %v1757, %v1761
    %v1766 = vand.u32 2147483647, %v1723
    %vm1767 = vcmp.eq.f32.partialorder %v1766, 8.507059e+37
    %v1768 = vand.u32 %v1723, 2147483648
    %v1769 = vor.u32 1.1754944e-38, %v1768
    %v1770 = vsel %vm1767, %v1769, %v1765
    %v1771 = vmul.f32 1.0, %v1770
    %v1772 = vrcp.pop %v1724
    %v1773 = vmul.f32 %v1724, %v1772
    %v1774 = vsub.f32 1.0, %v1773
    %v1775 = vmul.f32 %v1772, %v1774
    %v1776 = vadd.f32 %v1772, %v1775
    %vm1777 = vweird.f32 %v1724
    %vm1778 = vweird.f32 %v1772
    %vm1779 = vmor %vm1777, %vm1778
    %v1780 = vsel %vm1779, %v1772, %v1776
    %v1781 = vand.u32 2147483647, %v1724
    %vm1782 = vcmp.eq.f32.partialorder %v1781, 8.507059e+37
    %v1783 = vand.u32 %v1724, 2147483648
    %v1784 = vor.u32 1.1754944e-38, %v1783
    %v1785 = vsel %vm1782, %v1784, %v1780
    %v1786 = vmul.f32 1.0, %v1785
    %v1787 = vrcp.pop %v1725
    %v1788 = vmul.f32 %v1725, %v1787
    %v1789 = vsub.f32 1.0, %v1788
    %v1790 = vmul.f32 %v1787, %v1789
    %v1791 = vadd.f32 %v1787, %v1790
    %vm1792 = vweird.f32 %v1725
    %vm1793 = vweird.f32 %v1787
    %vm1794 = vmor %vm1792, %vm1793
    %v1795 = vsel %vm1794, %v1787, %v1791
    %v1796 = vand.u32 2147483647, %v1725
    %vm1797 = vcmp.eq.f32.partialorder %v1796, 8.507059e+37
    %v1798 = vand.u32 %v1725, 2147483648
    %v1799 = vor.u32 1.1754944e-38, %v1798
    %v1800 = vsel %vm1797, %v1799, %v1795
    %v1801 = vmul.f32 1.0, %v1800
    %v1802 = vrcp.pop %v1726
    %v1803 = vmul.f32 %v1726, %v1802
    %v1804 = vsub.f32 1.0, %v1803
    %v1805 = vmul.f32 %v1802, %v1804
    %v1806 = vadd.f32 %v1802, %v1805
    %vm1807 = vweird.f32 %v1726
    %vm1808 = vweird.f32 %v1802
    %vm1809 = vmor %vm1807, %vm1808
    %v1810 = vsel %vm1809, %v1802, %v1806
    %v1811 = vand.u32 2147483647, %v1726
    %vm1812 = vcmp.eq.f32.partialorder %v1811, 8.507059e+37
    %v1813 = vand.u32 %v1726, 2147483648
    %v1814 = vor.u32 1.1754944e-38, %v1813
    %v1815 = vsel %vm1812, %v1814, %v1810
    %v1816 = vmul.f32 1.0, %v1815
    %v1817 = vtanh.pop %v1701
    %v1818 = vtanh.pop %v1702
    %v1819 = vmul.f32 %v1771, %v1361
    %v1820 = vmul.f32 %v1786, %v1362
    %v1821 = vmul.f32 %v1741, %v1817
    %v1822 = vmul.f32 %v1756, %v1818
    %v1823 = vadd.f32 %v1819, %v1821
    %v1824 = vadd.f32 %v1820, %v1822
    %v1825 = vtanh.pop %v1823
    %v1826 = vtanh.pop %v1824
    %v1827 = vmul.f32 %v1801, %v1825
    %v1828 = vmul.f32 %v1816, %v1826
    %v1829 = vld [vmem:[#allocation2 + $0xc0] sm:$0xff]
    %v1830 = vld [vmem:[#allocation2 + $0xc8] sm:$0xff]
    %v1831 = vld [vmem:[#allocation2 + $0xd0] sm:$0xff]
    %v1832 = vld [vmem:[#allocation2 + $0xd8] sm:$0xff]
    %v1833 = vld [vmem:[#allocation2 + $0xe0] sm:$0xff]
    %v1834 = vld [vmem:[#allocation2 + $0xe8] sm:$0xff]
    %v1835 = vld [vmem:[#allocation2 + $0xf0] sm:$0xff]
    %v1836 = vld [vmem:[#allocation2 + $0xf8] sm:$0xff]
    %1837 = vmatpush.msra.mxu0 %v679
    %1838 = vmatpush.msra.mxu0 %v671
    %1839 = vmatpush.msra.mxu0 %v663
    %1840 = vmatpush.msra.mxu0 %v655
    %1841 = vmatpush.msra.mxu0 %v647
    %1842 = vmatpush.msra.mxu0 %v639
    %1843 = vmatpush.msra.mxu0 %v631
    %1844 = vmatpush.msra.mxu0 %v623
    %1845 = vmatpush.msra.mxu0 %v615
    %1846 = vmatpush.msra.mxu0 %v607
    %1847 = vmatpush.msra.mxu0 %v599
    %1848 = vmatpush.msra.mxu0 %v591
    %1849 = vmatpush.msra.mxu0 %v583
    %1850 = vmatpush.msra.mxu0 %v575
    %1851 = vmatpush.msra.mxu0 %v567
    %1852 = vmatpush.msra.mxu0 %v559
    %1853 = vmatmul.f32.gmra.mxu0 %v1827
    %v1854 = vpop.f32.mrf.mxu0
    %v1855 = vadd.f32 0.0, %v1854
    %1856 = vdwg.mxu0
    %1857 = vmatpush.msra.mxu0 %v807
    %1858 = vmatpush.msra.mxu0 %v799
    %1859 = vmatpush.msra.mxu0 %v791
    %1860 = vmatpush.msra.mxu0 %v783
    %1861 = vmatpush.msra.mxu0 %v775
    %1862 = vmatpush.msra.mxu0 %v767
    %1863 = vmatpush.msra.mxu0 %v759
    %1864 = vmatpush.msra.mxu0 %v751
    %1865 = vmatpush.msra.mxu0 %v743
    %1866 = vmatpush.msra.mxu0 %v735
    %1867 = vmatpush.msra.mxu0 %v727
    %1868 = vmatpush.msra.mxu0 %v719
    %1869 = vmatpush.msra.mxu0 %v711
    %1870 = vmatpush.msra.mxu0 %v703
    %1871 = vmatpush.msra.mxu0 %v695
    %1872 = vmatpush.msra.mxu0 %v687
    %1873 = vmatmul.f32.gmra.mxu0 %v1828
    %v1874 = vpop.f32.mrf.mxu0
    %v1875 = vadd.f32 %v1855, %v1874
    %1876 = vdwg.mxu0
    %1877 = vmatpush.msra.mxu0 %v680
    %1878 = vmatpush.msra.mxu0 %v672
    %1879 = vmatpush.msra.mxu0 %v664
    %1880 = vmatpush.msra.mxu0 %v656
    %1881 = vmatpush.msra.mxu0 %v648
    %1882 = vmatpush.msra.mxu0 %v640
    %1883 = vmatpush.msra.mxu0 %v632
    %1884 = vmatpush.msra.mxu0 %v624
    %1885 = vmatpush.msra.mxu0 %v616
    %1886 = vmatpush.msra.mxu0 %v608
    %1887 = vmatpush.msra.mxu0 %v600
    %1888 = vmatpush.msra.mxu0 %v592
    %1889 = vmatpush.msra.mxu0 %v584
    %1890 = vmatpush.msra.mxu0 %v576
    %1891 = vmatpush.msra.mxu0 %v568
    %1892 = vmatpush.msra.mxu0 %v560
    %1893 = vmatmul.f32.gmra.mxu0 %v1827
    %v1894 = vpop.f32.mrf.mxu0
    %v1895 = vadd.f32 0.0, %v1894
    %1896 = vdwg.mxu0
    %1897 = vmatpush.msra.mxu0 %v808
    %1898 = vmatpush.msra.mxu0 %v800
    %1899 = vmatpush.msra.mxu0 %v792
    %1900 = vmatpush.msra.mxu0 %v784
    %1901 = vmatpush.msra.mxu0 %v776
    %1902 = vmatpush.msra.mxu0 %v768
    %1903 = vmatpush.msra.mxu0 %v760
    %1904 = vmatpush.msra.mxu0 %v752
    %1905 = vmatpush.msra.mxu0 %v744
    %1906 = vmatpush.msra.mxu0 %v736
    %1907 = vmatpush.msra.mxu0 %v728
    %1908 = vmatpush.msra.mxu0 %v720
    %1909 = vmatpush.msra.mxu0 %v712
    %1910 = vmatpush.msra.mxu0 %v704
    %1911 = vmatpush.msra.mxu0 %v696
    %1912 = vmatpush.msra.mxu0 %v688
    %1913 = vmatmul.f32.gmra.mxu0 %v1828
    %v1914 = vpop.f32.mrf.mxu0
    %v1915 = vadd.f32 %v1895, %v1914
    %1916 = vdwg.mxu0
    %1917 = vmatpush.msra.mxu0 %v681
    %1918 = vmatpush.msra.mxu0 %v673
    %1919 = vmatpush.msra.mxu0 %v665
    %1920 = vmatpush.msra.mxu0 %v657
    %1921 = vmatpush.msra.mxu0 %v649
    %1922 = vmatpush.msra.mxu0 %v641
    %1923 = vmatpush.msra.mxu0 %v633
    %1924 = vmatpush.msra.mxu0 %v625
    %1925 = vmatpush.msra.mxu0 %v617
    %1926 = vmatpush.msra.mxu0 %v609
    %1927 = vmatpush.msra.mxu0 %v601
    %1928 = vmatpush.msra.mxu0 %v593
    %1929 = vmatpush.msra.mxu0 %v585
    %1930 = vmatpush.msra.mxu0 %v577
    %1931 = vmatpush.msra.mxu0 %v569
    %1932 = vmatpush.msra.mxu0 %v561
    %1933 = vmatmul.f32.gmra.mxu0 %v1827
    %v1934 = vpop.f32.mrf.mxu0
    %v1935 = vadd.f32 0.0, %v1934
    %1936 = vdwg.mxu0
    %1937 = vmatpush.msra.mxu0 %v809
    %1938 = vmatpush.msra.mxu0 %v801
    %1939 = vmatpush.msra.mxu0 %v793
    %1940 = vmatpush.msra.mxu0 %v785
    %1941 = vmatpush.msra.mxu0 %v777
    %1942 = vmatpush.msra.mxu0 %v769
    %1943 = vmatpush.msra.mxu0 %v761
    %1944 = vmatpush.msra.mxu0 %v753
    %1945 = vmatpush.msra.mxu0 %v745
    %1946 = vmatpush.msra.mxu0 %v737
    %1947 = vmatpush.msra.mxu0 %v729
    %1948 = vmatpush.msra.mxu0 %v721
    %1949 = vmatpush.msra.mxu0 %v713
    %1950 = vmatpush.msra.mxu0 %v705
    %1951 = vmatpush.msra.mxu0 %v697
    %1952 = vmatpush.msra.mxu0 %v689
    %1953 = vmatmul.f32.gmra.mxu0 %v1828
    %v1954 = vpop.f32.mrf.mxu0
    %v1955 = vadd.f32 %v1935, %v1954
    %1956 = vdwg.mxu0
    %1957 = vmatpush.msra.mxu0 %v682
    %1958 = vmatpush.msra.mxu0 %v674
    %1959 = vmatpush.msra.mxu0 %v666
    %1960 = vmatpush.msra.mxu0 %v658
    %1961 = vmatpush.msra.mxu0 %v650
    %1962 = vmatpush.msra.mxu0 %v642
    %1963 = vmatpush.msra.mxu0 %v634
    %1964 = vmatpush.msra.mxu0 %v626
    %1965 = vmatpush.msra.mxu0 %v618
    %1966 = vmatpush.msra.mxu0 %v610
    %1967 = vmatpush.msra.mxu0 %v602
    %1968 = vmatpush.msra.mxu0 %v594
    %1969 = vmatpush.msra.mxu0 %v586
    %1970 = vmatpush.msra.mxu0 %v578
    %1971 = vmatpush.msra.mxu0 %v570
    %1972 = vmatpush.msra.mxu0 %v562
    %1973 = vmatmul.f32.gmra.mxu0 %v1827
    %v1974 = vpop.f32.mrf.mxu0
    %v1975 = vadd.f32 0.0, %v1974
    %1976 = vdwg.mxu0
    %1977 = vmatpush.msra.mxu0 %v810
    %1978 = vmatpush.msra.mxu0 %v802
    %1979 = vmatpush.msra.mxu0 %v794
    %1980 = vmatpush.msra.mxu0 %v786
    %1981 = vmatpush.msra.mxu0 %v778
    %1982 = vmatpush.msra.mxu0 %v770
    %1983 = vmatpush.msra.mxu0 %v762
    %1984 = vmatpush.msra.mxu0 %v754
    %1985 = vmatpush.msra.mxu0 %v746
    %1986 = vmatpush.msra.mxu0 %v738
    %1987 = vmatpush.msra.mxu0 %v730
    %1988 = vmatpush.msra.mxu0 %v722
    %1989 = vmatpush.msra.mxu0 %v714
    %1990 = vmatpush.msra.mxu0 %v706
    %1991 = vmatpush.msra.mxu0 %v698
    %1992 = vmatpush.msra.mxu0 %v690
    %1993 = vmatmul.f32.gmra.mxu0 %v1828
    %v1994 = vpop.f32.mrf.mxu0
    %v1995 = vadd.f32 %v1975, %v1994
    %1996 = vdwg.mxu0
    %1997 = vmatpush.msra.mxu0 %v683
    %1998 = vmatpush.msra.mxu0 %v675
    %1999 = vmatpush.msra.mxu0 %v667
    %2000 = vmatpush.msra.mxu0 %v659
    %2001 = vmatpush.msra.mxu0 %v651
    %2002 = vmatpush.msra.mxu0 %v643
    %2003 = vmatpush.msra.mxu0 %v635
    %2004 = vmatpush.msra.mxu0 %v627
    %2005 = vmatpush.msra.mxu0 %v619
    %2006 = vmatpush.msra.mxu0 %v611
    %2007 = vmatpush.msra.mxu0 %v603
    %2008 = vmatpush.msra.mxu0 %v595
    %2009 = vmatpush.msra.mxu0 %v587
    %2010 = vmatpush.msra.mxu0 %v579
    %2011 = vmatpush.msra.mxu0 %v571
    %2012 = vmatpush.msra.mxu0 %v563
    %2013 = vmatmul.f32.gmra.mxu0 %v1827
    %v2014 = vpop.f32.mrf.mxu0
    %v2015 = vadd.f32 0.0, %v2014
    %2016 = vdwg.mxu0
    %2017 = vmatpush.msra.mxu0 %v811
    %2018 = vmatpush.msra.mxu0 %v803
    %2019 = vmatpush.msra.mxu0 %v795
    %2020 = vmatpush.msra.mxu0 %v787
    %2021 = vmatpush.msra.mxu0 %v779
    %2022 = vmatpush.msra.mxu0 %v771
    %2023 = vmatpush.msra.mxu0 %v763
    %2024 = vmatpush.msra.mxu0 %v755
    %2025 = vmatpush.msra.mxu0 %v747
    %2026 = vmatpush.msra.mxu0 %v739
    %2027 = vmatpush.msra.mxu0 %v731
    %2028 = vmatpush.msra.mxu0 %v723
    %2029 = vmatpush.msra.mxu0 %v715
    %2030 = vmatpush.msra.mxu0 %v707
    %2031 = vmatpush.msra.mxu0 %v699
    %2032 = vmatpush.msra.mxu0 %v691
    %2033 = vmatmul.f32.gmra.mxu0 %v1828
    %v2034 = vpop.f32.mrf.mxu0
    %v2035 = vadd.f32 %v2015, %v2034
    %2036 = vdwg.mxu0
    %2037 = vmatpush.msra.mxu0 %v684
    %2038 = vmatpush.msra.mxu0 %v676
    %2039 = vmatpush.msra.mxu0 %v668
    %2040 = vmatpush.msra.mxu0 %v660
    %2041 = vmatpush.msra.mxu0 %v652
    %2042 = vmatpush.msra.mxu0 %v644
    %2043 = vmatpush.msra.mxu0 %v636
    %2044 = vmatpush.msra.mxu0 %v628
    %2045 = vmatpush.msra.mxu0 %v620
    %2046 = vmatpush.msra.mxu0 %v612
    %2047 = vmatpush.msra.mxu0 %v604
    %2048 = vmatpush.msra.mxu0 %v596
    %2049 = vmatpush.msra.mxu0 %v588
    %2050 = vmatpush.msra.mxu0 %v580
    %2051 = vmatpush.msra.mxu0 %v572
    %2052 = vmatpush.msra.mxu0 %v564
    %2053 = vmatmul.f32.gmra.mxu0 %v1827
    %v2054 = vpop.f32.mrf.mxu0
    %v2055 = vadd.f32 0.0, %v2054
    %2056 = vdwg.mxu0
    %2057 = vmatpush.msra.mxu0 %v812
    %2058 = vmatpush.msra.mxu0 %v804
    %2059 = vmatpush.msra.mxu0 %v796
    %2060 = vmatpush.msra.mxu0 %v788
    %2061 = vmatpush.msra.mxu0 %v780
    %2062 = vmatpush.msra.mxu0 %v772
    %2063 = vmatpush.msra.mxu0 %v764
    %2064 = vmatpush.msra.mxu0 %v756
    %2065 = vmatpush.msra.mxu0 %v748
    %2066 = vmatpush.msra.mxu0 %v740
    %2067 = vmatpush.msra.mxu0 %v732
    %2068 = vmatpush.msra.mxu0 %v724
    %2069 = vmatpush.msra.mxu0 %v716
    %2070 = vmatpush.msra.mxu0 %v708
    %2071 = vmatpush.msra.mxu0 %v700
    %2072 = vmatpush.msra.mxu0 %v692
    %2073 = vmatmul.f32.gmra.mxu0 %v1828
    %v2074 = vpop.f32.mrf.mxu0
    %v2075 = vadd.f32 %v2055, %v2074
    %2076 = vdwg.mxu0
    %2077 = vmatpush.msra.mxu0 %v685
    %2078 = vmatpush.msra.mxu0 %v677
    %2079 = vmatpush.msra.mxu0 %v669
    %2080 = vmatpush.msra.mxu0 %v661
    %2081 = vmatpush.msra.mxu0 %v653
    %2082 = vmatpush.msra.mxu0 %v645
    %2083 = vmatpush.msra.mxu0 %v637
    %2084 = vmatpush.msra.mxu0 %v629
    %2085 = vmatpush.msra.mxu0 %v621
    %2086 = vmatpush.msra.mxu0 %v613
    %2087 = vmatpush.msra.mxu0 %v605
    %2088 = vmatpush.msra.mxu0 %v597
    %2089 = vmatpush.msra.mxu0 %v589
    %2090 = vmatpush.msra.mxu0 %v581
    %2091 = vmatpush.msra.mxu0 %v573
    %2092 = vmatpush.msra.mxu0 %v565
    %2093 = vmatmul.f32.gmra.mxu0 %v1827
    %v2094 = vpop.f32.mrf.mxu0
    %v2095 = vadd.f32 0.0, %v2094
    %2096 = vdwg.mxu0
    %2097 = vmatpush.msra.mxu0 %v813
    %2098 = vmatpush.msra.mxu0 %v805
    %2099 = vmatpush.msra.mxu0 %v797
    %2100 = vmatpush.msra.mxu0 %v789
    %2101 = vmatpush.msra.mxu0 %v781
    %2102 = vmatpush.msra.mxu0 %v773
    %2103 = vmatpush.msra.mxu0 %v765
    %2104 = vmatpush.msra.mxu0 %v757
    %2105 = vmatpush.msra.mxu0 %v749
    %2106 = vmatpush.msra.mxu0 %v741
    %2107 = vmatpush.msra.mxu0 %v733
    %2108 = vmatpush.msra.mxu0 %v725
    %2109 = vmatpush.msra.mxu0 %v717
    %2110 = vmatpush.msra.mxu0 %v709
    %2111 = vmatpush.msra.mxu0 %v701
    %2112 = vmatpush.msra.mxu0 %v693
    %2113 = vmatmul.f32.gmra.mxu0 %v1828
    %v2114 = vpop.f32.mrf.mxu0
    %v2115 = vadd.f32 %v2095, %v2114
    %2116 = vdwg.mxu0
    %2117 = vmatpush.msra.mxu0 %v686
    %2118 = vmatpush.msra.mxu0 %v678
    %2119 = vmatpush.msra.mxu0 %v670
    %2120 = vmatpush.msra.mxu0 %v662
    %2121 = vmatpush.msra.mxu0 %v654
    %2122 = vmatpush.msra.mxu0 %v646
    %2123 = vmatpush.msra.mxu0 %v638
    %2124 = vmatpush.msra.mxu0 %v630
    %2125 = vmatpush.msra.mxu0 %v622
    %2126 = vmatpush.msra.mxu0 %v614
    %2127 = vmatpush.msra.mxu0 %v606
    %2128 = vmatpush.msra.mxu0 %v598
    %2129 = vmatpush.msra.mxu0 %v590
    %2130 = vmatpush.msra.mxu0 %v582
    %2131 = vmatpush.msra.mxu0 %v574
    %2132 = vmatpush.msra.mxu0 %v566
    %2133 = vmatmul.f32.gmra.mxu0 %v1827
    %v2134 = vpop.f32.mrf.mxu0
    %v2135 = vadd.f32 0.0, %v2134
    %2136 = vdwg.mxu0
    %2137 = vmatpush.msra.mxu0 %v814
    %2138 = vmatpush.msra.mxu0 %v806
    %2139 = vmatpush.msra.mxu0 %v798
    %2140 = vmatpush.msra.mxu0 %v790
    %2141 = vmatpush.msra.mxu0 %v782
    %2142 = vmatpush.msra.mxu0 %v774
    %2143 = vmatpush.msra.mxu0 %v766
    %2144 = vmatpush.msra.mxu0 %v758
    %2145 = vmatpush.msra.mxu0 %v750
    %2146 = vmatpush.msra.mxu0 %v742
    %2147 = vmatpush.msra.mxu0 %v734
    %2148 = vmatpush.msra.mxu0 %v726
    %2149 = vmatpush.msra.mxu0 %v718
    %2150 = vmatpush.msra.mxu0 %v710
    %2151 = vmatpush.msra.mxu0 %v702
    %2152 = vmatpush.msra.mxu0 %v694
    %2153 = vmatmul.f32.gmra.mxu0 %v1828
    %v2154 = vpop.f32.mrf.mxu0
    %v2155 = vadd.f32 %v2135, %v2154
    %2156 = vdwg.mxu0
    %v2157 = vadd.f32 %v1829, %v1875
    %v2158 = vadd.f32 %v1830, %v1915
    %v2159 = vadd.f32 %v1831, %v1955
    %v2160 = vadd.f32 %v1832, %v1995
    %v2161 = vadd.f32 %v1833, %v2035
    %v2162 = vadd.f32 %v1834, %v2075
    %v2163 = vadd.f32 %v1835, %v2115
    %v2164 = vadd.f32 %v1836, %v2155
    %v2165 = vxor.u32 %v2157, 2147483648
    %v2166 = vxor.u32 %v2158, 2147483648
    %v2167 = vxor.u32 %v2159, 2147483648
    %v2168 = vxor.u32 %v2160, 2147483648
    %v2169 = vxor.u32 %v2161, 2147483648
    %v2170 = vxor.u32 %v2162, 2147483648
    %v2171 = vmul.f32 %v2165, 1.442695
    %v2172 = vpow.pop %v2171
    %v2173 = vmul.f32 %v2166, 1.442695
    %v2174 = vpow.pop %v2173
    %v2175 = vmul.f32 %v2167, 1.442695
    %v2176 = vpow.pop %v2175
    %v2177 = vmul.f32 %v2168, 1.442695
    %v2178 = vpow.pop %v2177
    %v2179 = vmul.f32 %v2169, 1.442695
    %v2180 = vpow.pop %v2179
    %v2181 = vmul.f32 %v2170, 1.442695
    %v2182 = vpow.pop %v2181
    %v2183 = vadd.f32 %v2172, 1.0
    %v2184 = vadd.f32 %v2174, 1.0
    %v2185 = vadd.f32 %v2176, 1.0
    %v2186 = vadd.f32 %v2178, 1.0
    %v2187 = vadd.f32 %v2180, 1.0
    %v2188 = vadd.f32 %v2182, 1.0
    %v2189 = vrcp.pop %v2183
    %v2190 = vmul.f32 %v2183, %v2189
    %v2191 = vsub.f32 1.0, %v2190
    %v2192 = vmul.f32 %v2189, %v2191
    %v2193 = vadd.f32 %v2189, %v2192
    %vm2194 = vweird.f32 %v2183
    %vm2195 = vweird.f32 %v2189
    %vm2196 = vmor %vm2194, %vm2195
    %v2197 = vsel %vm2196, %v2189, %v2193
    %v2198 = vand.u32 2147483647, %v2183
    %vm2199 = vcmp.eq.f32.partialorder %v2198, 8.507059e+37
    %v2200 = vand.u32 %v2183, 2147483648
    %v2201 = vor.u32 1.1754944e-38, %v2200
    %v2202 = vsel %vm2199, %v2201, %v2197
    %v2203 = vmul.f32 1.0, %v2202
    %v2204 = vrcp.pop %v2184
    %v2205 = vmul.f32 %v2184, %v2204
    %v2206 = vsub.f32 1.0, %v2205
    %v2207 = vmul.f32 %v2204, %v2206
    %v2208 = vadd.f32 %v2204, %v2207
    %vm2209 = vweird.f32 %v2184
    %vm2210 = vweird.f32 %v2204
    %vm2211 = vmor %vm2209, %vm2210
    %v2212 = vsel %vm2211, %v2204, %v2208
    %v2213 = vand.u32 2147483647, %v2184
    %vm2214 = vcmp.eq.f32.partialorder %v2213, 8.507059e+37
    %v2215 = vand.u32 %v2184, 2147483648
    %v2216 = vor.u32 1.1754944e-38, %v2215
    %v2217 = vsel %vm2214, %v2216, %v2212
    %v2218 = vmul.f32 1.0, %v2217
    %v2219 = vrcp.pop %v2185
    %v2220 = vmul.f32 %v2185, %v2219
    %v2221 = vsub.f32 1.0, %v2220
    %v2222 = vmul.f32 %v2219, %v2221
    %v2223 = vadd.f32 %v2219, %v2222
    %vm2224 = vweird.f32 %v2185
    %vm2225 = vweird.f32 %v2219
    %vm2226 = vmor %vm2224, %vm2225
    %v2227 = vsel %vm2226, %v2219, %v2223
    %v2228 = vand.u32 2147483647, %v2185
    %vm2229 = vcmp.eq.f32.partialorder %v2228, 8.507059e+37
    %v2230 = vand.u32 %v2185, 2147483648
    %v2231 = vor.u32 1.1754944e-38, %v2230
    %v2232 = vsel %vm2229, %v2231, %v2227
    %v2233 = vmul.f32 1.0, %v2232
    %v2234 = vrcp.pop %v2186
    %v2235 = vmul.f32 %v2186, %v2234
    %v2236 = vsub.f32 1.0, %v2235
    %v2237 = vmul.f32 %v2234, %v2236
    %v2238 = vadd.f32 %v2234, %v2237
    %vm2239 = vweird.f32 %v2186
    %vm2240 = vweird.f32 %v2234
    %vm2241 = vmor %vm2239, %vm2240
    %v2242 = vsel %vm2241, %v2234, %v2238
    %v2243 = vand.u32 2147483647, %v2186
    %vm2244 = vcmp.eq.f32.partialorder %v2243, 8.507059e+37
    %v2245 = vand.u32 %v2186, 2147483648
    %v2246 = vor.u32 1.1754944e-38, %v2245
    %v2247 = vsel %vm2244, %v2246, %v2242
    %v2248 = vmul.f32 1.0, %v2247
    %v2249 = vrcp.pop %v2187
    %v2250 = vmul.f32 %v2187, %v2249
    %v2251 = vsub.f32 1.0, %v2250
    %v2252 = vmul.f32 %v2249, %v2251
    %v2253 = vadd.f32 %v2249, %v2252
    %vm2254 = vweird.f32 %v2187
    %vm2255 = vweird.f32 %v2249
    %vm2256 = vmor %vm2254, %vm2255
    %v2257 = vsel %vm2256, %v2249, %v2253
    %v2258 = vand.u32 2147483647, %v2187
    %vm2259 = vcmp.eq.f32.partialorder %v2258, 8.507059e+37
    %v2260 = vand.u32 %v2187, 2147483648
    %v2261 = vor.u32 1.1754944e-38, %v2260
    %v2262 = vsel %vm2259, %v2261, %v2257
    %v2263 = vmul.f32 1.0, %v2262
    %v2264 = vrcp.pop %v2188
    %v2265 = vmul.f32 %v2188, %v2264
    %v2266 = vsub.f32 1.0, %v2265
    %v2267 = vmul.f32 %v2264, %v2266
    %v2268 = vadd.f32 %v2264, %v2267
    %vm2269 = vweird.f32 %v2188
    %vm2270 = vweird.f32 %v2264
    %vm2271 = vmor %vm2269, %vm2270
    %v2272 = vsel %vm2271, %v2264, %v2268
    %v2273 = vand.u32 2147483647, %v2188
    %vm2274 = vcmp.eq.f32.partialorder %v2273, 8.507059e+37
    %v2275 = vand.u32 %v2188, 2147483648
    %v2276 = vor.u32 1.1754944e-38, %v2275
    %v2277 = vsel %vm2274, %v2276, %v2272
    %v2278 = vmul.f32 1.0, %v2277
    %v2279 = vtanh.pop %v2163
    %v2280 = vtanh.pop %v2164
    %v2281 = vmul.f32 %v2233, %v1823
    %v2282 = vmul.f32 %v2248, %v1824
    %v2283 = vmul.f32 %v2203, %v2279
    %v2284 = vmul.f32 %v2218, %v2280
    %v2285 = vadd.f32 %v2281, %v2283
    %v2286 = vadd.f32 %v2282, %v2284
    %v2287 = vtanh.pop %v2285
    %v2288 = vtanh.pop %v2286
    %v2289 = vmul.f32 %v2263, %v2287
    %v2290 = vmul.f32 %v2278, %v2288
    %v2291 = vld [vmem:[#allocation2 + $0x100] sm:$0xff]
    %v2292 = vld [vmem:[#allocation2 + $0x108] sm:$0xff]
    %v2293 = vld [vmem:[#allocation2 + $0x110] sm:$0xff]
    %v2294 = vld [vmem:[#allocation2 + $0x118] sm:$0xff]
    %v2295 = vld [vmem:[#allocation2 + $0x120] sm:$0xff]
    %v2296 = vld [vmem:[#allocation2 + $0x128] sm:$0xff]
    %v2297 = vld [vmem:[#allocation2 + $0x130] sm:$0xff]
    %v2298 = vld [vmem:[#allocation2 + $0x138] sm:$0xff]
    %2299 = vmatpush.msra.mxu0 %v679
    %2300 = vmatpush.msra.mxu0 %v671
    %2301 = vmatpush.msra.mxu0 %v663
    %2302 = vmatpush.msra.mxu0 %v655
    %2303 = vmatpush.msra.mxu0 %v647
    %2304 = vmatpush.msra.mxu0 %v639
    %2305 = vmatpush.msra.mxu0 %v631
    %2306 = vmatpush.msra.mxu0 %v623
    %2307 = vmatpush.msra.mxu0 %v615
    %2308 = vmatpush.msra.mxu0 %v607
    %2309 = vmatpush.msra.mxu0 %v599
    %2310 = vmatpush.msra.mxu0 %v591
    %2311 = vmatpush.msra.mxu0 %v583
    %2312 = vmatpush.msra.mxu0 %v575
    %2313 = vmatpush.msra.mxu0 %v567
    %2314 = vmatpush.msra.mxu0 %v559
    %2315 = vmatmul.f32.gmra.mxu0 %v2289
    %v2316 = vpop.f32.mrf.mxu0
    %v2317 = vadd.f32 0.0, %v2316
    %2318 = vdwg.mxu0
    %2319 = vmatpush.msra.mxu0 %v807
    %2320 = vmatpush.msra.mxu0 %v799
    %2321 = vmatpush.msra.mxu0 %v791
    %2322 = vmatpush.msra.mxu0 %v783
    %2323 = vmatpush.msra.mxu0 %v775
    %2324 = vmatpush.msra.mxu0 %v767
    %2325 = vmatpush.msra.mxu0 %v759
    %2326 = vmatpush.msra.mxu0 %v751
    %2327 = vmatpush.msra.mxu0 %v743
    %2328 = vmatpush.msra.mxu0 %v735
    %2329 = vmatpush.msra.mxu0 %v727
    %2330 = vmatpush.msra.mxu0 %v719
    %2331 = vmatpush.msra.mxu0 %v711
    %2332 = vmatpush.msra.mxu0 %v703
    %2333 = vmatpush.msra.mxu0 %v695
    %2334 = vmatpush.msra.mxu0 %v687
    %2335 = vmatmul.f32.gmra.mxu0 %v2290
    %v2336 = vpop.f32.mrf.mxu0
    %v2337 = vadd.f32 %v2317, %v2336
    %2338 = vdwg.mxu0
    %2339 = vmatpush.msra.mxu0 %v680
    %2340 = vmatpush.msra.mxu0 %v672
    %2341 = vmatpush.msra.mxu0 %v664
    %2342 = vmatpush.msra.mxu0 %v656
    %2343 = vmatpush.msra.mxu0 %v648
    %2344 = vmatpush.msra.mxu0 %v640
    %2345 = vmatpush.msra.mxu0 %v632
    %2346 = vmatpush.msra.mxu0 %v624
    %2347 = vmatpush.msra.mxu0 %v616
    %2348 = vmatpush.msra.mxu0 %v608
    %2349 = vmatpush.msra.mxu0 %v600
    %2350 = vmatpush.msra.mxu0 %v592
    %2351 = vmatpush.msra.mxu0 %v584
    %2352 = vmatpush.msra.mxu0 %v576
    %2353 = vmatpush.msra.mxu0 %v568
    %2354 = vmatpush.msra.mxu0 %v560
    %2355 = vmatmul.f32.gmra.mxu0 %v2289
    %v2356 = vpop.f32.mrf.mxu0
    %v2357 = vadd.f32 0.0, %v2356
    %2358 = vdwg.mxu0
    %2359 = vmatpush.msra.mxu0 %v808
    %2360 = vmatpush.msra.mxu0 %v800
    %2361 = vmatpush.msra.mxu0 %v792
    %2362 = vmatpush.msra.mxu0 %v784
    %2363 = vmatpush.msra.mxu0 %v776
    %2364 = vmatpush.msra.mxu0 %v768
    %2365 = vmatpush.msra.mxu0 %v760
    %2366 = vmatpush.msra.mxu0 %v752
    %2367 = vmatpush.msra.mxu0 %v744
    %2368 = vmatpush.msra.mxu0 %v736
    %2369 = vmatpush.msra.mxu0 %v728
    %2370 = vmatpush.msra.mxu0 %v720
    %2371 = vmatpush.msra.mxu0 %v712
    %2372 = vmatpush.msra.mxu0 %v704
    %2373 = vmatpush.msra.mxu0 %v696
    %2374 = vmatpush.msra.mxu0 %v688
    %2375 = vmatmul.f32.gmra.mxu0 %v2290
    %v2376 = vpop.f32.mrf.mxu0
    %v2377 = vadd.f32 %v2357, %v2376
    %2378 = vdwg.mxu0
    %2379 = vmatpush.msra.mxu0 %v681
    %2380 = vmatpush.msra.mxu0 %v673
    %2381 = vmatpush.msra.mxu0 %v665
    %2382 = vmatpush.msra.mxu0 %v657
    %2383 = vmatpush.msra.mxu0 %v649
    %2384 = vmatpush.msra.mxu0 %v641
    %2385 = vmatpush.msra.mxu0 %v633
    %2386 = vmatpush.msra.mxu0 %v625
    %2387 = vmatpush.msra.mxu0 %v617
    %2388 = vmatpush.msra.mxu0 %v609
    %2389 = vmatpush.msra.mxu0 %v601
    %2390 = vmatpush.msra.mxu0 %v593
    %2391 = vmatpush.msra.mxu0 %v585
    %2392 = vmatpush.msra.mxu0 %v577
    %2393 = vmatpush.msra.mxu0 %v569
    %2394 = vmatpush.msra.mxu0 %v561
    %2395 = vmatmul.f32.gmra.mxu0 %v2289
    %v2396 = vpop.f32.mrf.mxu0
    %v2397 = vadd.f32 0.0, %v2396
    %2398 = vdwg.mxu0
    %2399 = vmatpush.msra.mxu0 %v809
    %2400 = vmatpush.msra.mxu0 %v801
    %2401 = vmatpush.msra.mxu0 %v793
    %2402 = vmatpush.msra.mxu0 %v785
    %2403 = vmatpush.msra.mxu0 %v777
    %2404 = vmatpush.msra.mxu0 %v769
    %2405 = vmatpush.msra.mxu0 %v761
    %2406 = vmatpush.msra.mxu0 %v753
    %2407 = vmatpush.msra.mxu0 %v745
    %2408 = vmatpush.msra.mxu0 %v737
    %2409 = vmatpush.msra.mxu0 %v729
    %2410 = vmatpush.msra.mxu0 %v721
    %2411 = vmatpush.msra.mxu0 %v713
    %2412 = vmatpush.msra.mxu0 %v705
    %2413 = vmatpush.msra.mxu0 %v697
    %2414 = vmatpush.msra.mxu0 %v689
    %2415 = vmatmul.f32.gmra.mxu0 %v2290
    %v2416 = vpop.f32.mrf.mxu0
    %v2417 = vadd.f32 %v2397, %v2416
    %2418 = vdwg.mxu0
    %2419 = vmatpush.msra.mxu0 %v682
    %2420 = vmatpush.msra.mxu0 %v674
    %2421 = vmatpush.msra.mxu0 %v666
    %2422 = vmatpush.msra.mxu0 %v658
    %2423 = vmatpush.msra.mxu0 %v650
    %2424 = vmatpush.msra.mxu0 %v642
    %2425 = vmatpush.msra.mxu0 %v634
    %2426 = vmatpush.msra.mxu0 %v626
    %2427 = vmatpush.msra.mxu0 %v618
    %2428 = vmatpush.msra.mxu0 %v610
    %2429 = vmatpush.msra.mxu0 %v602
    %2430 = vmatpush.msra.mxu0 %v594
    %2431 = vmatpush.msra.mxu0 %v586
    %2432 = vmatpush.msra.mxu0 %v578
    %2433 = vmatpush.msra.mxu0 %v570
    %2434 = vmatpush.msra.mxu0 %v562
    %2435 = vmatmul.f32.gmra.mxu0 %v2289
    %v2436 = vpop.f32.mrf.mxu0
    %v2437 = vadd.f32 0.0, %v2436
    %2438 = vdwg.mxu0
    %2439 = vmatpush.msra.mxu0 %v810
    %2440 = vmatpush.msra.mxu0 %v802
    %2441 = vmatpush.msra.mxu0 %v794
    %2442 = vmatpush.msra.mxu0 %v786
    %2443 = vmatpush.msra.mxu0 %v778
    %2444 = vmatpush.msra.mxu0 %v770
    %2445 = vmatpush.msra.mxu0 %v762
    %2446 = vmatpush.msra.mxu0 %v754
    %2447 = vmatpush.msra.mxu0 %v746
    %2448 = vmatpush.msra.mxu0 %v738
    %2449 = vmatpush.msra.mxu0 %v730
    %2450 = vmatpush.msra.mxu0 %v722
    %2451 = vmatpush.msra.mxu0 %v714
    %2452 = vmatpush.msra.mxu0 %v706
    %2453 = vmatpush.msra.mxu0 %v698
    %2454 = vmatpush.msra.mxu0 %v690
    %2455 = vmatmul.f32.gmra.mxu0 %v2290
    %v2456 = vpop.f32.mrf.mxu0
    %v2457 = vadd.f32 %v2437, %v2456
    %2458 = vdwg.mxu0
    %2459 = vmatpush.msra.mxu0 %v683
    %2460 = vmatpush.msra.mxu0 %v675
    %2461 = vmatpush.msra.mxu0 %v667
    %2462 = vmatpush.msra.mxu0 %v659
    %2463 = vmatpush.msra.mxu0 %v651
    %2464 = vmatpush.msra.mxu0 %v643
    %2465 = vmatpush.msra.mxu0 %v635
    %2466 = vmatpush.msra.mxu0 %v627
    %2467 = vmatpush.msra.mxu0 %v619
    %2468 = vmatpush.msra.mxu0 %v611
    %2469 = vmatpush.msra.mxu0 %v603
    %2470 = vmatpush.msra.mxu0 %v595
    %2471 = vmatpush.msra.mxu0 %v587
    %2472 = vmatpush.msra.mxu0 %v579
    %2473 = vmatpush.msra.mxu0 %v571
    %2474 = vmatpush.msra.mxu0 %v563
    %2475 = vmatmul.f32.gmra.mxu0 %v2289
    %v2476 = vpop.f32.mrf.mxu0
    %v2477 = vadd.f32 0.0, %v2476
    %2478 = vdwg.mxu0
    %2479 = vmatpush.msra.mxu0 %v811
    %2480 = vmatpush.msra.mxu0 %v803
    %2481 = vmatpush.msra.mxu0 %v795
    %2482 = vmatpush.msra.mxu0 %v787
    %2483 = vmatpush.msra.mxu0 %v779
    %2484 = vmatpush.msra.mxu0 %v771
    %2485 = vmatpush.msra.mxu0 %v763
    %2486 = vmatpush.msra.mxu0 %v755
    %2487 = vmatpush.msra.mxu0 %v747
    %2488 = vmatpush.msra.mxu0 %v739
    %2489 = vmatpush.msra.mxu0 %v731
    %2490 = vmatpush.msra.mxu0 %v723
    %2491 = vmatpush.msra.mxu0 %v715
    %2492 = vmatpush.msra.mxu0 %v707
    %2493 = vmatpush.msra.mxu0 %v699
    %2494 = vmatpush.msra.mxu0 %v691
    %2495 = vmatmul.f32.gmra.mxu0 %v2290
    %v2496 = vpop.f32.mrf.mxu0
    %v2497 = vadd.f32 %v2477, %v2496
    %2498 = vdwg.mxu0
    %2499 = vmatpush.msra.mxu0 %v684
    %2500 = vmatpush.msra.mxu0 %v676
    %2501 = vmatpush.msra.mxu0 %v668
    %2502 = vmatpush.msra.mxu0 %v660
    %2503 = vmatpush.msra.mxu0 %v652
    %2504 = vmatpush.msra.mxu0 %v644
    %2505 = vmatpush.msra.mxu0 %v636
    %2506 = vmatpush.msra.mxu0 %v628
    %2507 = vmatpush.msra.mxu0 %v620
    %2508 = vmatpush.msra.mxu0 %v612
    %2509 = vmatpush.msra.mxu0 %v604
    %2510 = vmatpush.msra.mxu0 %v596
    %2511 = vmatpush.msra.mxu0 %v588
    %2512 = vmatpush.msra.mxu0 %v580
    %2513 = vmatpush.msra.mxu0 %v572
    %2514 = vmatpush.msra.mxu0 %v564
    %2515 = vmatmul.f32.gmra.mxu0 %v2289
    %v2516 = vpop.f32.mrf.mxu0
    %v2517 = vadd.f32 0.0, %v2516
    %2518 = vdwg.mxu0
    %2519 = vmatpush.msra.mxu0 %v812
    %2520 = vmatpush.msra.mxu0 %v804
    %2521 = vmatpush.msra.mxu0 %v796
    %2522 = vmatpush.msra.mxu0 %v788
    %2523 = vmatpush.msra.mxu0 %v780
    %2524 = vmatpush.msra.mxu0 %v772
    %2525 = vmatpush.msra.mxu0 %v764
    %2526 = vmatpush.msra.mxu0 %v756
    %2527 = vmatpush.msra.mxu0 %v748
    %2528 = vmatpush.msra.mxu0 %v740
    %2529 = vmatpush.msra.mxu0 %v732
    %2530 = vmatpush.msra.mxu0 %v724
    %2531 = vmatpush.msra.mxu0 %v716
    %2532 = vmatpush.msra.mxu0 %v708
    %2533 = vmatpush.msra.mxu0 %v700
    %2534 = vmatpush.msra.mxu0 %v692
    %2535 = vmatmul.f32.gmra.mxu0 %v2290
    %v2536 = vpop.f32.mrf.mxu0
    %v2537 = vadd.f32 %v2517, %v2536
    %2538 = vdwg.mxu0
    %2539 = vmatpush.msra.mxu0 %v685
    %2540 = vmatpush.msra.mxu0 %v677
    %2541 = vmatpush.msra.mxu0 %v669
    %2542 = vmatpush.msra.mxu0 %v661
    %2543 = vmatpush.msra.mxu0 %v653
    %2544 = vmatpush.msra.mxu0 %v645
    %2545 = vmatpush.msra.mxu0 %v637
    %2546 = vmatpush.msra.mxu0 %v629
    %2547 = vmatpush.msra.mxu0 %v621
    %2548 = vmatpush.msra.mxu0 %v613
    %2549 = vmatpush.msra.mxu0 %v605
    %2550 = vmatpush.msra.mxu0 %v597
    %2551 = vmatpush.msra.mxu0 %v589
    %2552 = vmatpush.msra.mxu0 %v581
    %2553 = vmatpush.msra.mxu0 %v573
    %2554 = vmatpush.msra.mxu0 %v565
    %2555 = vmatmul.f32.gmra.mxu0 %v2289
    %v2556 = vpop.f32.mrf.mxu0
    %v2557 = vadd.f32 0.0, %v2556
    %2558 = vdwg.mxu0
    %2559 = vmatpush.msra.mxu0 %v813
    %2560 = vmatpush.msra.mxu0 %v805
    %2561 = vmatpush.msra.mxu0 %v797
    %2562 = vmatpush.msra.mxu0 %v789
    %2563 = vmatpush.msra.mxu0 %v781
    %2564 = vmatpush.msra.mxu0 %v773
    %2565 = vmatpush.msra.mxu0 %v765
    %2566 = vmatpush.msra.mxu0 %v757
    %2567 = vmatpush.msra.mxu0 %v749
    %2568 = vmatpush.msra.mxu0 %v741
    %2569 = vmatpush.msra.mxu0 %v733
    %2570 = vmatpush.msra.mxu0 %v725
    %2571 = vmatpush.msra.mxu0 %v717
    %2572 = vmatpush.msra.mxu0 %v709
    %2573 = vmatpush.msra.mxu0 %v701
    %2574 = vmatpush.msra.mxu0 %v693
    %2575 = vmatmul.f32.gmra.mxu0 %v2290
    %v2576 = vpop.f32.mrf.mxu0
    %v2577 = vadd.f32 %v2557, %v2576
    %2578 = vdwg.mxu0
    %2579 = vmatpush.msra.mxu0 %v686
    %2580 = vmatpush.msra.mxu0 %v678
    %2581 = vmatpush.msra.mxu0 %v670
    %2582 = vmatpush.msra.mxu0 %v662
    %2583 = vmatpush.msra.mxu0 %v654
    %2584 = vmatpush.msra.mxu0 %v646
    %2585 = vmatpush.msra.mxu0 %v638
    %2586 = vmatpush.msra.mxu0 %v630
    %2587 = vmatpush.msra.mxu0 %v622
    %2588 = vmatpush.msra.mxu0 %v614
    %2589 = vmatpush.msra.mxu0 %v606
    %2590 = vmatpush.msra.mxu0 %v598
    %2591 = vmatpush.msra.mxu0 %v590
    %2592 = vmatpush.msra.mxu0 %v582
    %2593 = vmatpush.msra.mxu0 %v574
    %2594 = vmatpush.msra.mxu0 %v566
    %2595 = vmatmul.f32.gmra.mxu0 %v2289
    %v2596 = vpop.f32.mrf.mxu0
    %v2597 = vadd.f32 0.0, %v2596
    %2598 = vdwg.mxu0
    %2599 = vmatpush.msra.mxu0 %v814
    %2600 = vmatpush.msra.mxu0 %v806
    %2601 = vmatpush.msra.mxu0 %v798
    %2602 = vmatpush.msra.mxu0 %v790
    %2603 = vmatpush.msra.mxu0 %v782
    %2604 = vmatpush.msra.mxu0 %v774
    %2605 = vmatpush.msra.mxu0 %v766
    %2606 = vmatpush.msra.mxu0 %v758
    %2607 = vmatpush.msra.mxu0 %v750
    %2608 = vmatpush.msra.mxu0 %v742
    %2609 = vmatpush.msra.mxu0 %v734
    %2610 = vmatpush.msra.mxu0 %v726
    %2611 = vmatpush.msra.mxu0 %v718
    %2612 = vmatpush.msra.mxu0 %v710
    %2613 = vmatpush.msra.mxu0 %v702
    %2614 = vmatpush.msra.mxu0 %v694
    %2615 = vmatmul.f32.gmra.mxu0 %v2290
    %v2616 = vpop.f32.mrf.mxu0
    %v2617 = vadd.f32 %v2597, %v2616
    %2618 = vdwg.mxu0
    %v2619 = vadd.f32 %v2291, %v2337
    %v2620 = vadd.f32 %v2292, %v2377
    %v2621 = vadd.f32 %v2293, %v2417
    %v2622 = vadd.f32 %v2294, %v2457
    %v2623 = vadd.f32 %v2295, %v2497
    %v2624 = vadd.f32 %v2296, %v2537
    %v2625 = vadd.f32 %v2297, %v2577
    %v2626 = vadd.f32 %v2298, %v2617
    %v2627 = vxor.u32 %v2619, 2147483648
    %v2628 = vxor.u32 %v2620, 2147483648
    %v2629 = vxor.u32 %v2621, 2147483648
    %v2630 = vxor.u32 %v2622, 2147483648
    %v2631 = vxor.u32 %v2623, 2147483648
    %v2632 = vxor.u32 %v2624, 2147483648
    %v2633 = vmul.f32 %v2627, 1.442695
    %v2634 = vpow.pop %v2633
    %v2635 = vmul.f32 %v2628, 1.442695
    %v2636 = vpow.pop %v2635
    %v2637 = vmul.f32 %v2629, 1.442695
    %v2638 = vpow.pop %v2637
    %v2639 = vmul.f32 %v2630, 1.442695
    %v2640 = vpow.pop %v2639
    %v2641 = vmul.f32 %v2631, 1.442695
    %v2642 = vpow.pop %v2641
    %v2643 = vmul.f32 %v2632, 1.442695
    %v2644 = vpow.pop %v2643
    %v2645 = vadd.f32 %v2634, 1.0
    %v2646 = vadd.f32 %v2636, 1.0
    %v2647 = vadd.f32 %v2638, 1.0
    %v2648 = vadd.f32 %v2640, 1.0
    %v2649 = vadd.f32 %v2642, 1.0
    %v2650 = vadd.f32 %v2644, 1.0
    %v2651 = vrcp.pop %v2645
    %v2652 = vmul.f32 %v2645, %v2651
    %v2653 = vsub.f32 1.0, %v2652
    %v2654 = vmul.f32 %v2651, %v2653
    %v2655 = vadd.f32 %v2651, %v2654
    %vm2656 = vweird.f32 %v2645
    %vm2657 = vweird.f32 %v2651
    %vm2658 = vmor %vm2656, %vm2657
    %v2659 = vsel %vm2658, %v2651, %v2655
    %v2660 = vand.u32 2147483647, %v2645
    %vm2661 = vcmp.eq.f32.partialorder %v2660, 8.507059e+37
    %v2662 = vand.u32 %v2645, 2147483648
    %v2663 = vor.u32 1.1754944e-38, %v2662
    %v2664 = vsel %vm2661, %v2663, %v2659
    %v2665 = vmul.f32 1.0, %v2664
    %v2666 = vrcp.pop %v2646
    %v2667 = vmul.f32 %v2646, %v2666
    %v2668 = vsub.f32 1.0, %v2667
    %v2669 = vmul.f32 %v2666, %v2668
    %v2670 = vadd.f32 %v2666, %v2669
    %vm2671 = vweird.f32 %v2646
    %vm2672 = vweird.f32 %v2666
    %vm2673 = vmor %vm2671, %vm2672
    %v2674 = vsel %vm2673, %v2666, %v2670
    %v2675 = vand.u32 2147483647, %v2646
    %vm2676 = vcmp.eq.f32.partialorder %v2675, 8.507059e+37
    %v2677 = vand.u32 %v2646, 2147483648
    %v2678 = vor.u32 1.1754944e-38, %v2677
    %v2679 = vsel %vm2676, %v2678, %v2674
    %v2680 = vmul.f32 1.0, %v2679
    %v2681 = vrcp.pop %v2647
    %v2682 = vmul.f32 %v2647, %v2681
    %v2683 = vsub.f32 1.0, %v2682
    %v2684 = vmul.f32 %v2681, %v2683
    %v2685 = vadd.f32 %v2681, %v2684
    %vm2686 = vweird.f32 %v2647
    %vm2687 = vweird.f32 %v2681
    %vm2688 = vmor %vm2686, %vm2687
    %v2689 = vsel %vm2688, %v2681, %v2685
    %v2690 = vand.u32 2147483647, %v2647
    %vm2691 = vcmp.eq.f32.partialorder %v2690, 8.507059e+37
    %v2692 = vand.u32 %v2647, 2147483648
    %v2693 = vor.u32 1.1754944e-38, %v2692
    %v2694 = vsel %vm2691, %v2693, %v2689
    %v2695 = vmul.f32 1.0, %v2694
    %v2696 = vrcp.pop %v2648
    %v2697 = vmul.f32 %v2648, %v2696
    %v2698 = vsub.f32 1.0, %v2697
    %v2699 = vmul.f32 %v2696, %v2698
    %v2700 = vadd.f32 %v2696, %v2699
    %vm2701 = vweird.f32 %v2648
    %vm2702 = vweird.f32 %v2696
    %vm2703 = vmor %vm2701, %vm2702
    %v2704 = vsel %vm2703, %v2696, %v2700
    %v2705 = vand.u32 2147483647, %v2648
    %vm2706 = vcmp.eq.f32.partialorder %v2705, 8.507059e+37
    %v2707 = vand.u32 %v2648, 2147483648
    %v2708 = vor.u32 1.1754944e-38, %v2707
    %v2709 = vsel %vm2706, %v2708, %v2704
    %v2710 = vmul.f32 1.0, %v2709
    %v2711 = vrcp.pop %v2649
    %v2712 = vmul.f32 %v2649, %v2711
    %v2713 = vsub.f32 1.0, %v2712
    %v2714 = vmul.f32 %v2711, %v2713
    %v2715 = vadd.f32 %v2711, %v2714
    %vm2716 = vweird.f32 %v2649
    %vm2717 = vweird.f32 %v2711
    %vm2718 = vmor %vm2716, %vm2717
    %v2719 = vsel %vm2718, %v2711, %v2715
    %v2720 = vand.u32 2147483647, %v2649
    %vm2721 = vcmp.eq.f32.partialorder %v2720, 8.507059e+37
    %v2722 = vand.u32 %v2649, 2147483648
    %v2723 = vor.u32 1.1754944e-38, %v2722
    %v2724 = vsel %vm2721, %v2723, %v2719
    %v2725 = vmul.f32 1.0, %v2724
    %v2726 = vrcp.pop %v2650
    %v2727 = vmul.f32 %v2650, %v2726
    %v2728 = vsub.f32 1.0, %v2727
    %v2729 = vmul.f32 %v2726, %v2728
    %v2730 = vadd.f32 %v2726, %v2729
    %vm2731 = vweird.f32 %v2650
    %vm2732 = vweird.f32 %v2726
    %vm2733 = vmor %vm2731, %vm2732
    %v2734 = vsel %vm2733, %v2726, %v2730
    %v2735 = vand.u32 2147483647, %v2650
    %vm2736 = vcmp.eq.f32.partialorder %v2735, 8.507059e+37
    %v2737 = vand.u32 %v2650, 2147483648
    %v2738 = vor.u32 1.1754944e-38, %v2737
    %v2739 = vsel %vm2736, %v2738, %v2734
    %v2740 = vmul.f32 1.0, %v2739
    %v2741 = vtanh.pop %v2625
    %v2742 = vtanh.pop %v2626
    %v2743 = vmul.f32 %v2695, %v2285
    %v2744 = vmul.f32 %v2710, %v2286
    %v2745 = vmul.f32 %v2665, %v2741
    %v2746 = vmul.f32 %v2680, %v2742
    %v2747 = vadd.f32 %v2743, %v2745
    %v2748 = vadd.f32 %v2744, %v2746
    %v2749 = vtanh.pop %v2747
    %v2750 = vtanh.pop %v2748
    %v2751 = vmul.f32 %v2725, %v2749
    %v2752 = vmul.f32 %v2740, %v2750
    %v2753 = vld [vmem:[#allocation2 + $0x140] sm:$0xff]
    %v2754 = vld [vmem:[#allocation2 + $0x148] sm:$0xff]
    %v2755 = vld [vmem:[#allocation2 + $0x150] sm:$0xff]
    %v2756 = vld [vmem:[#allocation2 + $0x158] sm:$0xff]
    %v2757 = vld [vmem:[#allocation2 + $0x160] sm:$0xff]
    %v2758 = vld [vmem:[#allocation2 + $0x168] sm:$0xff]
    %v2759 = vld [vmem:[#allocation2 + $0x170] sm:$0xff]
    %v2760 = vld [vmem:[#allocation2 + $0x178] sm:$0xff]
    %2761 = vmatpush.msra.mxu0 %v679
    %2762 = vmatpush.msra.mxu0 %v671
    %2763 = vmatpush.msra.mxu0 %v663
    %2764 = vmatpush.msra.mxu0 %v655
    %2765 = vmatpush.msra.mxu0 %v647
    %2766 = vmatpush.msra.mxu0 %v639
    %2767 = vmatpush.msra.mxu0 %v631
    %2768 = vmatpush.msra.mxu0 %v623
    %2769 = vmatpush.msra.mxu0 %v615
    %2770 = vmatpush.msra.mxu0 %v607
    %2771 = vmatpush.msra.mxu0 %v599
    %2772 = vmatpush.msra.mxu0 %v591
    %2773 = vmatpush.msra.mxu0 %v583
    %2774 = vmatpush.msra.mxu0 %v575
    %2775 = vmatpush.msra.mxu0 %v567
    %2776 = vmatpush.msra.mxu0 %v559
    %2777 = vmatmul.f32.gmra.mxu0 %v2751
    %v2778 = vpop.f32.mrf.mxu0
    %v2779 = vadd.f32 0.0, %v2778
    %2780 = vdwg.mxu0
    %2781 = vmatpush.msra.mxu0 %v807
    %2782 = vmatpush.msra.mxu0 %v799
    %2783 = vmatpush.msra.mxu0 %v791
    %2784 = vmatpush.msra.mxu0 %v783
    %2785 = vmatpush.msra.mxu0 %v775
    %2786 = vmatpush.msra.mxu0 %v767
    %2787 = vmatpush.msra.mxu0 %v759
    %2788 = vmatpush.msra.mxu0 %v751
    %2789 = vmatpush.msra.mxu0 %v743
    %2790 = vmatpush.msra.mxu0 %v735
    %2791 = vmatpush.msra.mxu0 %v727
    %2792 = vmatpush.msra.mxu0 %v719
    %2793 = vmatpush.msra.mxu0 %v711
    %2794 = vmatpush.msra.mxu0 %v703
    %2795 = vmatpush.msra.mxu0 %v695
    %2796 = vmatpush.msra.mxu0 %v687
    %2797 = vmatmul.f32.gmra.mxu0 %v2752
    %v2798 = vpop.f32.mrf.mxu0
    %v2799 = vadd.f32 %v2779, %v2798
    %2800 = vdwg.mxu0
    %2801 = vmatpush.msra.mxu0 %v680
    %2802 = vmatpush.msra.mxu0 %v672
    %2803 = vmatpush.msra.mxu0 %v664
    %2804 = vmatpush.msra.mxu0 %v656
    %2805 = vmatpush.msra.mxu0 %v648
    %2806 = vmatpush.msra.mxu0 %v640
    %2807 = vmatpush.msra.mxu0 %v632
    %2808 = vmatpush.msra.mxu0 %v624
    %2809 = vmatpush.msra.mxu0 %v616
    %2810 = vmatpush.msra.mxu0 %v608
    %2811 = vmatpush.msra.mxu0 %v600
    %2812 = vmatpush.msra.mxu0 %v592
    %2813 = vmatpush.msra.mxu0 %v584
    %2814 = vmatpush.msra.mxu0 %v576
    %2815 = vmatpush.msra.mxu0 %v568
    %2816 = vmatpush.msra.mxu0 %v560
    %2817 = vmatmul.f32.gmra.mxu0 %v2751
    %v2818 = vpop.f32.mrf.mxu0
    %v2819 = vadd.f32 0.0, %v2818
    %2820 = vdwg.mxu0
    %2821 = vmatpush.msra.mxu0 %v808
    %2822 = vmatpush.msra.mxu0 %v800
    %2823 = vmatpush.msra.mxu0 %v792
    %2824 = vmatpush.msra.mxu0 %v784
    %2825 = vmatpush.msra.mxu0 %v776
    %2826 = vmatpush.msra.mxu0 %v768
    %2827 = vmatpush.msra.mxu0 %v760
    %2828 = vmatpush.msra.mxu0 %v752
    %2829 = vmatpush.msra.mxu0 %v744
    %2830 = vmatpush.msra.mxu0 %v736
    %2831 = vmatpush.msra.mxu0 %v728
    %2832 = vmatpush.msra.mxu0 %v720
    %2833 = vmatpush.msra.mxu0 %v712
    %2834 = vmatpush.msra.mxu0 %v704
    %2835 = vmatpush.msra.mxu0 %v696
    %2836 = vmatpush.msra.mxu0 %v688
    %2837 = vmatmul.f32.gmra.mxu0 %v2752
    %v2838 = vpop.f32.mrf.mxu0
    %v2839 = vadd.f32 %v2819, %v2838
    %2840 = vdwg.mxu0
    %2841 = vmatpush.msra.mxu0 %v681
    %2842 = vmatpush.msra.mxu0 %v673
    %2843 = vmatpush.msra.mxu0 %v665
    %2844 = vmatpush.msra.mxu0 %v657
    %2845 = vmatpush.msra.mxu0 %v649
    %2846 = vmatpush.msra.mxu0 %v641
    %2847 = vmatpush.msra.mxu0 %v633
    %2848 = vmatpush.msra.mxu0 %v625
    %2849 = vmatpush.msra.mxu0 %v617
    %2850 = vmatpush.msra.mxu0 %v609
    %2851 = vmatpush.msra.mxu0 %v601
    %2852 = vmatpush.msra.mxu0 %v593
    %2853 = vmatpush.msra.mxu0 %v585
    %2854 = vmatpush.msra.mxu0 %v577
    %2855 = vmatpush.msra.mxu0 %v569
    %2856 = vmatpush.msra.mxu0 %v561
    %2857 = vmatmul.f32.gmra.mxu0 %v2751
    %v2858 = vpop.f32.mrf.mxu0
    %v2859 = vadd.f32 0.0, %v2858
    %2860 = vdwg.mxu0
    %2861 = vmatpush.msra.mxu0 %v809
    %2862 = vmatpush.msra.mxu0 %v801
    %2863 = vmatpush.msra.mxu0 %v793
    %2864 = vmatpush.msra.mxu0 %v785
    %2865 = vmatpush.msra.mxu0 %v777
    %2866 = vmatpush.msra.mxu0 %v769
    %2867 = vmatpush.msra.mxu0 %v761
    %2868 = vmatpush.msra.mxu0 %v753
    %2869 = vmatpush.msra.mxu0 %v745
    %2870 = vmatpush.msra.mxu0 %v737
    %2871 = vmatpush.msra.mxu0 %v729
    %2872 = vmatpush.msra.mxu0 %v721
    %2873 = vmatpush.msra.mxu0 %v713
    %2874 = vmatpush.msra.mxu0 %v705
    %2875 = vmatpush.msra.mxu0 %v697
    %2876 = vmatpush.msra.mxu0 %v689
    %2877 = vmatmul.f32.gmra.mxu0 %v2752
    %v2878 = vpop.f32.mrf.mxu0
    %v2879 = vadd.f32 %v2859, %v2878
    %2880 = vdwg.mxu0
    %2881 = vmatpush.msra.mxu0 %v682
    %2882 = vmatpush.msra.mxu0 %v674
    %2883 = vmatpush.msra.mxu0 %v666
    %2884 = vmatpush.msra.mxu0 %v658
    %2885 = vmatpush.msra.mxu0 %v650
    %2886 = vmatpush.msra.mxu0 %v642
    %2887 = vmatpush.msra.mxu0 %v634
    %2888 = vmatpush.msra.mxu0 %v626
    %2889 = vmatpush.msra.mxu0 %v618
    %2890 = vmatpush.msra.mxu0 %v610
    %2891 = vmatpush.msra.mxu0 %v602
    %2892 = vmatpush.msra.mxu0 %v594
    %2893 = vmatpush.msra.mxu0 %v586
    %2894 = vmatpush.msra.mxu0 %v578
    %2895 = vmatpush.msra.mxu0 %v570
    %2896 = vmatpush.msra.mxu0 %v562
    %2897 = vmatmul.f32.gmra.mxu0 %v2751
    %v2898 = vpop.f32.mrf.mxu0
    %v2899 = vadd.f32 0.0, %v2898
    %2900 = vdwg.mxu0
    %2901 = vmatpush.msra.mxu0 %v810
    %2902 = vmatpush.msra.mxu0 %v802
    %2903 = vmatpush.msra.mxu0 %v794
    %2904 = vmatpush.msra.mxu0 %v786
    %2905 = vmatpush.msra.mxu0 %v778
    %2906 = vmatpush.msra.mxu0 %v770
    %2907 = vmatpush.msra.mxu0 %v762
    %2908 = vmatpush.msra.mxu0 %v754
    %2909 = vmatpush.msra.mxu0 %v746
    %2910 = vmatpush.msra.mxu0 %v738
    %2911 = vmatpush.msra.mxu0 %v730
    %2912 = vmatpush.msra.mxu0 %v722
    %2913 = vmatpush.msra.mxu0 %v714
    %2914 = vmatpush.msra.mxu0 %v706
    %2915 = vmatpush.msra.mxu0 %v698
    %2916 = vmatpush.msra.mxu0 %v690
    %2917 = vmatmul.f32.gmra.mxu0 %v2752
    %v2918 = vpop.f32.mrf.mxu0
    %v2919 = vadd.f32 %v2899, %v2918
    %2920 = vdwg.mxu0
    %2921 = vmatpush.msra.mxu0 %v683
    %2922 = vmatpush.msra.mxu0 %v675
    %2923 = vmatpush.msra.mxu0 %v667
    %2924 = vmatpush.msra.mxu0 %v659
    %2925 = vmatpush.msra.mxu0 %v651
    %2926 = vmatpush.msra.mxu0 %v643
    %2927 = vmatpush.msra.mxu0 %v635
    %2928 = vmatpush.msra.mxu0 %v627
    %2929 = vmatpush.msra.mxu0 %v619
    %2930 = vmatpush.msra.mxu0 %v611
    %2931 = vmatpush.msra.mxu0 %v603
    %2932 = vmatpush.msra.mxu0 %v595
    %2933 = vmatpush.msra.mxu0 %v587
    %2934 = vmatpush.msra.mxu0 %v579
    %2935 = vmatpush.msra.mxu0 %v571
    %2936 = vmatpush.msra.mxu0 %v563
    %2937 = vmatmul.f32.gmra.mxu0 %v2751
    %v2938 = vpop.f32.mrf.mxu0
    %v2939 = vadd.f32 0.0, %v2938
    %2940 = vdwg.mxu0
    %2941 = vmatpush.msra.mxu0 %v811
    %2942 = vmatpush.msra.mxu0 %v803
    %2943 = vmatpush.msra.mxu0 %v795
    %2944 = vmatpush.msra.mxu0 %v787
    %2945 = vmatpush.msra.mxu0 %v779
    %2946 = vmatpush.msra.mxu0 %v771
    %2947 = vmatpush.msra.mxu0 %v763
    %2948 = vmatpush.msra.mxu0 %v755
    %2949 = vmatpush.msra.mxu0 %v747
    %2950 = vmatpush.msra.mxu0 %v739
    %2951 = vmatpush.msra.mxu0 %v731
    %2952 = vmatpush.msra.mxu0 %v723
    %2953 = vmatpush.msra.mxu0 %v715
    %2954 = vmatpush.msra.mxu0 %v707
    %2955 = vmatpush.msra.mxu0 %v699
    %2956 = vmatpush.msra.mxu0 %v691
    %2957 = vmatmul.f32.gmra.mxu0 %v2752
    %v2958 = vpop.f32.mrf.mxu0
    %v2959 = vadd.f32 %v2939, %v2958
    %2960 = vdwg.mxu0
    %2961 = vmatpush.msra.mxu0 %v684
    %2962 = vmatpush.msra.mxu0 %v676
    %2963 = vmatpush.msra.mxu0 %v668
    %2964 = vmatpush.msra.mxu0 %v660
    %2965 = vmatpush.msra.mxu0 %v652
    %2966 = vmatpush.msra.mxu0 %v644
    %2967 = vmatpush.msra.mxu0 %v636
    %2968 = vmatpush.msra.mxu0 %v628
    %2969 = vmatpush.msra.mxu0 %v620
    %2970 = vmatpush.msra.mxu0 %v612
    %2971 = vmatpush.msra.mxu0 %v604
    %2972 = vmatpush.msra.mxu0 %v596
    %2973 = vmatpush.msra.mxu0 %v588
    %2974 = vmatpush.msra.mxu0 %v580
    %2975 = vmatpush.msra.mxu0 %v572
    %2976 = vmatpush.msra.mxu0 %v564
    %2977 = vmatmul.f32.gmra.mxu0 %v2751
    %v2978 = vpop.f32.mrf.mxu0
    %v2979 = vadd.f32 0.0, %v2978
    %2980 = vdwg.mxu0
    %2981 = vmatpush.msra.mxu0 %v812
    %2982 = vmatpush.msra.mxu0 %v804
    %2983 = vmatpush.msra.mxu0 %v796
    %2984 = vmatpush.msra.mxu0 %v788
    %2985 = vmatpush.msra.mxu0 %v780
    %2986 = vmatpush.msra.mxu0 %v772
    %2987 = vmatpush.msra.mxu0 %v764
    %2988 = vmatpush.msra.mxu0 %v756
    %2989 = vmatpush.msra.mxu0 %v748
    %2990 = vmatpush.msra.mxu0 %v740
    %2991 = vmatpush.msra.mxu0 %v732
    %2992 = vmatpush.msra.mxu0 %v724
    %2993 = vmatpush.msra.mxu0 %v716
    %2994 = vmatpush.msra.mxu0 %v708
    %2995 = vmatpush.msra.mxu0 %v700
    %2996 = vmatpush.msra.mxu0 %v692
    %2997 = vmatmul.f32.gmra.mxu0 %v2752
    %v2998 = vpop.f32.mrf.mxu0
    %v2999 = vadd.f32 %v2979, %v2998
    %3000 = vdwg.mxu0
    %3001 = vmatpush.msra.mxu0 %v685
    %3002 = vmatpush.msra.mxu0 %v677
    %3003 = vmatpush.msra.mxu0 %v669
    %3004 = vmatpush.msra.mxu0 %v661
    %3005 = vmatpush.msra.mxu0 %v653
    %3006 = vmatpush.msra.mxu0 %v645
    %3007 = vmatpush.msra.mxu0 %v637
    %3008 = vmatpush.msra.mxu0 %v629
    %3009 = vmatpush.msra.mxu0 %v621
    %3010 = vmatpush.msra.mxu0 %v613
    %3011 = vmatpush.msra.mxu0 %v605
    %3012 = vmatpush.msra.mxu0 %v597
    %3013 = vmatpush.msra.mxu0 %v589
    %3014 = vmatpush.msra.mxu0 %v581
    %3015 = vmatpush.msra.mxu0 %v573
    %3016 = vmatpush.msra.mxu0 %v565
    %3017 = vmatmul.f32.gmra.mxu0 %v2751
    %v3018 = vpop.f32.mrf.mxu0
    %v3019 = vadd.f32 0.0, %v3018
    %3020 = vdwg.mxu0
    %3021 = vmatpush.msra.mxu0 %v813
    %3022 = vmatpush.msra.mxu0 %v805
    %3023 = vmatpush.msra.mxu0 %v797
    %3024 = vmatpush.msra.mxu0 %v789
    %3025 = vmatpush.msra.mxu0 %v781
    %3026 = vmatpush.msra.mxu0 %v773
    %3027 = vmatpush.msra.mxu0 %v765
    %3028 = vmatpush.msra.mxu0 %v757
    %3029 = vmatpush.msra.mxu0 %v749
    %3030 = vmatpush.msra.mxu0 %v741
    %3031 = vmatpush.msra.mxu0 %v733
    %3032 = vmatpush.msra.mxu0 %v725
    %3033 = vmatpush.msra.mxu0 %v717
    %3034 = vmatpush.msra.mxu0 %v709
    %3035 = vmatpush.msra.mxu0 %v701
    %3036 = vmatpush.msra.mxu0 %v693
    %3037 = vmatmul.f32.gmra.mxu0 %v2752
    %v3038 = vpop.f32.mrf.mxu0
    %v3039 = vadd.f32 %v3019, %v3038
    %3040 = vdwg.mxu0
    %3041 = vmatpush.msra.mxu0 %v686
    %3042 = vmatpush.msra.mxu0 %v678
    %3043 = vmatpush.msra.mxu0 %v670
    %3044 = vmatpush.msra.mxu0 %v662
    %3045 = vmatpush.msra.mxu0 %v654
    %3046 = vmatpush.msra.mxu0 %v646
    %3047 = vmatpush.msra.mxu0 %v638
    %3048 = vmatpush.msra.mxu0 %v630
    %3049 = vmatpush.msra.mxu0 %v622
    %3050 = vmatpush.msra.mxu0 %v614
    %3051 = vmatpush.msra.mxu0 %v606
    %3052 = vmatpush.msra.mxu0 %v598
    %3053 = vmatpush.msra.mxu0 %v590
    %3054 = vmatpush.msra.mxu0 %v582
    %3055 = vmatpush.msra.mxu0 %v574
    %3056 = vmatpush.msra.mxu0 %v566
    %3057 = vmatmul.f32.gmra.mxu0 %v2751
    %v3058 = vpop.f32.mrf.mxu0
    %v3059 = vadd.f32 0.0, %v3058
    %3060 = vdwg.mxu0
    %3061 = vmatpush.msra.mxu0 %v814
    %3062 = vmatpush.msra.mxu0 %v806
    %3063 = vmatpush.msra.mxu0 %v798
    %3064 = vmatpush.msra.mxu0 %v790
    %3065 = vmatpush.msra.mxu0 %v782
    %3066 = vmatpush.msra.mxu0 %v774
    %3067 = vmatpush.msra.mxu0 %v766
    %3068 = vmatpush.msra.mxu0 %v758
    %3069 = vmatpush.msra.mxu0 %v750
    %3070 = vmatpush.msra.mxu0 %v742
    %3071 = vmatpush.msra.mxu0 %v734
    %3072 = vmatpush.msra.mxu0 %v726
    %3073 = vmatpush.msra.mxu0 %v718
    %3074 = vmatpush.msra.mxu0 %v710
    %3075 = vmatpush.msra.mxu0 %v702
    %3076 = vmatpush.msra.mxu0 %v694
    %3077 = vmatmul.f32.gmra.mxu0 %v2752
    %v3078 = vpop.f32.mrf.mxu0
    %v3079 = vadd.f32 %v3059, %v3078
    %3080 = vdwg.mxu0
    %v3081 = vadd.f32 %v2753, %v2799
    %v3082 = vadd.f32 %v2754, %v2839
    %v3083 = vadd.f32 %v2755, %v2879
    %v3084 = vadd.f32 %v2756, %v2919
    %v3085 = vadd.f32 %v2757, %v2959
    %v3086 = vadd.f32 %v2758, %v2999
    %v3087 = vadd.f32 %v2759, %v3039
    %v3088 = vadd.f32 %v2760, %v3079
    %v3089 = vxor.u32 %v3081, 2147483648
    %v3090 = vxor.u32 %v3082, 2147483648
    %v3091 = vxor.u32 %v3083, 2147483648
    %v3092 = vxor.u32 %v3084, 2147483648
    %v3093 = vxor.u32 %v3085, 2147483648
    %v3094 = vxor.u32 %v3086, 2147483648
    %v3095 = vmul.f32 %v3089, 1.442695
    %v3096 = vpow.pop %v3095
    %v3097 = vmul.f32 %v3090, 1.442695
    %v3098 = vpow.pop %v3097
    %v3099 = vmul.f32 %v3091, 1.442695
    %v3100 = vpow.pop %v3099
    %v3101 = vmul.f32 %v3092, 1.442695
    %v3102 = vpow.pop %v3101
    %v3103 = vmul.f32 %v3093, 1.442695
    %v3104 = vpow.pop %v3103
    %v3105 = vmul.f32 %v3094, 1.442695
    %v3106 = vpow.pop %v3105
    %v3107 = vadd.f32 %v3096, 1.0
    %v3108 = vadd.f32 %v3098, 1.0
    %v3109 = vadd.f32 %v3100, 1.0
    %v3110 = vadd.f32 %v3102, 1.0
    %v3111 = vadd.f32 %v3104, 1.0
    %v3112 = vadd.f32 %v3106, 1.0
    %v3113 = vrcp.pop %v3107
    %v3114 = vmul.f32 %v3107, %v3113
    %v3115 = vsub.f32 1.0, %v3114
    %v3116 = vmul.f32 %v3113, %v3115
    %v3117 = vadd.f32 %v3113, %v3116
    %vm3118 = vweird.f32 %v3107
    %vm3119 = vweird.f32 %v3113
    %vm3120 = vmor %vm3118, %vm3119
    %v3121 = vsel %vm3120, %v3113, %v3117
    %v3122 = vand.u32 2147483647, %v3107
    %vm3123 = vcmp.eq.f32.partialorder %v3122, 8.507059e+37
    %v3124 = vand.u32 %v3107, 2147483648
    %v3125 = vor.u32 1.1754944e-38, %v3124
    %v3126 = vsel %vm3123, %v3125, %v3121
    %v3127 = vmul.f32 1.0, %v3126
    %v3128 = vrcp.pop %v3108
    %v3129 = vmul.f32 %v3108, %v3128
    %v3130 = vsub.f32 1.0, %v3129
    %v3131 = vmul.f32 %v3128, %v3130
    %v3132 = vadd.f32 %v3128, %v3131
    %vm3133 = vweird.f32 %v3108
    %vm3134 = vweird.f32 %v3128
    %vm3135 = vmor %vm3133, %vm3134
    %v3136 = vsel %vm3135, %v3128, %v3132
    %v3137 = vand.u32 2147483647, %v3108
    %vm3138 = vcmp.eq.f32.partialorder %v3137, 8.507059e+37
    %v3139 = vand.u32 %v3108, 2147483648
    %v3140 = vor.u32 1.1754944e-38, %v3139
    %v3141 = vsel %vm3138, %v3140, %v3136
    %v3142 = vmul.f32 1.0, %v3141
    %v3143 = vrcp.pop %v3109
    %v3144 = vmul.f32 %v3109, %v3143
    %v3145 = vsub.f32 1.0, %v3144
    %v3146 = vmul.f32 %v3143, %v3145
    %v3147 = vadd.f32 %v3143, %v3146
    %vm3148 = vweird.f32 %v3109
    %vm3149 = vweird.f32 %v3143
    %vm3150 = vmor %vm3148, %vm3149
    %v3151 = vsel %vm3150, %v3143, %v3147
    %v3152 = vand.u32 2147483647, %v3109
    %vm3153 = vcmp.eq.f32.partialorder %v3152, 8.507059e+37
    %v3154 = vand.u32 %v3109, 2147483648
    %v3155 = vor.u32 1.1754944e-38, %v3154
    %v3156 = vsel %vm3153, %v3155, %v3151
    %v3157 = vmul.f32 1.0, %v3156
    %v3158 = vrcp.pop %v3110
    %v3159 = vmul.f32 %v3110, %v3158
    %v3160 = vsub.f32 1.0, %v3159
    %v3161 = vmul.f32 %v3158, %v3160
    %v3162 = vadd.f32 %v3158, %v3161
    %vm3163 = vweird.f32 %v3110
    %vm3164 = vweird.f32 %v3158
    %vm3165 = vmor %vm3163, %vm3164
    %v3166 = vsel %vm3165, %v3158, %v3162
    %v3167 = vand.u32 2147483647, %v3110
    %vm3168 = vcmp.eq.f32.partialorder %v3167, 8.507059e+37
    %v3169 = vand.u32 %v3110, 2147483648
    %v3170 = vor.u32 1.1754944e-38, %v3169
    %v3171 = vsel %vm3168, %v3170, %v3166
    %v3172 = vmul.f32 1.0, %v3171
    %v3173 = vrcp.pop %v3111
    %v3174 = vmul.f32 %v3111, %v3173
    %v3175 = vsub.f32 1.0, %v3174
    %v3176 = vmul.f32 %v3173, %v3175
    %v3177 = vadd.f32 %v3173, %v3176
    %vm3178 = vweird.f32 %v3111
    %vm3179 = vweird.f32 %v3173
    %vm3180 = vmor %vm3178, %vm3179
    %v3181 = vsel %vm3180, %v3173, %v3177
    %v3182 = vand.u32 2147483647, %v3111
    %vm3183 = vcmp.eq.f32.partialorder %v3182, 8.507059e+37
    %v3184 = vand.u32 %v3111, 2147483648
    %v3185 = vor.u32 1.1754944e-38, %v3184
    %v3186 = vsel %vm3183, %v3185, %v3181
    %v3187 = vmul.f32 1.0, %v3186
    %v3188 = vrcp.pop %v3112
    %v3189 = vmul.f32 %v3112, %v3188
    %v3190 = vsub.f32 1.0, %v3189
    %v3191 = vmul.f32 %v3188, %v3190
    %v3192 = vadd.f32 %v3188, %v3191
    %vm3193 = vweird.f32 %v3112
    %vm3194 = vweird.f32 %v3188
    %vm3195 = vmor %vm3193, %vm3194
    %v3196 = vsel %vm3195, %v3188, %v3192
    %v3197 = vand.u32 2147483647, %v3112
    %vm3198 = vcmp.eq.f32.partialorder %v3197, 8.507059e+37
    %v3199 = vand.u32 %v3112, 2147483648
    %v3200 = vor.u32 1.1754944e-38, %v3199
    %v3201 = vsel %vm3198, %v3200, %v3196
    %v3202 = vmul.f32 1.0, %v3201
    %v3203 = vtanh.pop %v3087
    %v3204 = vtanh.pop %v3088
    %v3205 = vmul.f32 %v3157, %v2747
    %v3206 = vmul.f32 %v3172, %v2748
    %v3207 = vmul.f32 %v3127, %v3203
    %v3208 = vmul.f32 %v3142, %v3204
    %v3209 = vadd.f32 %v3205, %v3207
    %v3210 = vadd.f32 %v3206, %v3208
    %v3211 = vtanh.pop %v3209
    %v3212 = vtanh.pop %v3210
    %v3213 = vmul.f32 %v3187, %v3211
    %v3214 = vmul.f32 %v3202, %v3212
    %v3215 = vld [vmem:[#allocation2 + $0x180] sm:$0xff]
    %v3216 = vld [vmem:[#allocation2 + $0x188] sm:$0xff]
    %v3217 = vld [vmem:[#allocation2 + $0x190] sm:$0xff]
    %v3218 = vld [vmem:[#allocation2 + $0x198] sm:$0xff]
    %v3219 = vld [vmem:[#allocation2 + $0x1a0] sm:$0xff]
    %v3220 = vld [vmem:[#allocation2 + $0x1a8] sm:$0xff]
    %v3221 = vld [vmem:[#allocation2 + $0x1b0] sm:$0xff]
    %v3222 = vld [vmem:[#allocation2 + $0x1b8] sm:$0xff]
    %3223 = vmatpush.msra.mxu0 %v679
    %3224 = vmatpush.msra.mxu0 %v671
    %3225 = vmatpush.msra.mxu0 %v663
    %3226 = vmatpush.msra.mxu0 %v655
    %3227 = vmatpush.msra.mxu0 %v647
    %3228 = vmatpush.msra.mxu0 %v639
    %3229 = vmatpush.msra.mxu0 %v631
    %3230 = vmatpush.msra.mxu0 %v623
    %3231 = vmatpush.msra.mxu0 %v615
    %3232 = vmatpush.msra.mxu0 %v607
    %3233 = vmatpush.msra.mxu0 %v599
    %3234 = vmatpush.msra.mxu0 %v591
    %3235 = vmatpush.msra.mxu0 %v583
    %3236 = vmatpush.msra.mxu0 %v575
    %3237 = vmatpush.msra.mxu0 %v567
    %3238 = vmatpush.msra.mxu0 %v559
    %3239 = vmatmul.f32.gmra.mxu0 %v3213
    %v3240 = vpop.f32.mrf.mxu0
    %v3241 = vadd.f32 0.0, %v3240
    %3242 = vdwg.mxu0
    %3243 = vmatpush.msra.mxu0 %v807
    %3244 = vmatpush.msra.mxu0 %v799
    %3245 = vmatpush.msra.mxu0 %v791
    %3246 = vmatpush.msra.mxu0 %v783
    %3247 = vmatpush.msra.mxu0 %v775
    %3248 = vmatpush.msra.mxu0 %v767
    %3249 = vmatpush.msra.mxu0 %v759
    %3250 = vmatpush.msra.mxu0 %v751
    %3251 = vmatpush.msra.mxu0 %v743
    %3252 = vmatpush.msra.mxu0 %v735
    %3253 = vmatpush.msra.mxu0 %v727
    %3254 = vmatpush.msra.mxu0 %v719
    %3255 = vmatpush.msra.mxu0 %v711
    %3256 = vmatpush.msra.mxu0 %v703
    %3257 = vmatpush.msra.mxu0 %v695
    %3258 = vmatpush.msra.mxu0 %v687
    %3259 = vmatmul.f32.gmra.mxu0 %v3214
    %v3260 = vpop.f32.mrf.mxu0
    %v3261 = vadd.f32 %v3241, %v3260
    %3262 = vdwg.mxu0
    %3263 = vmatpush.msra.mxu0 %v680
    %3264 = vmatpush.msra.mxu0 %v672
    %3265 = vmatpush.msra.mxu0 %v664
    %3266 = vmatpush.msra.mxu0 %v656
    %3267 = vmatpush.msra.mxu0 %v648
    %3268 = vmatpush.msra.mxu0 %v640
    %3269 = vmatpush.msra.mxu0 %v632
    %3270 = vmatpush.msra.mxu0 %v624
    %3271 = vmatpush.msra.mxu0 %v616
    %3272 = vmatpush.msra.mxu0 %v608
    %3273 = vmatpush.msra.mxu0 %v600
    %3274 = vmatpush.msra.mxu0 %v592
    %3275 = vmatpush.msra.mxu0 %v584
    %3276 = vmatpush.msra.mxu0 %v576
    %3277 = vmatpush.msra.mxu0 %v568
    %3278 = vmatpush.msra.mxu0 %v560
    %3279 = vmatmul.f32.gmra.mxu0 %v3213
    %v3280 = vpop.f32.mrf.mxu0
    %v3281 = vadd.f32 0.0, %v3280
    %3282 = vdwg.mxu0
    %3283 = vmatpush.msra.mxu0 %v808
    %3284 = vmatpush.msra.mxu0 %v800
    %3285 = vmatpush.msra.mxu0 %v792
    %3286 = vmatpush.msra.mxu0 %v784
    %3287 = vmatpush.msra.mxu0 %v776
    %3288 = vmatpush.msra.mxu0 %v768
    %3289 = vmatpush.msra.mxu0 %v760
    %3290 = vmatpush.msra.mxu0 %v752
    %3291 = vmatpush.msra.mxu0 %v744
    %3292 = vmatpush.msra.mxu0 %v736
    %3293 = vmatpush.msra.mxu0 %v728
    %3294 = vmatpush.msra.mxu0 %v720
    %3295 = vmatpush.msra.mxu0 %v712
    %3296 = vmatpush.msra.mxu0 %v704
    %3297 = vmatpush.msra.mxu0 %v696
    %3298 = vmatpush.msra.mxu0 %v688
    %3299 = vmatmul.f32.gmra.mxu0 %v3214
    %v3300 = vpop.f32.mrf.mxu0
    %v3301 = vadd.f32 %v3281, %v3300
    %3302 = vdwg.mxu0
    %3303 = vmatpush.msra.mxu0 %v681
    %3304 = vmatpush.msra.mxu0 %v673
    %3305 = vmatpush.msra.mxu0 %v665
    %3306 = vmatpush.msra.mxu0 %v657
    %3307 = vmatpush.msra.mxu0 %v649
    %3308 = vmatpush.msra.mxu0 %v641
    %3309 = vmatpush.msra.mxu0 %v633
    %3310 = vmatpush.msra.mxu0 %v625
    %3311 = vmatpush.msra.mxu0 %v617
    %3312 = vmatpush.msra.mxu0 %v609
    %3313 = vmatpush.msra.mxu0 %v601
    %3314 = vmatpush.msra.mxu0 %v593
    %3315 = vmatpush.msra.mxu0 %v585
    %3316 = vmatpush.msra.mxu0 %v577
    %3317 = vmatpush.msra.mxu0 %v569
    %3318 = vmatpush.msra.mxu0 %v561
    %3319 = vmatmul.f32.gmra.mxu0 %v3213
    %v3320 = vpop.f32.mrf.mxu0
    %v3321 = vadd.f32 0.0, %v3320
    %3322 = vdwg.mxu0
    %3323 = vmatpush.msra.mxu0 %v809
    %3324 = vmatpush.msra.mxu0 %v801
    %3325 = vmatpush.msra.mxu0 %v793
    %3326 = vmatpush.msra.mxu0 %v785
    %3327 = vmatpush.msra.mxu0 %v777
    %3328 = vmatpush.msra.mxu0 %v769
    %3329 = vmatpush.msra.mxu0 %v761
    %3330 = vmatpush.msra.mxu0 %v753
    %3331 = vmatpush.msra.mxu0 %v745
    %3332 = vmatpush.msra.mxu0 %v737
    %3333 = vmatpush.msra.mxu0 %v729
    %3334 = vmatpush.msra.mxu0 %v721
    %3335 = vmatpush.msra.mxu0 %v713
    %3336 = vmatpush.msra.mxu0 %v705
    %3337 = vmatpush.msra.mxu0 %v697
    %3338 = vmatpush.msra.mxu0 %v689
    %3339 = vmatmul.f32.gmra.mxu0 %v3214
    %v3340 = vpop.f32.mrf.mxu0
    %v3341 = vadd.f32 %v3321, %v3340
    %3342 = vdwg.mxu0
    %3343 = vmatpush.msra.mxu0 %v682
    %3344 = vmatpush.msra.mxu0 %v674
    %3345 = vmatpush.msra.mxu0 %v666
    %3346 = vmatpush.msra.mxu0 %v658
    %3347 = vmatpush.msra.mxu0 %v650
    %3348 = vmatpush.msra.mxu0 %v642
    %3349 = vmatpush.msra.mxu0 %v634
    %3350 = vmatpush.msra.mxu0 %v626
    %3351 = vmatpush.msra.mxu0 %v618
    %3352 = vmatpush.msra.mxu0 %v610
    %3353 = vmatpush.msra.mxu0 %v602
    %3354 = vmatpush.msra.mxu0 %v594
    %3355 = vmatpush.msra.mxu0 %v586
    %3356 = vmatpush.msra.mxu0 %v578
    %3357 = vmatpush.msra.mxu0 %v570
    %3358 = vmatpush.msra.mxu0 %v562
    %3359 = vmatmul.f32.gmra.mxu0 %v3213
    %v3360 = vpop.f32.mrf.mxu0
    %v3361 = vadd.f32 0.0, %v3360
    %3362 = vdwg.mxu0
    %3363 = vmatpush.msra.mxu0 %v810
    %3364 = vmatpush.msra.mxu0 %v802
    %3365 = vmatpush.msra.mxu0 %v794
    %3366 = vmatpush.msra.mxu0 %v786
    %3367 = vmatpush.msra.mxu0 %v778
    %3368 = vmatpush.msra.mxu0 %v770
    %3369 = vmatpush.msra.mxu0 %v762
    %3370 = vmatpush.msra.mxu0 %v754
    %3371 = vmatpush.msra.mxu0 %v746
    %3372 = vmatpush.msra.mxu0 %v738
    %3373 = vmatpush.msra.mxu0 %v730
    %3374 = vmatpush.msra.mxu0 %v722
    %3375 = vmatpush.msra.mxu0 %v714
    %3376 = vmatpush.msra.mxu0 %v706
    %3377 = vmatpush.msra.mxu0 %v698
    %3378 = vmatpush.msra.mxu0 %v690
    %3379 = vmatmul.f32.gmra.mxu0 %v3214
    %v3380 = vpop.f32.mrf.mxu0
    %v3381 = vadd.f32 %v3361, %v3380
    %3382 = vdwg.mxu0
    %3383 = vmatpush.msra.mxu0 %v683
    %3384 = vmatpush.msra.mxu0 %v675
    %3385 = vmatpush.msra.mxu0 %v667
    %3386 = vmatpush.msra.mxu0 %v659
    %3387 = vmatpush.msra.mxu0 %v651
    %3388 = vmatpush.msra.mxu0 %v643
    %3389 = vmatpush.msra.mxu0 %v635
    %3390 = vmatpush.msra.mxu0 %v627
    %3391 = vmatpush.msra.mxu0 %v619
    %3392 = vmatpush.msra.mxu0 %v611
    %3393 = vmatpush.msra.mxu0 %v603
    %3394 = vmatpush.msra.mxu0 %v595
    %3395 = vmatpush.msra.mxu0 %v587
    %3396 = vmatpush.msra.mxu0 %v579
    %3397 = vmatpush.msra.mxu0 %v571
    %3398 = vmatpush.msra.mxu0 %v563
    %3399 = vmatmul.f32.gmra.mxu0 %v3213
    %v3400 = vpop.f32.mrf.mxu0
    %v3401 = vadd.f32 0.0, %v3400
    %3402 = vdwg.mxu0
    %3403 = vmatpush.msra.mxu0 %v811
    %3404 = vmatpush.msra.mxu0 %v803
    %3405 = vmatpush.msra.mxu0 %v795
    %3406 = vmatpush.msra.mxu0 %v787
    %3407 = vmatpush.msra.mxu0 %v779
    %3408 = vmatpush.msra.mxu0 %v771
    %3409 = vmatpush.msra.mxu0 %v763
    %3410 = vmatpush.msra.mxu0 %v755
    %3411 = vmatpush.msra.mxu0 %v747
    %3412 = vmatpush.msra.mxu0 %v739
    %3413 = vmatpush.msra.mxu0 %v731
    %3414 = vmatpush.msra.mxu0 %v723
    %3415 = vmatpush.msra.mxu0 %v715
    %3416 = vmatpush.msra.mxu0 %v707
    %3417 = vmatpush.msra.mxu0 %v699
    %3418 = vmatpush.msra.mxu0 %v691
    %3419 = vmatmul.f32.gmra.mxu0 %v3214
    %v3420 = vpop.f32.mrf.mxu0
    %v3421 = vadd.f32 %v3401, %v3420
    %3422 = vdwg.mxu0
    %3423 = vmatpush.msra.mxu0 %v684
    %3424 = vmatpush.msra.mxu0 %v676
    %3425 = vmatpush.msra.mxu0 %v668
    %3426 = vmatpush.msra.mxu0 %v660
    %3427 = vmatpush.msra.mxu0 %v652
    %3428 = vmatpush.msra.mxu0 %v644
    %3429 = vmatpush.msra.mxu0 %v636
    %3430 = vmatpush.msra.mxu0 %v628
    %3431 = vmatpush.msra.mxu0 %v620
    %3432 = vmatpush.msra.mxu0 %v612
    %3433 = vmatpush.msra.mxu0 %v604
    %3434 = vmatpush.msra.mxu0 %v596
    %3435 = vmatpush.msra.mxu0 %v588
    %3436 = vmatpush.msra.mxu0 %v580
    %3437 = vmatpush.msra.mxu0 %v572
    %3438 = vmatpush.msra.mxu0 %v564
    %3439 = vmatmul.f32.gmra.mxu0 %v3213
    %v3440 = vpop.f32.mrf.mxu0
    %v3441 = vadd.f32 0.0, %v3440
    %3442 = vdwg.mxu0
    %3443 = vmatpush.msra.mxu0 %v812
    %3444 = vmatpush.msra.mxu0 %v804
    %3445 = vmatpush.msra.mxu0 %v796
    %3446 = vmatpush.msra.mxu0 %v788
    %3447 = vmatpush.msra.mxu0 %v780
    %3448 = vmatpush.msra.mxu0 %v772
    %3449 = vmatpush.msra.mxu0 %v764
    %3450 = vmatpush.msra.mxu0 %v756
    %3451 = vmatpush.msra.mxu0 %v748
    %3452 = vmatpush.msra.mxu0 %v740
    %3453 = vmatpush.msra.mxu0 %v732
    %3454 = vmatpush.msra.mxu0 %v724
    %3455 = vmatpush.msra.mxu0 %v716
    %3456 = vmatpush.msra.mxu0 %v708
    %3457 = vmatpush.msra.mxu0 %v700
    %3458 = vmatpush.msra.mxu0 %v692
    %3459 = vmatmul.f32.gmra.mxu0 %v3214
    %v3460 = vpop.f32.mrf.mxu0
    %v3461 = vadd.f32 %v3441, %v3460
    %3462 = vdwg.mxu0
    %3463 = vmatpush.msra.mxu0 %v685
    %3464 = vmatpush.msra.mxu0 %v677
    %3465 = vmatpush.msra.mxu0 %v669
    %3466 = vmatpush.msra.mxu0 %v661
    %3467 = vmatpush.msra.mxu0 %v653
    %3468 = vmatpush.msra.mxu0 %v645
    %3469 = vmatpush.msra.mxu0 %v637
    %3470 = vmatpush.msra.mxu0 %v629
    %3471 = vmatpush.msra.mxu0 %v621
    %3472 = vmatpush.msra.mxu0 %v613
    %3473 = vmatpush.msra.mxu0 %v605
    %3474 = vmatpush.msra.mxu0 %v597
    %3475 = vmatpush.msra.mxu0 %v589
    %3476 = vmatpush.msra.mxu0 %v581
    %3477 = vmatpush.msra.mxu0 %v573
    %3478 = vmatpush.msra.mxu0 %v565
    %3479 = vmatmul.f32.gmra.mxu0 %v3213
    %v3480 = vpop.f32.mrf.mxu0
    %v3481 = vadd.f32 0.0, %v3480
    %3482 = vdwg.mxu0
    %3483 = vmatpush.msra.mxu0 %v813
    %3484 = vmatpush.msra.mxu0 %v805
    %3485 = vmatpush.msra.mxu0 %v797
    %3486 = vmatpush.msra.mxu0 %v789
    %3487 = vmatpush.msra.mxu0 %v781
    %3488 = vmatpush.msra.mxu0 %v773
    %3489 = vmatpush.msra.mxu0 %v765
    %3490 = vmatpush.msra.mxu0 %v757
    %3491 = vmatpush.msra.mxu0 %v749
    %3492 = vmatpush.msra.mxu0 %v741
    %3493 = vmatpush.msra.mxu0 %v733
    %3494 = vmatpush.msra.mxu0 %v725
    %3495 = vmatpush.msra.mxu0 %v717
    %3496 = vmatpush.msra.mxu0 %v709
    %3497 = vmatpush.msra.mxu0 %v701
    %3498 = vmatpush.msra.mxu0 %v693
    %3499 = vmatmul.f32.gmra.mxu0 %v3214
    %v3500 = vpop.f32.mrf.mxu0
    %v3501 = vadd.f32 %v3481, %v3500
    %3502 = vdwg.mxu0
    %3503 = vmatpush.msra.mxu0 %v686
    %3504 = vmatpush.msra.mxu0 %v678
    %3505 = vmatpush.msra.mxu0 %v670
    %3506 = vmatpush.msra.mxu0 %v662
    %3507 = vmatpush.msra.mxu0 %v654
    %3508 = vmatpush.msra.mxu0 %v646
    %3509 = vmatpush.msra.mxu0 %v638
    %3510 = vmatpush.msra.mxu0 %v630
    %3511 = vmatpush.msra.mxu0 %v622
    %3512 = vmatpush.msra.mxu0 %v614
    %3513 = vmatpush.msra.mxu0 %v606
    %3514 = vmatpush.msra.mxu0 %v598
    %3515 = vmatpush.msra.mxu0 %v590
    %3516 = vmatpush.msra.mxu0 %v582
    %3517 = vmatpush.msra.mxu0 %v574
    %3518 = vmatpush.msra.mxu0 %v566
    %3519 = vmatmul.f32.gmra.mxu0 %v3213
    %v3520 = vpop.f32.mrf.mxu0
    %v3521 = vadd.f32 0.0, %v3520
    %3522 = vdwg.mxu0
    %3523 = vmatpush.msra.mxu0 %v814
    %3524 = vmatpush.msra.mxu0 %v806
    %3525 = vmatpush.msra.mxu0 %v798
    %3526 = vmatpush.msra.mxu0 %v790
    %3527 = vmatpush.msra.mxu0 %v782
    %3528 = vmatpush.msra.mxu0 %v774
    %3529 = vmatpush.msra.mxu0 %v766
    %3530 = vmatpush.msra.mxu0 %v758
    %3531 = vmatpush.msra.mxu0 %v750
    %3532 = vmatpush.msra.mxu0 %v742
    %3533 = vmatpush.msra.mxu0 %v734
    %3534 = vmatpush.msra.mxu0 %v726
    %3535 = vmatpush.msra.mxu0 %v718
    %3536 = vmatpush.msra.mxu0 %v710
    %3537 = vmatpush.msra.mxu0 %v702
    %3538 = vmatpush.msra.mxu0 %v694
    %3539 = vmatmul.f32.gmra.mxu0 %v3214
    %v3540 = vpop.f32.mrf.mxu0
    %v3541 = vadd.f32 %v3521, %v3540
    %3542 = vdwg.mxu0
    %v3543 = vadd.f32 %v3215, %v3261
    %v3544 = vadd.f32 %v3216, %v3301
    %v3545 = vadd.f32 %v3217, %v3341
    %v3546 = vadd.f32 %v3218, %v3381
    %v3547 = vadd.f32 %v3219, %v3421
    %v3548 = vadd.f32 %v3220, %v3461
    %v3549 = vadd.f32 %v3221, %v3501
    %v3550 = vadd.f32 %v3222, %v3541
    %v3551 = vxor.u32 %v3543, 2147483648
    %v3552 = vxor.u32 %v3544, 2147483648
    %v3553 = vxor.u32 %v3545, 2147483648
    %v3554 = vxor.u32 %v3546, 2147483648
    %v3555 = vxor.u32 %v3547, 2147483648
    %v3556 = vxor.u32 %v3548, 2147483648
    %v3557 = vmul.f32 %v3551, 1.442695
    %v3558 = vpow.pop %v3557
    %v3559 = vmul.f32 %v3552, 1.442695
    %v3560 = vpow.pop %v3559
    %v3561 = vmul.f32 %v3553, 1.442695
    %v3562 = vpow.pop %v3561
    %v3563 = vmul.f32 %v3554, 1.442695
    %v3564 = vpow.pop %v3563
    %v3565 = vmul.f32 %v3555, 1.442695
    %v3566 = vpow.pop %v3565
    %v3567 = vmul.f32 %v3556, 1.442695
    %v3568 = vpow.pop %v3567
    %v3569 = vadd.f32 %v3558, 1.0
    %v3570 = vadd.f32 %v3560, 1.0
    %v3571 = vadd.f32 %v3562, 1.0
    %v3572 = vadd.f32 %v3564, 1.0
    %v3573 = vadd.f32 %v3566, 1.0
    %v3574 = vadd.f32 %v3568, 1.0
    %v3575 = vrcp.pop %v3569
    %v3576 = vmul.f32 %v3569, %v3575
    %v3577 = vsub.f32 1.0, %v3576
    %v3578 = vmul.f32 %v3575, %v3577
    %v3579 = vadd.f32 %v3575, %v3578
    %vm3580 = vweird.f32 %v3569
    %vm3581 = vweird.f32 %v3575
    %vm3582 = vmor %vm3580, %vm3581
    %v3583 = vsel %vm3582, %v3575, %v3579
    %v3584 = vand.u32 2147483647, %v3569
    %vm3585 = vcmp.eq.f32.partialorder %v3584, 8.507059e+37
    %v3586 = vand.u32 %v3569, 2147483648
    %v3587 = vor.u32 1.1754944e-38, %v3586
    %v3588 = vsel %vm3585, %v3587, %v3583
    %v3589 = vmul.f32 1.0, %v3588
    %v3590 = vrcp.pop %v3570
    %v3591 = vmul.f32 %v3570, %v3590
    %v3592 = vsub.f32 1.0, %v3591
    %v3593 = vmul.f32 %v3590, %v3592
    %v3594 = vadd.f32 %v3590, %v3593
    %vm3595 = vweird.f32 %v3570
    %vm3596 = vweird.f32 %v3590
    %vm3597 = vmor %vm3595, %vm3596
    %v3598 = vsel %vm3597, %v3590, %v3594
    %v3599 = vand.u32 2147483647, %v3570
    %vm3600 = vcmp.eq.f32.partialorder %v3599, 8.507059e+37
    %v3601 = vand.u32 %v3570, 2147483648
    %v3602 = vor.u32 1.1754944e-38, %v3601
    %v3603 = vsel %vm3600, %v3602, %v3598
    %v3604 = vmul.f32 1.0, %v3603
    %v3605 = vrcp.pop %v3571
    %v3606 = vmul.f32 %v3571, %v3605
    %v3607 = vsub.f32 1.0, %v3606
    %v3608 = vmul.f32 %v3605, %v3607
    %v3609 = vadd.f32 %v3605, %v3608
    %vm3610 = vweird.f32 %v3571
    %vm3611 = vweird.f32 %v3605
    %vm3612 = vmor %vm3610, %vm3611
    %v3613 = vsel %vm3612, %v3605, %v3609
    %v3614 = vand.u32 2147483647, %v3571
    %vm3615 = vcmp.eq.f32.partialorder %v3614, 8.507059e+37
    %v3616 = vand.u32 %v3571, 2147483648
    %v3617 = vor.u32 1.1754944e-38, %v3616
    %v3618 = vsel %vm3615, %v3617, %v3613
    %v3619 = vmul.f32 1.0, %v3618
    %v3620 = vrcp.pop %v3572
    %v3621 = vmul.f32 %v3572, %v3620
    %v3622 = vsub.f32 1.0, %v3621
    %v3623 = vmul.f32 %v3620, %v3622
    %v3624 = vadd.f32 %v3620, %v3623
    %vm3625 = vweird.f32 %v3572
    %vm3626 = vweird.f32 %v3620
    %vm3627 = vmor %vm3625, %vm3626
    %v3628 = vsel %vm3627, %v3620, %v3624
    %v3629 = vand.u32 2147483647, %v3572
    %vm3630 = vcmp.eq.f32.partialorder %v3629, 8.507059e+37
    %v3631 = vand.u32 %v3572, 2147483648
    %v3632 = vor.u32 1.1754944e-38, %v3631
    %v3633 = vsel %vm3630, %v3632, %v3628
    %v3634 = vmul.f32 1.0, %v3633
    %v3635 = vrcp.pop %v3573
    %v3636 = vmul.f32 %v3573, %v3635
    %v3637 = vsub.f32 1.0, %v3636
    %v3638 = vmul.f32 %v3635, %v3637
    %v3639 = vadd.f32 %v3635, %v3638
    %vm3640 = vweird.f32 %v3573
    %vm3641 = vweird.f32 %v3635
    %vm3642 = vmor %vm3640, %vm3641
    %v3643 = vsel %vm3642, %v3635, %v3639
    %v3644 = vand.u32 2147483647, %v3573
    %vm3645 = vcmp.eq.f32.partialorder %v3644, 8.507059e+37
    %v3646 = vand.u32 %v3573, 2147483648
    %v3647 = vor.u32 1.1754944e-38, %v3646
    %v3648 = vsel %vm3645, %v3647, %v3643
    %v3649 = vmul.f32 1.0, %v3648
    %v3650 = vrcp.pop %v3574
    %v3651 = vmul.f32 %v3574, %v3650
    %v3652 = vsub.f32 1.0, %v3651
    %v3653 = vmul.f32 %v3650, %v3652
    %v3654 = vadd.f32 %v3650, %v3653
    %vm3655 = vweird.f32 %v3574
    %vm3656 = vweird.f32 %v3650
    %vm3657 = vmor %vm3655, %vm3656
    %v3658 = vsel %vm3657, %v3650, %v3654
    %v3659 = vand.u32 2147483647, %v3574
    %vm3660 = vcmp.eq.f32.partialorder %v3659, 8.507059e+37
    %v3661 = vand.u32 %v3574, 2147483648
    %v3662 = vor.u32 1.1754944e-38, %v3661
    %v3663 = vsel %vm3660, %v3662, %v3658
    %v3664 = vmul.f32 1.0, %v3663
    %v3665 = vtanh.pop %v3549
    %v3666 = vtanh.pop %v3550
    %v3667 = vmul.f32 %v3619, %v3209
    %v3668 = vmul.f32 %v3634, %v3210
    %v3669 = vmul.f32 %v3589, %v3665
    %v3670 = vmul.f32 %v3604, %v3666
    %v3671 = vadd.f32 %v3667, %v3669
    %v3672 = vadd.f32 %v3668, %v3670
    %v3673 = vtanh.pop %v3671
    %v3674 = vtanh.pop %v3672
    %v3675 = vmul.f32 %v3649, %v3673
    %v3676 = vmul.f32 %v3664, %v3674
    %v3677 = vld [vmem:[#allocation2 + $0x1c0] sm:$0xff]
    %v3678 = vld [vmem:[#allocation2 + $0x1c8] sm:$0xff]
    %v3679 = vld [vmem:[#allocation2 + $0x1d0] sm:$0xff]
    %v3680 = vld [vmem:[#allocation2 + $0x1d8] sm:$0xff]
    %v3681 = vld [vmem:[#allocation2 + $0x1e0] sm:$0xff]
    %v3682 = vld [vmem:[#allocation2 + $0x1e8] sm:$0xff]
    %v3683 = vld [vmem:[#allocation2 + $0x1f0] sm:$0xff]
    %v3684 = vld [vmem:[#allocation2 + $0x1f8] sm:$0xff]
    %3685 = vmatpush.msra.mxu0 %v679
    %3686 = vmatpush.msra.mxu0 %v671
    %3687 = vmatpush.msra.mxu0 %v663
    %3688 = vmatpush.msra.mxu0 %v655
    %3689 = vmatpush.msra.mxu0 %v647
    %3690 = vmatpush.msra.mxu0 %v639
    %3691 = vmatpush.msra.mxu0 %v631
    %3692 = vmatpush.msra.mxu0 %v623
    %3693 = vmatpush.msra.mxu0 %v615
    %3694 = vmatpush.msra.mxu0 %v607
    %3695 = vmatpush.msra.mxu0 %v599
    %3696 = vmatpush.msra.mxu0 %v591
    %3697 = vmatpush.msra.mxu0 %v583
    %3698 = vmatpush.msra.mxu0 %v575
    %3699 = vmatpush.msra.mxu0 %v567
    %3700 = vmatpush.msra.mxu0 %v559
    %3701 = vmatmul.f32.gmra.mxu0 %v3675
    %v3702 = vpop.f32.mrf.mxu0
    %v3703 = vadd.f32 0.0, %v3702
    %3704 = vdwg.mxu0
    %3705 = vmatpush.msra.mxu0 %v807
    %3706 = vmatpush.msra.mxu0 %v799
    %3707 = vmatpush.msra.mxu0 %v791
    %3708 = vmatpush.msra.mxu0 %v783
    %3709 = vmatpush.msra.mxu0 %v775
    %3710 = vmatpush.msra.mxu0 %v767
    %3711 = vmatpush.msra.mxu0 %v759
    %3712 = vmatpush.msra.mxu0 %v751
    %3713 = vmatpush.msra.mxu0 %v743
    %3714 = vmatpush.msra.mxu0 %v735
    %3715 = vmatpush.msra.mxu0 %v727
    %3716 = vmatpush.msra.mxu0 %v719
    %3717 = vmatpush.msra.mxu0 %v711
    %3718 = vmatpush.msra.mxu0 %v703
    %3719 = vmatpush.msra.mxu0 %v695
    %3720 = vmatpush.msra.mxu0 %v687
    %3721 = vmatmul.f32.gmra.mxu0 %v3676
    %v3722 = vpop.f32.mrf.mxu0
    %v3723 = vadd.f32 %v3703, %v3722
    %3724 = vdwg.mxu0
    %3725 = vmatpush.msra.mxu0 %v680
    %3726 = vmatpush.msra.mxu0 %v672
    %3727 = vmatpush.msra.mxu0 %v664
    %3728 = vmatpush.msra.mxu0 %v656
    %3729 = vmatpush.msra.mxu0 %v648
    %3730 = vmatpush.msra.mxu0 %v640
    %3731 = vmatpush.msra.mxu0 %v632
    %3732 = vmatpush.msra.mxu0 %v624
    %3733 = vmatpush.msra.mxu0 %v616
    %3734 = vmatpush.msra.mxu0 %v608
    %3735 = vmatpush.msra.mxu0 %v600
    %3736 = vmatpush.msra.mxu0 %v592
    %3737 = vmatpush.msra.mxu0 %v584
    %3738 = vmatpush.msra.mxu0 %v576
    %3739 = vmatpush.msra.mxu0 %v568
    %3740 = vmatpush.msra.mxu0 %v560
    %3741 = vmatmul.f32.gmra.mxu0 %v3675
    %v3742 = vpop.f32.mrf.mxu0
    %v3743 = vadd.f32 0.0, %v3742
    %3744 = vdwg.mxu0
    %3745 = vmatpush.msra.mxu0 %v808
    %3746 = vmatpush.msra.mxu0 %v800
    %3747 = vmatpush.msra.mxu0 %v792
    %3748 = vmatpush.msra.mxu0 %v784
    %3749 = vmatpush.msra.mxu0 %v776
    %3750 = vmatpush.msra.mxu0 %v768
    %3751 = vmatpush.msra.mxu0 %v760
    %3752 = vmatpush.msra.mxu0 %v752
    %3753 = vmatpush.msra.mxu0 %v744
    %3754 = vmatpush.msra.mxu0 %v736
    %3755 = vmatpush.msra.mxu0 %v728
    %3756 = vmatpush.msra.mxu0 %v720
    %3757 = vmatpush.msra.mxu0 %v712
    %3758 = vmatpush.msra.mxu0 %v704
    %3759 = vmatpush.msra.mxu0 %v696
    %3760 = vmatpush.msra.mxu0 %v688
    %3761 = vmatmul.f32.gmra.mxu0 %v3676
    %v3762 = vpop.f32.mrf.mxu0
    %v3763 = vadd.f32 %v3743, %v3762
    %3764 = vdwg.mxu0
    %3765 = vmatpush.msra.mxu0 %v681
    %3766 = vmatpush.msra.mxu0 %v673
    %3767 = vmatpush.msra.mxu0 %v665
    %3768 = vmatpush.msra.mxu0 %v657
    %3769 = vmatpush.msra.mxu0 %v649
    %3770 = vmatpush.msra.mxu0 %v641
    %3771 = vmatpush.msra.mxu0 %v633
    %3772 = vmatpush.msra.mxu0 %v625
    %3773 = vmatpush.msra.mxu0 %v617
    %3774 = vmatpush.msra.mxu0 %v609
    %3775 = vmatpush.msra.mxu0 %v601
    %3776 = vmatpush.msra.mxu0 %v593
    %3777 = vmatpush.msra.mxu0 %v585
    %3778 = vmatpush.msra.mxu0 %v577
    %3779 = vmatpush.msra.mxu0 %v569
    %3780 = vmatpush.msra.mxu0 %v561
    %3781 = vmatmul.f32.gmra.mxu0 %v3675
    %v3782 = vpop.f32.mrf.mxu0
    %v3783 = vadd.f32 0.0, %v3782
    %3784 = vdwg.mxu0
    %3785 = vmatpush.msra.mxu0 %v809
    %3786 = vmatpush.msra.mxu0 %v801
    %3787 = vmatpush.msra.mxu0 %v793
    %3788 = vmatpush.msra.mxu0 %v785
    %3789 = vmatpush.msra.mxu0 %v777
    %3790 = vmatpush.msra.mxu0 %v769
    %3791 = vmatpush.msra.mxu0 %v761
    %3792 = vmatpush.msra.mxu0 %v753
    %3793 = vmatpush.msra.mxu0 %v745
    %3794 = vmatpush.msra.mxu0 %v737
    %3795 = vmatpush.msra.mxu0 %v729
    %3796 = vmatpush.msra.mxu0 %v721
    %3797 = vmatpush.msra.mxu0 %v713
    %3798 = vmatpush.msra.mxu0 %v705
    %3799 = vmatpush.msra.mxu0 %v697
    %3800 = vmatpush.msra.mxu0 %v689
    %3801 = vmatmul.f32.gmra.mxu0 %v3676
    %v3802 = vpop.f32.mrf.mxu0
    %v3803 = vadd.f32 %v3783, %v3802
    %3804 = vdwg.mxu0
    %3805 = vmatpush.msra.mxu0 %v682
    %3806 = vmatpush.msra.mxu0 %v674
    %3807 = vmatpush.msra.mxu0 %v666
    %3808 = vmatpush.msra.mxu0 %v658
    %3809 = vmatpush.msra.mxu0 %v650
    %3810 = vmatpush.msra.mxu0 %v642
    %3811 = vmatpush.msra.mxu0 %v634
    %3812 = vmatpush.msra.mxu0 %v626
    %3813 = vmatpush.msra.mxu0 %v618
    %3814 = vmatpush.msra.mxu0 %v610
    %3815 = vmatpush.msra.mxu0 %v602
    %3816 = vmatpush.msra.mxu0 %v594
    %3817 = vmatpush.msra.mxu0 %v586
    %3818 = vmatpush.msra.mxu0 %v578
    %3819 = vmatpush.msra.mxu0 %v570
    %3820 = vmatpush.msra.mxu0 %v562
    %3821 = vmatmul.f32.gmra.mxu0 %v3675
    %v3822 = vpop.f32.mrf.mxu0
    %v3823 = vadd.f32 0.0, %v3822
    %3824 = vdwg.mxu0
    %3825 = vmatpush.msra.mxu0 %v810
    %3826 = vmatpush.msra.mxu0 %v802
    %3827 = vmatpush.msra.mxu0 %v794
    %3828 = vmatpush.msra.mxu0 %v786
    %3829 = vmatpush.msra.mxu0 %v778
    %3830 = vmatpush.msra.mxu0 %v770
    %3831 = vmatpush.msra.mxu0 %v762
    %3832 = vmatpush.msra.mxu0 %v754
    %3833 = vmatpush.msra.mxu0 %v746
    %3834 = vmatpush.msra.mxu0 %v738
    %3835 = vmatpush.msra.mxu0 %v730
    %3836 = vmatpush.msra.mxu0 %v722
    %3837 = vmatpush.msra.mxu0 %v714
    %3838 = vmatpush.msra.mxu0 %v706
    %3839 = vmatpush.msra.mxu0 %v698
    %3840 = vmatpush.msra.mxu0 %v690
    %3841 = vmatmul.f32.gmra.mxu0 %v3676
    %v3842 = vpop.f32.mrf.mxu0
    %v3843 = vadd.f32 %v3823, %v3842
    %3844 = vdwg.mxu0
    %3845 = vmatpush.msra.mxu0 %v683
    %3846 = vmatpush.msra.mxu0 %v675
    %3847 = vmatpush.msra.mxu0 %v667
    %3848 = vmatpush.msra.mxu0 %v659
    %3849 = vmatpush.msra.mxu0 %v651
    %3850 = vmatpush.msra.mxu0 %v643
    %3851 = vmatpush.msra.mxu0 %v635
    %3852 = vmatpush.msra.mxu0 %v627
    %3853 = vmatpush.msra.mxu0 %v619
    %3854 = vmatpush.msra.mxu0 %v611
    %3855 = vmatpush.msra.mxu0 %v603
    %3856 = vmatpush.msra.mxu0 %v595
    %3857 = vmatpush.msra.mxu0 %v587
    %3858 = vmatpush.msra.mxu0 %v579
    %3859 = vmatpush.msra.mxu0 %v571
    %3860 = vmatpush.msra.mxu0 %v563
    %3861 = vmatmul.f32.gmra.mxu0 %v3675
    %v3862 = vpop.f32.mrf.mxu0
    %v3863 = vadd.f32 0.0, %v3862
    %3864 = vdwg.mxu0
    %3865 = vmatpush.msra.mxu0 %v811
    %3866 = vmatpush.msra.mxu0 %v803
    %3867 = vmatpush.msra.mxu0 %v795
    %3868 = vmatpush.msra.mxu0 %v787
    %3869 = vmatpush.msra.mxu0 %v779
    %3870 = vmatpush.msra.mxu0 %v771
    %3871 = vmatpush.msra.mxu0 %v763
    %3872 = vmatpush.msra.mxu0 %v755
    %3873 = vmatpush.msra.mxu0 %v747
    %3874 = vmatpush.msra.mxu0 %v739
    %3875 = vmatpush.msra.mxu0 %v731
    %3876 = vmatpush.msra.mxu0 %v723
    %3877 = vmatpush.msra.mxu0 %v715
    %3878 = vmatpush.msra.mxu0 %v707
    %3879 = vmatpush.msra.mxu0 %v699
    %3880 = vmatpush.msra.mxu0 %v691
    %3881 = vmatmul.f32.gmra.mxu0 %v3676
    %v3882 = vpop.f32.mrf.mxu0
    %v3883 = vadd.f32 %v3863, %v3882
    %3884 = vdwg.mxu0
    %3885 = vmatpush.msra.mxu0 %v684
    %3886 = vmatpush.msra.mxu0 %v676
    %3887 = vmatpush.msra.mxu0 %v668
    %3888 = vmatpush.msra.mxu0 %v660
    %3889 = vmatpush.msra.mxu0 %v652
    %3890 = vmatpush.msra.mxu0 %v644
    %3891 = vmatpush.msra.mxu0 %v636
    %3892 = vmatpush.msra.mxu0 %v628
    %3893 = vmatpush.msra.mxu0 %v620
    %3894 = vmatpush.msra.mxu0 %v612
    %3895 = vmatpush.msra.mxu0 %v604
    %3896 = vmatpush.msra.mxu0 %v596
    %3897 = vmatpush.msra.mxu0 %v588
    %3898 = vmatpush.msra.mxu0 %v580
    %3899 = vmatpush.msra.mxu0 %v572
    %3900 = vmatpush.msra.mxu0 %v564
    %3901 = vmatmul.f32.gmra.mxu0 %v3675
    %v3902 = vpop.f32.mrf.mxu0
    %v3903 = vadd.f32 0.0, %v3902
    %3904 = vdwg.mxu0
    %3905 = vmatpush.msra.mxu0 %v812
    %3906 = vmatpush.msra.mxu0 %v804
    %3907 = vmatpush.msra.mxu0 %v796
    %3908 = vmatpush.msra.mxu0 %v788
    %3909 = vmatpush.msra.mxu0 %v780
    %3910 = vmatpush.msra.mxu0 %v772
    %3911 = vmatpush.msra.mxu0 %v764
    %3912 = vmatpush.msra.mxu0 %v756
    %3913 = vmatpush.msra.mxu0 %v748
    %3914 = vmatpush.msra.mxu0 %v740
    %3915 = vmatpush.msra.mxu0 %v732
    %3916 = vmatpush.msra.mxu0 %v724
    %3917 = vmatpush.msra.mxu0 %v716
    %3918 = vmatpush.msra.mxu0 %v708
    %3919 = vmatpush.msra.mxu0 %v700
    %3920 = vmatpush.msra.mxu0 %v692
    %3921 = vmatmul.f32.gmra.mxu0 %v3676
    %v3922 = vpop.f32.mrf.mxu0
    %v3923 = vadd.f32 %v3903, %v3922
    %3924 = vdwg.mxu0
    %3925 = vmatpush.msra.mxu0 %v685
    %3926 = vmatpush.msra.mxu0 %v677
    %3927 = vmatpush.msra.mxu0 %v669
    %3928 = vmatpush.msra.mxu0 %v661
    %3929 = vmatpush.msra.mxu0 %v653
    %3930 = vmatpush.msra.mxu0 %v645
    %3931 = vmatpush.msra.mxu0 %v637
    %3932 = vmatpush.msra.mxu0 %v629
    %3933 = vmatpush.msra.mxu0 %v621
    %3934 = vmatpush.msra.mxu0 %v613
    %3935 = vmatpush.msra.mxu0 %v605
    %3936 = vmatpush.msra.mxu0 %v597
    %3937 = vmatpush.msra.mxu0 %v589
    %3938 = vmatpush.msra.mxu0 %v581
    %3939 = vmatpush.msra.mxu0 %v573
    %3940 = vmatpush.msra.mxu0 %v565
    %3941 = vmatmul.f32.gmra.mxu0 %v3675
    %v3942 = vpop.f32.mrf.mxu0
    %v3943 = vadd.f32 0.0, %v3942
    %3944 = vdwg.mxu0
    %3945 = vmatpush.msra.mxu0 %v813
    %3946 = vmatpush.msra.mxu0 %v805
    %3947 = vmatpush.msra.mxu0 %v797
    %3948 = vmatpush.msra.mxu0 %v789
    %3949 = vmatpush.msra.mxu0 %v781
    %3950 = vmatpush.msra.mxu0 %v773
    %3951 = vmatpush.msra.mxu0 %v765
    %3952 = vmatpush.msra.mxu0 %v757
    %3953 = vmatpush.msra.mxu0 %v749
    %3954 = vmatpush.msra.mxu0 %v741
    %3955 = vmatpush.msra.mxu0 %v733
    %3956 = vmatpush.msra.mxu0 %v725
    %3957 = vmatpush.msra.mxu0 %v717
    %3958 = vmatpush.msra.mxu0 %v709
    %3959 = vmatpush.msra.mxu0 %v701
    %3960 = vmatpush.msra.mxu0 %v693
    %3961 = vmatmul.f32.gmra.mxu0 %v3676
    %v3962 = vpop.f32.mrf.mxu0
    %v3963 = vadd.f32 %v3943, %v3962
    %3964 = vdwg.mxu0
    %3965 = vmatpush.msra.mxu0 %v686
    %3966 = vmatpush.msra.mxu0 %v678
    %3967 = vmatpush.msra.mxu0 %v670
    %3968 = vmatpush.msra.mxu0 %v662
    %3969 = vmatpush.msra.mxu0 %v654
    %3970 = vmatpush.msra.mxu0 %v646
    %3971 = vmatpush.msra.mxu0 %v638
    %3972 = vmatpush.msra.mxu0 %v630
    %3973 = vmatpush.msra.mxu0 %v622
    %3974 = vmatpush.msra.mxu0 %v614
    %3975 = vmatpush.msra.mxu0 %v606
    %3976 = vmatpush.msra.mxu0 %v598
    %3977 = vmatpush.msra.mxu0 %v590
    %3978 = vmatpush.msra.mxu0 %v582
    %3979 = vmatpush.msra.mxu0 %v574
    %3980 = vmatpush.msra.mxu0 %v566
    %3981 = vmatmul.f32.gmra.mxu0 %v3675
    %v3982 = vpop.f32.mrf.mxu0
    %v3983 = vadd.f32 0.0, %v3982
    %3984 = vdwg.mxu0
    %3985 = vmatpush.msra.mxu0 %v814
    %3986 = vmatpush.msra.mxu0 %v806
    %3987 = vmatpush.msra.mxu0 %v798
    %3988 = vmatpush.msra.mxu0 %v790
    %3989 = vmatpush.msra.mxu0 %v782
    %3990 = vmatpush.msra.mxu0 %v774
    %3991 = vmatpush.msra.mxu0 %v766
    %3992 = vmatpush.msra.mxu0 %v758
    %3993 = vmatpush.msra.mxu0 %v750
    %3994 = vmatpush.msra.mxu0 %v742
    %3995 = vmatpush.msra.mxu0 %v734
    %3996 = vmatpush.msra.mxu0 %v726
    %3997 = vmatpush.msra.mxu0 %v718
    %3998 = vmatpush.msra.mxu0 %v710
    %3999 = vmatpush.msra.mxu0 %v702
    %4000 = vmatpush.msra.mxu0 %v694
    %4001 = vmatmul.f32.gmra.mxu0 %v3676
    %v4002 = vpop.f32.mrf.mxu0
    %v4003 = vadd.f32 %v3983, %v4002
    %4004 = vdwg.mxu0
    %v4005 = vadd.f32 %v3677, %v3723
    %v4006 = vadd.f32 %v3678, %v3763
    %v4007 = vadd.f32 %v3679, %v3803
    %v4008 = vadd.f32 %v3680, %v3843
    %v4009 = vadd.f32 %v3681, %v3883
    %v4010 = vadd.f32 %v3682, %v3923
    %v4011 = vadd.f32 %v3683, %v3963
    %v4012 = vadd.f32 %v3684, %v4003
    %v4013 = vxor.u32 %v4005, 2147483648
    %v4014 = vxor.u32 %v4006, 2147483648
    %v4015 = vxor.u32 %v4007, 2147483648
    %v4016 = vxor.u32 %v4008, 2147483648
    %v4017 = vxor.u32 %v4009, 2147483648
    %v4018 = vxor.u32 %v4010, 2147483648
    %v4019 = vmul.f32 %v4013, 1.442695
    %v4020 = vpow.pop %v4019
    %v4021 = vmul.f32 %v4014, 1.442695
    %v4022 = vpow.pop %v4021
    %v4023 = vmul.f32 %v4015, 1.442695
    %v4024 = vpow.pop %v4023
    %v4025 = vmul.f32 %v4016, 1.442695
    %v4026 = vpow.pop %v4025
    %v4027 = vmul.f32 %v4017, 1.442695
    %v4028 = vpow.pop %v4027
    %v4029 = vmul.f32 %v4018, 1.442695
    %v4030 = vpow.pop %v4029
    %v4031 = vadd.f32 %v4020, 1.0
    %v4032 = vadd.f32 %v4022, 1.0
    %v4033 = vadd.f32 %v4024, 1.0
    %v4034 = vadd.f32 %v4026, 1.0
    %v4035 = vadd.f32 %v4028, 1.0
    %v4036 = vadd.f32 %v4030, 1.0
    %v4037 = vrcp.pop %v4031
    %v4038 = vmul.f32 %v4031, %v4037
    %v4039 = vsub.f32 1.0, %v4038
    %v4040 = vmul.f32 %v4037, %v4039
    %v4041 = vadd.f32 %v4037, %v4040
    %vm4042 = vweird.f32 %v4031
    %vm4043 = vweird.f32 %v4037
    %vm4044 = vmor %vm4042, %vm4043
    %v4045 = vsel %vm4044, %v4037, %v4041
    %v4046 = vand.u32 2147483647, %v4031
    %vm4047 = vcmp.eq.f32.partialorder %v4046, 8.507059e+37
    %v4048 = vand.u32 %v4031, 2147483648
    %v4049 = vor.u32 1.1754944e-38, %v4048
    %v4050 = vsel %vm4047, %v4049, %v4045
    %v4051 = vmul.f32 1.0, %v4050
    %v4052 = vrcp.pop %v4032
    %v4053 = vmul.f32 %v4032, %v4052
    %v4054 = vsub.f32 1.0, %v4053
    %v4055 = vmul.f32 %v4052, %v4054
    %v4056 = vadd.f32 %v4052, %v4055
    %vm4057 = vweird.f32 %v4032
    %vm4058 = vweird.f32 %v4052
    %vm4059 = vmor %vm4057, %vm4058
    %v4060 = vsel %vm4059, %v4052, %v4056
    %v4061 = vand.u32 2147483647, %v4032
    %vm4062 = vcmp.eq.f32.partialorder %v4061, 8.507059e+37
    %v4063 = vand.u32 %v4032, 2147483648
    %v4064 = vor.u32 1.1754944e-38, %v4063
    %v4065 = vsel %vm4062, %v4064, %v4060
    %v4066 = vmul.f32 1.0, %v4065
    %v4067 = vrcp.pop %v4033
    %v4068 = vmul.f32 %v4033, %v4067
    %v4069 = vsub.f32 1.0, %v4068
    %v4070 = vmul.f32 %v4067, %v4069
    %v4071 = vadd.f32 %v4067, %v4070
    %vm4072 = vweird.f32 %v4033
    %vm4073 = vweird.f32 %v4067
    %vm4074 = vmor %vm4072, %vm4073
    %v4075 = vsel %vm4074, %v4067, %v4071
    %v4076 = vand.u32 2147483647, %v4033
    %vm4077 = vcmp.eq.f32.partialorder %v4076, 8.507059e+37
    %v4078 = vand.u32 %v4033, 2147483648
    %v4079 = vor.u32 1.1754944e-38, %v4078
    %v4080 = vsel %vm4077, %v4079, %v4075
    %v4081 = vmul.f32 1.0, %v4080
    %v4082 = vrcp.pop %v4034
    %v4083 = vmul.f32 %v4034, %v4082
    %v4084 = vsub.f32 1.0, %v4083
    %v4085 = vmul.f32 %v4082, %v4084
    %v4086 = vadd.f32 %v4082, %v4085
    %vm4087 = vweird.f32 %v4034
    %vm4088 = vweird.f32 %v4082
    %vm4089 = vmor %vm4087, %vm4088
    %v4090 = vsel %vm4089, %v4082, %v4086
    %v4091 = vand.u32 2147483647, %v4034
    %vm4092 = vcmp.eq.f32.partialorder %v4091, 8.507059e+37
    %v4093 = vand.u32 %v4034, 2147483648
    %v4094 = vor.u32 1.1754944e-38, %v4093
    %v4095 = vsel %vm4092, %v4094, %v4090
    %v4096 = vmul.f32 1.0, %v4095
    %v4097 = vrcp.pop %v4035
    %v4098 = vmul.f32 %v4035, %v4097
    %v4099 = vsub.f32 1.0, %v4098
    %v4100 = vmul.f32 %v4097, %v4099
    %v4101 = vadd.f32 %v4097, %v4100
    %vm4102 = vweird.f32 %v4035
    %vm4103 = vweird.f32 %v4097
    %vm4104 = vmor %vm4102, %vm4103
    %v4105 = vsel %vm4104, %v4097, %v4101
    %v4106 = vand.u32 2147483647, %v4035
    %vm4107 = vcmp.eq.f32.partialorder %v4106, 8.507059e+37
    %v4108 = vand.u32 %v4035, 2147483648
    %v4109 = vor.u32 1.1754944e-38, %v4108
    %v4110 = vsel %vm4107, %v4109, %v4105
    %v4111 = vmul.f32 1.0, %v4110
    %v4112 = vrcp.pop %v4036
    %v4113 = vmul.f32 %v4036, %v4112
    %v4114 = vsub.f32 1.0, %v4113
    %v4115 = vmul.f32 %v4112, %v4114
    %v4116 = vadd.f32 %v4112, %v4115
    %vm4117 = vweird.f32 %v4036
    %vm4118 = vweird.f32 %v4112
    %vm4119 = vmor %vm4117, %vm4118
    %v4120 = vsel %vm4119, %v4112, %v4116
    %v4121 = vand.u32 2147483647, %v4036
    %vm4122 = vcmp.eq.f32.partialorder %v4121, 8.507059e+37
    %v4123 = vand.u32 %v4036, 2147483648
    %v4124 = vor.u32 1.1754944e-38, %v4123
    %v4125 = vsel %vm4122, %v4124, %v4120
    %v4126 = vmul.f32 1.0, %v4125
    %v4127 = vtanh.pop %v4011
    %v4128 = vtanh.pop %v4012
    %v4129 = vmul.f32 %v4081, %v3671
    %v4130 = vmul.f32 %v4096, %v3672
    %v4131 = vmul.f32 %v4051, %v4127
    %v4132 = vmul.f32 %v4066, %v4128
    %v4133 = vadd.f32 %v4129, %v4131
    %v4134 = vadd.f32 %v4130, %v4132
    %v4135 = vtanh.pop %v4133
    %v4136 = vtanh.pop %v4134
    %v4137 = vmul.f32 %v4111, %v4135
    %v4138 = vmul.f32 %v4126, %v4136
    %v4139 = vld [vmem:[#allocation8] sm:$0xff]
    %v4140 = vld [vmem:[#allocation8 + $0x8] sm:$0xff]
    %v4141 = vld [vmem:[#allocation8 + $0x10] sm:$0xff]
    %v4142 = vld [vmem:[#allocation8 + $0x18] sm:$0xff]
    %v4143 = vld [vmem:[#allocation8 + $0x20] sm:$0xff]
    %v4144 = vld [vmem:[#allocation8 + $0x28] sm:$0xff]
    %v4145 = vld [vmem:[#allocation8 + $0x30] sm:$0xff]
    %v4146 = vld [vmem:[#allocation8 + $0x38] sm:$0xff]
    %v4147 = vld [vmem:[#allocation8 + $0x40] sm:$0xff]
    %v4148 = vld [vmem:[#allocation8 + $0x48] sm:$0xff]
    %v4149 = vld [vmem:[#allocation8 + $0x50] sm:$0xff]
    %v4150 = vld [vmem:[#allocation8 + $0x58] sm:$0xff]
    %v4151 = vld [vmem:[#allocation8 + $0x60] sm:$0xff]
    %v4152 = vld [vmem:[#allocation8 + $0x68] sm:$0xff]
    %v4153 = vld [vmem:[#allocation8 + $0x70] sm:$0xff]
    %v4154 = vld [vmem:[#allocation8 + $0x78] sm:$0xff]
    %v4155 = vld [vmem:[#allocation8 + $0x80] sm:$0xff]
    %v4156 = vld [vmem:[#allocation8 + $0x88] sm:$0xff]
    %v4157 = vld [vmem:[#allocation8 + $0x90] sm:$0xff]
    %v4158 = vld [vmem:[#allocation8 + $0x98] sm:$0xff]
    %v4159 = vld [vmem:[#allocation8 + $0xa0] sm:$0xff]
    %v4160 = vld [vmem:[#allocation8 + $0xa8] sm:$0xff]
    %v4161 = vld [vmem:[#allocation8 + $0xb0] sm:$0xff]
    %v4162 = vld [vmem:[#allocation8 + $0xb8] sm:$0xff]
    %v4163 = vld [vmem:[#allocation8 + $0xc0] sm:$0xff]
    %v4164 = vld [vmem:[#allocation8 + $0xc8] sm:$0xff]
    %v4165 = vld [vmem:[#allocation8 + $0xd0] sm:$0xff]
    %v4166 = vld [vmem:[#allocation8 + $0xd8] sm:$0xff]
    %v4167 = vld [vmem:[#allocation8 + $0xe0] sm:$0xff]
    %v4168 = vld [vmem:[#allocation8 + $0xe8] sm:$0xff]
    %v4169 = vld [vmem:[#allocation8 + $0xf0] sm:$0xff]
    %v4170 = vld [vmem:[#allocation8 + $0xf8] sm:$0xff]
    %v4171 = vld [vmem:[%s5] sm:$0x1]
    %v4173 = vperm.slane %v4171, 0
    %4175 = vmatpush.msra.mxu0 %v4154
    %4176 = vmatpush.msra.mxu0 %v4153
    %4177 = vmatpush.msra.mxu0 %v4152
    %4178 = vmatpush.msra.mxu0 %v4151
    %4179 = vmatpush.msra.mxu0 %v4150
    %4180 = vmatpush.msra.mxu0 %v4149
    %4181 = vmatpush.msra.mxu0 %v4148
    %4182 = vmatpush.msra.mxu0 %v4147
    %4183 = vmatpush.msra.mxu0 %v4146
    %4184 = vmatpush.msra.mxu0 %v4145
    %4185 = vmatpush.msra.mxu0 %v4144
    %4186 = vmatpush.msra.mxu0 %v4143
    %4187 = vmatpush.msra.mxu0 %v4142
    %4188 = vmatpush.msra.mxu0 %v4141
    %4189 = vmatpush.msra.mxu0 %v4140
    %4190 = vmatpush.msra.mxu0 %v4139
    %4191 = vmatmul.f32.gmra.mxu0 %v4137
    %v4192 = vpop.f32.mrf.mxu0
    %v4193 = vadd.f32 %v4173, %v4192
    %4194 = vdwg.mxu0
    %4195 = vmatpush.msra.mxu0 %v4170
    %4196 = vmatpush.msra.mxu0 %v4169
    %4197 = vmatpush.msra.mxu0 %v4168
    %4198 = vmatpush.msra.mxu0 %v4167
    %4199 = vmatpush.msra.mxu0 %v4166
    %4200 = vmatpush.msra.mxu0 %v4165
    %4201 = vmatpush.msra.mxu0 %v4164
    %4202 = vmatpush.msra.mxu0 %v4163
    %4203 = vmatpush.msra.mxu0 %v4162
    %4204 = vmatpush.msra.mxu0 %v4161
    %4205 = vmatpush.msra.mxu0 %v4160
    %4206 = vmatpush.msra.mxu0 %v4159
    %4207 = vmatpush.msra.mxu0 %v4158
    %4208 = vmatpush.msra.mxu0 %v4157
    %4209 = vmatpush.msra.mxu0 %v4156
    %4210 = vmatpush.msra.mxu0 %v4155
    %4211 = vmatmul.f32.gmra.mxu0 %v4138
    %v4212 = vpop.f32.mrf.mxu0
    %v4213 = vadd.f32 %v4193, %v4212
    %4214 = vdwg.mxu0
    %v4215 = vmax.f32 %v4213, 0.0
    %v4216 = vld [vmem:[%s6] sm:$0xff]
    %v4217 = vld [vmem:[%s6 + $0x8] sm:$0xff]
    %v4218 = vld [vmem:[%s6 + $0x10] sm:$0xff]
    %v4219 = vld [vmem:[%s6 + $0x18] sm:$0xff]
    %v4220 = vld [vmem:[%s6 + $0x20] sm:$0xff]
    %v4221 = vld [vmem:[%s6 + $0x28] sm:$0xff]
    %v4222 = vld [vmem:[%s6 + $0x30] sm:$0xff]
    %v4223 = vld [vmem:[%s6 + $0x38] sm:$0xff]
    %v4224 = vld [vmem:[%s6 + $0x40] sm:$0xff]
    %v4225 = vld [vmem:[%s6 + $0x48] sm:$0xff]
    %v4226 = vld [vmem:[%s6 + $0x50] sm:$0xff]
    %v4227 = vld [vmem:[%s6 + $0x58] sm:$0xff]
    %v4228 = vld [vmem:[%s6 + $0x60] sm:$0xff]
    %v4229 = vld [vmem:[%s6 + $0x68] sm:$0xff]
    %v4230 = vld [vmem:[%s6 + $0x70] sm:$0xff]
    %v4231 = vld [vmem:[%s6 + $0x78] sm:$0xff]
    %v4232 = vld [vmem:[%s7] sm:$0x1]
    %v4234 = vperm.slane %v4232, 0
    %4236 = vmatpush.msra.mxu0 %v4231
    %4237 = vmatpush.msra.mxu0 %v4230
    %4238 = vmatpush.msra.mxu0 %v4229
    %4239 = vmatpush.msra.mxu0 %v4228
    %4240 = vmatpush.msra.mxu0 %v4227
    %4241 = vmatpush.msra.mxu0 %v4226
    %4242 = vmatpush.msra.mxu0 %v4225
    %4243 = vmatpush.msra.mxu0 %v4224
    %4244 = vmatpush.msra.mxu0 %v4223
    %4245 = vmatpush.msra.mxu0 %v4222
    %4246 = vmatpush.msra.mxu0 %v4221
    %4247 = vmatpush.msra.mxu0 %v4220
    %4248 = vmatpush.msra.mxu0 %v4219
    %4249 = vmatpush.msra.mxu0 %v4218
    %4250 = vmatpush.msra.mxu0 %v4217
    %4251 = vmatpush.msra.mxu0 %v4216
    %4252 = vmatmul.f32.gmra.mxu0 %v4215
    %v4253 = vpop.f32.mrf.mxu0
    %v4254 = vadd.f32 %v4234, %v4253
    %4255 = vdwg.mxu0
    %v4256 = vmax.f32 %v4254, 0.0
    %v4257 = vld [vmem:[%s8] sm:$0x1]
    %v4259 = vperm.slane %v4257, 0
    %v4261 = vmul.f32 %v4256, %v4259
    %vm4262 = vcmask 523264
    %v4263 = vsel %vm4262, %v4261, 0.0
    %4264 = vadd.xlane.f32.xlu0 %v4263
    %v4265 = vpop.xlane.xlu0 %4264
    %v4266 = vld [vmem:[#allocation3] sm:$0x1]
    %v4268 = vperm.slane %v4266, 0
    %v4270 = vadd.f32 %v4265, %v4268
    %vm4271 = vcmask 7168
    %4272 = vst.msk [vmem:[%s10] sm:$0xff] %vm4271, %v4270
    // Predicated region
    $region54: #{tpu_custom_call.1} parent=1 // pred_check
      _
    $region55: #{tpu_custom_call.1} parent=1 // pred_check_branch
      %4274 = sbr.rel (0) target = $region57
    $region56: #{tpu_custom_call.1} parent=1 // pred_region
      _
    $region57: #{tpu_custom_call.1} parent=1 // pred_fallthru
      _
    // Predicated region
    $region58: #{tpu_custom_call.1} parent=1 // pred_check
      _
    $region59: #{tpu_custom_call.1} parent=1 // pred_check_branch
      %4276 = sbr.rel (0) target = $region61
    $region60: #{tpu_custom_call.1} parent=1 // pred_region
      _
    $region61: #{tpu_custom_call.1} parent=1 // pred_fallthru
      _
    %4277 = vsyncpa [#allocation5], 1
    %4278 = vsyncpa [#allocation7], 1

</llo_original>
